<compile_context>
chip_gen: v5e
topology: v5e:2x2
jax: 0.10.0
libtpu: 0.0.40
codegen_flags: <defaults>
</compile_context>

<pallas_src>
import jax
import jax.numpy as jnp
from jax import lax
from jax.experimental import pallas as pl
from jax.experimental.pallas import tpu as pltpu


def _round_up(x, m):
    return (x + m - 1) // m * m


def _vmem_tile_bytes(rows, cols, itemsize):
    """Approximate VMEM footprint of a (rows, cols) tile incl. (8,128) padding."""
    return _round_up(max(rows, 1), 8) * _round_up(max(cols, 1), 128) * itemsize


def _vmem_capacity_bytes():
    try:
        return int(pltpu.get_tpu_info().vmem_capacity_bytes)
    except Exception:
        return 64 * 1024 * 1024  # conservative fallback (v7x per-TensorCore VMEM)


def _pick_row_tile(H, Wpad, C, Cout, lhs_itemsize, out_itemsize, budget_bytes,
                   tm_cap=2048):
    """Output rows (TH) per grid step.

    Accounts for: double-buffered input chunk ((TH+2)*Wpad+2, C), double-buffered
    output tile (TH*Wpad, Cout), resident (double-buffered) weights (9, C, Cout),
    bias, and the f32 accumulator scratch - all with VMEM (8,128) padding.
    Targets the largest tile <= tm_cap rows that fits the budget, then rebalances
    so ceil(H/TH)*TH - H padded garbage rows stay minimal.
    """
    def footprint(th):
        tm = th * Wpad
        L = (th + 2) * Wpad + 2
        inp = 2 * _vmem_tile_bytes(L, C, lhs_itemsize)           # double-buffered chunk
        out = 2 * _vmem_tile_bytes(tm, Cout, out_itemsize)       # double-buffered output
        acc = _vmem_tile_bytes(tm, Cout, 4)                      # f32 accumulator scratch
        wgt = 2 * 9 * _vmem_tile_bytes(C, Cout, lhs_itemsize)    # resident weights (2 bufs)
        bia = 2 * _vmem_tile_bytes(1, Cout, 4)
        return inp + out + acc + wgt + bia

    best = 1
    for th in range(1, H + 1):
        if th * Wpad > tm_cap or footprint(th) > budget_bytes:
            break
        best = th
    # Rebalance tiles to minimize padded garbage rows.
    r = -(-H // best)
    return -(-H // r)


def upsample_block(x_nchw, weight_oihw, bias, *, compute_dtype=None):
    """Forward of UpsampleBlock. x_nchw: (N, C, H, W) -> (N, C, 2H, 2W).

    compute_dtype: cast input chunks / weights (e.g. jnp.bfloat16, recommended on
    v5e/v6e/v7x) for ~2x LHS HBM traffic reduction; accumulation stays f32.
    """
    N, C, H, W = x_nchw.shape
    Cout = 4 * C
    assert weight_oihw.shape == (Cout, C, 3, 3)
    assert bias.shape == (Cout,)

    out_dtype = x_nchw.dtype
    lhs_dtype = jnp.dtype(compute_dtype) if compute_dtype is not None else jnp.dtype(x_nchw.dtype)

    Wpad = W + 2                                   # 1 col of conv zero-pad on each side
    vmem_cap = _vmem_capacity_bytes()
    vmem_limit = int(max(32 << 20, min(vmem_cap * 3 // 4, 112 << 20)))   # ~48 MiB v7x, ~96 MiB v5e/v6e
    budget = int(vmem_limit * 0.85)

    TH = _pick_row_tile(H, Wpad, C, Cout, lhs_dtype.itemsize,
                        jnp.dtype(out_dtype).itemsize, budget)
    R = -(-H // TH)                                # row tiles per image
    Hc = R * TH                                    # rows incl. ragged-tile padding
    TM = TH * Wpad                                 # output positions per tile (incl. 2 halo cols/row)
    L = (TH + 2) * Wpad + 2                        # chunk length: TH+2 padded rows + 1 elem slack each end

    # ---- glue (plain JAX): NCHW->NHWC, zero pad, flatten, build halo'd row chunks ----
    x_nhwc = jnp.transpose(x_nchw, (0, 2, 3, 1))                             # (N, H, W, C)
    x_pad = jnp.pad(x_nhwc, ((0, 0), (1, 1 + (Hc - H)), (1, 1), (0, 0)))     # (N, Hc+2, Wpad, C)
    flat = x_pad.reshape(N, (Hc + 2) * Wpad, C)
    flat = jnp.pad(flat, ((0, 0), (1, Wpad), (0, 0)))                        # flat-index slack for corner taps
    chunks = jnp.stack(
        [lax.slice_in_dim(flat, r * TH * Wpad, r * TH * Wpad + L, axis=1)
         for r in range(R)], axis=1).reshape(N * R, L, C).astype(lhs_dtype)

    # weights: OIHW -> (tap = kh*3+kw, Cin, Cout); bias -> (1, Cout) f32
    w_taps = jnp.transpose(weight_oihw, (2, 3, 1, 0)).reshape(9, C, Cout).astype(lhs_dtype)
    b2d = bias.reshape(1, Cout).astype(jnp.float32)

    def kernel(x_ref, w_ref, b_ref, o_ref, acc_ref):
        # x_ref: (L, C) halo'd flattened rows of one tile (resident in VMEM)
        # w_ref: (9, C, Cout) resident weights, b_ref: (1, Cout)
        # o_ref: (TM, Cout) conv+ReLU output (real Cout lanes only, no channel padding)
        acc_ref[...] = jnp.zeros_like(acc_ref)
        for kh in range(3):
            for kw in range(3):
                # tap (kh, kw) is a pure sublane shift of the flattened chunk
                lhs = x_ref[pl.ds(kh * Wpad + kw, TM), :]
                acc_ref[...] += jnp.dot(lhs, w_ref[kh * 3 + kw],
                                        preferred_element_type=jnp.float32)
        res = acc_ref[...] + b_ref[...]
        o_ref[...] = jnp.maximum(res, 0.0).astype(o_ref.dtype)

    conv = pl.pallas_call(
        kernel,
        out_shape=jax.ShapeDtypeStruct((N * R, TM, Cout), out_dtype),
        grid=(N * R,),
        in_specs=[
            pl.BlockSpec((None, L, C), lambda i: (i, 0, 0)),     # halo'd chunk per tile
            pl.BlockSpec((9, C, Cout), lambda i: (0, 0, 0)),     # weights (resident)
            pl.BlockSpec((1, Cout), lambda i: (0, 0)),           # bias (resident)
        ],
        out_specs=pl.BlockSpec((None, TM, Cout), lambda i: (i, 0, 0)),
        scratch_shapes=[pltpu.VMEM((TM, Cout), jnp.float32)],    # f32 accumulator
        compiler_params=pltpu.CompilerParams(
            dimension_semantics=("parallel",),                   # megacore shards row tiles
            vmem_limit_bytes=vmem_limit,
        ),
    )(chunks, w_taps, b2d)

    # ---- epilogue: drop halo cols / padded rows; PixelShuffle(2) + NHWC->NCHW in ONE transpose
    # conv channel co = 4c + 2i + j  ->  output[n, c, 2h+i, 2w+j]
    conv = conv.reshape(N, R, TH, Wpad, Cout)[:, :, :, 1:W + 1, :]   # drop 2 halo cols per row
    conv = conv.reshape(N, Hc, W, Cout)[:, :H]                       # drop ragged-tile rows
    conv = conv.reshape(N, H, W, C, 2, 2)
    y = jnp.transpose(conv, (0, 3, 1, 4, 2, 5))                      # (N, C, H, 2, W, 2)
    return y.reshape(N, C, 2 * H, 2 * W)


def _reference(x_nchw, weight_oihw, bias):
    """Pure-JAX reference (NCHW conv + relu + pixel shuffle)."""
    N, C, H, W = x_nchw.shape
    Cout = 4 * C
    conv = lax.conv_general_dilated(
        x_nchw, weight_oihw, window_strides=(1, 1), padding=((1, 1), (1, 1)),
        dimension_numbers=("NCHW", "OIHW", "NCHW"))
    conv = jnp.maximum(conv + bias.reshape(1, Cout, 1, 1), 0.0)
    y = conv.reshape(N, C, 2, 2, H, W)
    y = jnp.transpose(y, (0, 1, 4, 2, 5, 3))
    return y.reshape(N, C, 2 * H, 2 * W)


if __name__ == "__main__":
    key = jax.random.PRNGKey(0)
    k_x, k_w, k_b = jax.random.split(key, 3)

    N, C, H, W = 2, 4, 16, 16
    Cout = 4 * C

    x = jax.random.normal(k_x, (N, C, H, W), dtype=jnp.float32)
    # deterministic synthetic parameters (Conv2d(n_channels, 4*n_channels, 3, 1, 1))
    fan_in = C * 3 * 3
    weight = jax.random.normal(k_w, (Cout, C, 3, 3), dtype=jnp.float32) * (1.0 / fan_in) ** 0.5
    bias = jax.random.normal(k_b, (Cout,), dtype=jnp.float32) * 0.1

    ref = _reference(x, weight, bias)

    # f32 path (exact semantics of the PyTorch module)
    out = jax.block_until_ready(upsample_block(x, weight, bias))
    assert out.shape == (N, C, 2 * H, 2 * W), out.shape
    err = float(jnp.max(jnp.abs(out - ref)))
    assert err < 2e-4, err

    # bf16 LHS/weights path (recommended on v5e/v6e/v7x); accumulation stays f32.
    out_bf16 = jax.block_until_ready(
        upsample_block(x, weight, bias, compute_dtype=jnp.bfloat16))
    err_bf16 = float(jnp.max(jnp.abs(out_bf16 - ref)))
    assert err_bf16 < 5e-2, err_bf16

    print("KERNEL_OK")
</pallas_src>

<mosaic_0001>
module attributes {stable_mosaic.version = 11 : i64} {
  func.func @kernel(%arg0: i32, %arg1: memref<1x326x4xf32, #tpu.memory_space<vmem>>, %arg2: memref<9x4x16xf32, #tpu.memory_space<vmem>>, %arg3: memref<1x16xf32, #tpu.memory_space<vmem>>, %arg4: memref<1x288x16xf32, #tpu.memory_space<vmem>>, %arg5: memref<288x16xf32, #tpu.memory_space<vmem>>) attributes {dimension_semantics = [#tpu.dimension_semantics<parallel>], iteration_bounds = array<i64: 2>, scalar_prefetch = 0 : i64, scratch_operands = 1 : i64, tpu.core_type = #tpu.core_type<tc>, window_params = [{transform_indices = @transform_0, window_bounds = array<i64: 1, 326, 4>}, {pipeline_mode = #tpu.pipeline_mode<synchronous>, transform_indices = @transform_1, window_bounds = array<i64: 9, 4, 16>}, {pipeline_mode = #tpu.pipeline_mode<synchronous>, transform_indices = @transform_2, window_bounds = array<i64: 1, 16>}, {transform_indices = @transform_3, window_bounds = array<i64: 1, 288, 16>}]} {
    %cst = arith.constant 0.000000e+00 : f32
    %0 = vector.broadcast %cst : f32 to vector<288x16xf32>
    %c0 = arith.constant 0 : index
    %c0_0 = arith.constant 0 : index
    %1 = vector.load %arg5[%c0, %c0_0] : memref<288x16xf32, #tpu.memory_space<vmem>>, vector<288x16xf32>
    tpu.vector_store %arg5[%c0, %c0_0], %0 {strides = array<i32>} : memref<288x16xf32, #tpu.memory_space<vmem>>, vector<288x16xf32>,
    %c0_1 = arith.constant 0 : index
    %c0_2 = arith.constant 0 : index
    %c0_3 = arith.constant 0 : index
    %2 = vector.load %arg1[%c0_1, %c0_2, %c0_3] : memref<1x326x4xf32, #tpu.memory_space<vmem>>, vector<1x288x4xf32>
    %3 = vector.shape_cast %2 : vector<1x288x4xf32> to vector<288x4xf32>
    %c0_4 = arith.constant 0 : index
    %c0_5 = arith.constant 0 : index
    %4 = vector.load %arg5[%c0_4, %c0_5] : memref<288x16xf32, #tpu.memory_space<vmem>>, vector<288x16xf32>
    %c0_6 = arith.constant 0 : index
    %c0_7 = arith.constant 0 : index
    %c0_8 = arith.constant 0 : index
    %5 = vector.load %arg2[%c0_6, %c0_7, %c0_8] : memref<9x4x16xf32, #tpu.memory_space<vmem>>, vector<1x4x16xf32>
    %6 = vector.shape_cast %5 : vector<1x4x16xf32> to vector<4x16xf32>
    %cst_9 = arith.constant dense<0.000000e+00> : vector<288x16xf32>
    %7 = tpu.matmul %3, %6, %cst_9 {dimension_numbers = #tpu.dot_dimension_numbers<[1], [0], [0], [1], [0, 0, 1, 1], [], []>} : vector<288x4xf32>, vector<4x16xf32>, vector<288x16xf32> -> vector<288x16xf32>
    %8 = arith.addf %4, %7 : vector<288x16xf32>
    %c0_10 = arith.constant 0 : index
    %c0_11 = arith.constant 0 : index
    %9 = vector.load %arg5[%c0_10, %c0_11] : memref<288x16xf32, #tpu.memory_space<vmem>>, vector<288x16xf32>
    tpu.vector_store %arg5[%c0_10, %c0_11], %8 {strides = array<i32>} : memref<288x16xf32, #tpu.memory_space<vmem>>, vector<288x16xf32>,
    %c0_12 = arith.constant 0 : index
    %c1 = arith.constant 1 : index
    %c0_13 = arith.constant 0 : index
    %10 = vector.load %arg1[%c0_12, %c1, %c0_13] : memref<1x326x4xf32, #tpu.memory_space<vmem>>, vector<1x288x4xf32>
    %11 = vector.shape_cast %10 : vector<1x288x4xf32> to vector<288x4xf32>
    %c0_14 = arith.constant 0 : index
    %c0_15 = arith.constant 0 : index
    %12 = vector.load %arg5[%c0_14, %c0_15] : memref<288x16xf32, #tpu.memory_space<vmem>>, vector<288x16xf32>
    %c1_16 = arith.constant 1 : index
    %c0_17 = arith.constant 0 : index
    %c0_18 = arith.constant 0 : index
    %13 = vector.load %arg2[%c1_16, %c0_17, %c0_18] : memref<9x4x16xf32, #tpu.memory_space<vmem>>, vector<1x4x16xf32>
    %14 = vector.shape_cast %13 : vector<1x4x16xf32> to vector<4x16xf32>
    %cst_19 = arith.constant dense<0.000000e+00> : vector<288x16xf32>
    %15 = tpu.matmul %11, %14, %cst_19 {dimension_numbers = #tpu.dot_dimension_numbers<[1], [0], [0], [1], [0, 0, 1, 1], [], []>} : vector<288x4xf32>, vector<4x16xf32>, vector<288x16xf32> -> vector<288x16xf32>
    %16 = arith.addf %12, %15 : vector<288x16xf32>
    %c0_20 = arith.constant 0 : index
    %c0_21 = arith.constant 0 : index
    %17 = vector.load %arg5[%c0_20, %c0_21] : memref<288x16xf32, #tpu.memory_space<vmem>>, vector<288x16xf32>
    tpu.vector_store %arg5[%c0_20, %c0_21], %16 {strides = array<i32>} : memref<288x16xf32, #tpu.memory_space<vmem>>, vector<288x16xf32>,
    %c0_22 = arith.constant 0 : index
    %c2 = arith.constant 2 : index
    %c0_23 = arith.constant 0 : index
    %18 = vector.load %arg1[%c0_22, %c2, %c0_23] : memref<1x326x4xf32, #tpu.memory_space<vmem>>, vector<1x288x4xf32>
    %19 = vector.shape_cast %18 : vector<1x288x4xf32> to vector<288x4xf32>
    %c0_24 = arith.constant 0 : index
    %c0_25 = arith.constant 0 : index
    %20 = vector.load %arg5[%c0_24, %c0_25] : memref<288x16xf32, #tpu.memory_space<vmem>>, vector<288x16xf32>
    %c2_26 = arith.constant 2 : index
    %c0_27 = arith.constant 0 : index
    %c0_28 = arith.constant 0 : index
    %21 = vector.load %arg2[%c2_26, %c0_27, %c0_28] : memref<9x4x16xf32, #tpu.memory_space<vmem>>, vector<1x4x16xf32>
    %22 = vector.shape_cast %21 : vector<1x4x16xf32> to vector<4x16xf32>
    %cst_29 = arith.constant dense<0.000000e+00> : vector<288x16xf32>
    %23 = tpu.matmul %19, %22, %cst_29 {dimension_numbers = #tpu.dot_dimension_numbers<[1], [0], [0], [1], [0, 0, 1, 1], [], []>} : vector<288x4xf32>, vector<4x16xf32>, vector<288x16xf32> -> vector<288x16xf32>
    %24 = arith.addf %20, %23 : vector<288x16xf32>
    %c0_30 = arith.constant 0 : index
    %c0_31 = arith.constant 0 : index
    %25 = vector.load %arg5[%c0_30, %c0_31] : memref<288x16xf32, #tpu.memory_space<vmem>>, vector<288x16xf32>
    tpu.vector_store %arg5[%c0_30, %c0_31], %24 {strides = array<i32>} : memref<288x16xf32, #tpu.memory_space<vmem>>, vector<288x16xf32>,
    %c0_32 = arith.constant 0 : index
    %c18 = arith.constant 18 : index
    %c0_33 = arith.constant 0 : index
    %26 = vector.load %arg1[%c0_32, %c18, %c0_33] : memref<1x326x4xf32, #tpu.memory_space<vmem>>, vector<1x288x4xf32>
    %27 = vector.shape_cast %26 : vector<1x288x4xf32> to vector<288x4xf32>
    %c0_34 = arith.constant 0 : index
    %c0_35 = arith.constant 0 : index
    %28 = vector.load %arg5[%c0_34, %c0_35] : memref<288x16xf32, #tpu.memory_space<vmem>>, vector<288x16xf32>
    %c3 = arith.constant 3 : index
    %c0_36 = arith.constant 0 : index
    %c0_37 = arith.constant 0 : index
    %29 = vector.load %arg2[%c3, %c0_36, %c0_37] : memref<9x4x16xf32, #tpu.memory_space<vmem>>, vector<1x4x16xf32>
    %30 = vector.shape_cast %29 : vector<1x4x16xf32> to vector<4x16xf32>
    %cst_38 = arith.constant dense<0.000000e+00> : vector<288x16xf32>
    %31 = tpu.matmul %27, %30, %cst_38 {dimension_numbers = #tpu.dot_dimension_numbers<[1], [0], [0], [1], [0, 0, 1, 1], [], []>} : vector<288x4xf32>, vector<4x16xf32>, vector<288x16xf32> -> vector<288x16xf32>
    %32 = arith.addf %28, %31 : vector<288x16xf32>
    %c0_39 = arith.constant 0 : index
    %c0_40 = arith.constant 0 : index
    %33 = vector.load %arg5[%c0_39, %c0_40] : memref<288x16xf32, #tpu.memory_space<vmem>>, vector<288x16xf32>
    tpu.vector_store %arg5[%c0_39, %c0_40], %32 {strides = array<i32>} : memref<288x16xf32, #tpu.memory_space<vmem>>, vector<288x16xf32>,
    %c0_41 = arith.constant 0 : index
    %c19 = arith.constant 19 : index
    %c0_42 = arith.constant 0 : index
    %34 = vector.load %arg1[%c0_41, %c19, %c0_42] : memref<1x326x4xf32, #tpu.memory_space<vmem>>, vector<1x288x4xf32>
    %35 = vector.shape_cast %34 : vector<1x288x4xf32> to vector<288x4xf32>
    %c0_43 = arith.constant 0 : index
    %c0_44 = arith.constant 0 : index
    %36 = vector.load %arg5[%c0_43, %c0_44] : memref<288x16xf32, #tpu.memory_space<vmem>>, vector<288x16xf32>
    %c4 = arith.constant 4 : index
    %c0_45 = arith.constant 0 : index
    %c0_46 = arith.constant 0 : index
    %37 = vector.load %arg2[%c4, %c0_45, %c0_46] : memref<9x4x16xf32, #tpu.memory_space<vmem>>, vector<1x4x16xf32>
    %38 = vector.shape_cast %37 : vector<1x4x16xf32> to vector<4x16xf32>
    %cst_47 = arith.constant dense<0.000000e+00> : vector<288x16xf32>
    %39 = tpu.matmul %35, %38, %cst_47 {dimension_numbers = #tpu.dot_dimension_numbers<[1], [0], [0], [1], [0, 0, 1, 1], [], []>} : vector<288x4xf32>, vector<4x16xf32>, vector<288x16xf32> -> vector<288x16xf32>
    %40 = arith.addf %36, %39 : vector<288x16xf32>
    %c0_48 = arith.constant 0 : index
    %c0_49 = arith.constant 0 : index
    %41 = vector.load %arg5[%c0_48, %c0_49] : memref<288x16xf32, #tpu.memory_space<vmem>>, vector<288x16xf32>
    tpu.vector_store %arg5[%c0_48, %c0_49], %40 {strides = array<i32>} : memref<288x16xf32, #tpu.memory_space<vmem>>, vector<288x16xf32>,
    %c0_50 = arith.constant 0 : index
    %c20 = arith.constant 20 : index
    %c0_51 = arith.constant 0 : index
    %42 = vector.load %arg1[%c0_50, %c20, %c0_51] : memref<1x326x4xf32, #tpu.memory_space<vmem>>, vector<1x288x4xf32>
    %43 = vector.shape_cast %42 : vector<1x288x4xf32> to vector<288x4xf32>
    %c0_52 = arith.constant 0 : index
    %c0_53 = arith.constant 0 : index
    %44 = vector.load %arg5[%c0_52, %c0_53] : memref<288x16xf32, #tpu.memory_space<vmem>>, vector<288x16xf32>
    %c5 = arith.constant 5 : index
    %c0_54 = arith.constant 0 : index
    %c0_55 = arith.constant 0 : index
    %45 = vector.load %arg2[%c5, %c0_54, %c0_55] : memref<9x4x16xf32, #tpu.memory_space<vmem>>, vector<1x4x16xf32>
    %46 = vector.shape_cast %45 : vector<1x4x16xf32> to vector<4x16xf32>
    %cst_56 = arith.constant dense<0.000000e+00> : vector<288x16xf32>
    %47 = tpu.matmul %43, %46, %cst_56 {dimension_numbers = #tpu.dot_dimension_numbers<[1], [0], [0], [1], [0, 0, 1, 1], [], []>} : vector<288x4xf32>, vector<4x16xf32>, vector<288x16xf32> -> vector<288x16xf32>
    %48 = arith.addf %44, %47 : vector<288x16xf32>
    %c0_57 = arith.constant 0 : index
    %c0_58 = arith.constant 0 : index
    %49 = vector.load %arg5[%c0_57, %c0_58] : memref<288x16xf32, #tpu.memory_space<vmem>>, vector<288x16xf32>
    tpu.vector_store %arg5[%c0_57, %c0_58], %48 {strides = array<i32>} : memref<288x16xf32, #tpu.memory_space<vmem>>, vector<288x16xf32>,
    %c0_59 = arith.constant 0 : index
    %c36 = arith.constant 36 : index
    %c0_60 = arith.constant 0 : index
    %50 = vector.load %arg1[%c0_59, %c36, %c0_60] : memref<1x326x4xf32, #tpu.memory_space<vmem>>, vector<1x288x4xf32>
    %51 = vector.shape_cast %50 : vector<1x288x4xf32> to vector<288x4xf32>
    %c0_61 = arith.constant 0 : index
    %c0_62 = arith.constant 0 : index
    %52 = vector.load %arg5[%c0_61, %c0_62] : memref<288x16xf32, #tpu.memory_space<vmem>>, vector<288x16xf32>
    %c6 = arith.constant 6 : index
    %c0_63 = arith.constant 0 : index
    %c0_64 = arith.constant 0 : index
    %53 = vector.load %arg2[%c6, %c0_63, %c0_64] : memref<9x4x16xf32, #tpu.memory_space<vmem>>, vector<1x4x16xf32>
    %54 = vector.shape_cast %53 : vector<1x4x16xf32> to vector<4x16xf32>
    %cst_65 = arith.constant dense<0.000000e+00> : vector<288x16xf32>
    %55 = tpu.matmul %51, %54, %cst_65 {dimension_numbers = #tpu.dot_dimension_numbers<[1], [0], [0], [1], [0, 0, 1, 1], [], []>} : vector<288x4xf32>, vector<4x16xf32>, vector<288x16xf32> -> vector<288x16xf32>
    %56 = arith.addf %52, %55 : vector<288x16xf32>
    %c0_66 = arith.constant 0 : index
    %c0_67 = arith.constant 0 : index
    %57 = vector.load %arg5[%c0_66, %c0_67] : memref<288x16xf32, #tpu.memory_space<vmem>>, vector<288x16xf32>
    tpu.vector_store %arg5[%c0_66, %c0_67], %56 {strides = array<i32>} : memref<288x16xf32, #tpu.memory_space<vmem>>, vector<288x16xf32>,
    %c0_68 = arith.constant 0 : index
    %c37 = arith.constant 37 : index
    %c0_69 = arith.constant 0 : index
    %58 = vector.load %arg1[%c0_68, %c37, %c0_69] : memref<1x326x4xf32, #tpu.memory_space<vmem>>, vector<1x288x4xf32>
    %59 = vector.shape_cast %58 : vector<1x288x4xf32> to vector<288x4xf32>
    %c0_70 = arith.constant 0 : index
    %c0_71 = arith.constant 0 : index
    %60 = vector.load %arg5[%c0_70, %c0_71] : memref<288x16xf32, #tpu.memory_space<vmem>>, vector<288x16xf32>
    %c7 = arith.constant 7 : index
    %c0_72 = arith.constant 0 : index
    %c0_73 = arith.constant 0 : index
    %61 = vector.load %arg2[%c7, %c0_72, %c0_73] : memref<9x4x16xf32, #tpu.memory_space<vmem>>, vector<1x4x16xf32>
    %62 = vector.shape_cast %61 : vector<1x4x16xf32> to vector<4x16xf32>
    %cst_74 = arith.constant dense<0.000000e+00> : vector<288x16xf32>
    %63 = tpu.matmul %59, %62, %cst_74 {dimension_numbers = #tpu.dot_dimension_numbers<[1], [0], [0], [1], [0, 0, 1, 1], [], []>} : vector<288x4xf32>, vector<4x16xf32>, vector<288x16xf32> -> vector<288x16xf32>
    %64 = arith.addf %60, %63 : vector<288x16xf32>
    %c0_75 = arith.constant 0 : index
    %c0_76 = arith.constant 0 : index
    %65 = vector.load %arg5[%c0_75, %c0_76] : memref<288x16xf32, #tpu.memory_space<vmem>>, vector<288x16xf32>
    tpu.vector_store %arg5[%c0_75, %c0_76], %64 {strides = array<i32>} : memref<288x16xf32, #tpu.memory_space<vmem>>, vector<288x16xf32>,
    %c0_77 = arith.constant 0 : index
    %c38 = arith.constant 38 : index
    %c0_78 = arith.constant 0 : index
    %66 = vector.load %arg1[%c0_77, %c38, %c0_78] : memref<1x326x4xf32, #tpu.memory_space<vmem>>, vector<1x288x4xf32>
    %67 = vector.shape_cast %66 : vector<1x288x4xf32> to vector<288x4xf32>
    %c0_79 = arith.constant 0 : index
    %c0_80 = arith.constant 0 : index
    %68 = vector.load %arg5[%c0_79, %c0_80] : memref<288x16xf32, #tpu.memory_space<vmem>>, vector<288x16xf32>
    %c8 = arith.constant 8 : index
    %c0_81 = arith.constant 0 : index
    %c0_82 = arith.constant 0 : index
    %69 = vector.load %arg2[%c8, %c0_81, %c0_82] : memref<9x4x16xf32, #tpu.memory_space<vmem>>, vector<1x4x16xf32>
    %70 = vector.shape_cast %69 : vector<1x4x16xf32> to vector<4x16xf32>
    %cst_83 = arith.constant dense<0.000000e+00> : vector<288x16xf32>
    %71 = tpu.matmul %67, %70, %cst_83 {dimension_numbers = #tpu.dot_dimension_numbers<[1], [0], [0], [1], [0, 0, 1, 1], [], []>} : vector<288x4xf32>, vector<4x16xf32>, vector<288x16xf32> -> vector<288x16xf32>
    %72 = arith.addf %68, %71 : vector<288x16xf32>
    %c0_84 = arith.constant 0 : index
    %c0_85 = arith.constant 0 : index
    %73 = vector.load %arg5[%c0_84, %c0_85] : memref<288x16xf32, #tpu.memory_space<vmem>>, vector<288x16xf32>
    tpu.vector_store %arg5[%c0_84, %c0_85], %72 {strides = array<i32>} : memref<288x16xf32, #tpu.memory_space<vmem>>, vector<288x16xf32>,
    %c0_86 = arith.constant 0 : index
    %c0_87 = arith.constant 0 : index
    %74 = vector.load %arg5[%c0_86, %c0_87] : memref<288x16xf32, #tpu.memory_space<vmem>>, vector<288x16xf32>
    %c0_88 = arith.constant 0 : index
    %c0_89 = arith.constant 0 : index
    %75 = vector.load %arg3[%c0_88, %c0_89] : memref<1x16xf32, #tpu.memory_space<vmem>>, vector<1x16xf32>
    %76 = vector.broadcast %75 : vector<1x16xf32> to vector<288x16xf32>
    %77 = arith.addf %74, %76 : vector<288x16xf32>
    %cst_90 = arith.constant 0.000000e+00 : f32
    %78 = vector.broadcast %cst_90 : f32 to vector<288x16xf32>
    %79 = arith.maximumf %77, %78 : vector<288x16xf32>
    %c0_91 = arith.constant 0 : index
    %c0_92 = arith.constant 0 : index
    %c0_93 = arith.constant 0 : index
    %80 = vector.load %arg4[%c0_91, %c0_92, %c0_93] : memref<1x288x16xf32, #tpu.memory_space<vmem>>, vector<1x288x16xf32>
    %81 = vector.shape_cast %80 : vector<1x288x16xf32> to vector<288x16xf32>
    %82 = vector.shape_cast %79 : vector<288x16xf32> to vector<1x288x16xf32>
    tpu.vector_store %arg4[%c0_91, %c0_92, %c0_93], %82 {strides = array<i32>} : memref<1x288x16xf32, #tpu.memory_space<vmem>>, vector<1x288x16xf32>,
    return
  }
  func.func @transform_0(%arg0: i32) -> (i32, i32, i32) {
    %c0_i32 = arith.constant 0 : i32
    %c0_i32_0 = arith.constant 0 : i32
    %c0_i32_1 = arith.constant 0 : i32
    return %arg0, %c0_i32, %c0_i32_0 : i32, i32, i32
  }
  func.func @transform_1(%arg0: i32) -> (i32, i32, i32) {
    %c0_i32 = arith.constant 0 : i32
    %c0_i32_0 = arith.constant 0 : i32
    %c0_i32_1 = arith.constant 0 : i32
    %c0_i32_2 = arith.constant 0 : i32
    return %c0_i32, %c0_i32_0, %c0_i32_1 : i32, i32, i32
  }
  func.func @transform_2(%arg0: i32) -> (i32, i32) {
    %c0_i32 = arith.constant 0 : i32
    %c0_i32_0 = arith.constant 0 : i32
    %c0_i32_1 = arith.constant 0 : i32
    return %c0_i32, %c0_i32_0 : i32, i32
  }
  func.func @transform_3(%arg0: i32) -> (i32, i32, i32) {
    %c0_i32 = arith.constant 0 : i32
    %c0_i32_0 = arith.constant 0 : i32
    %c0_i32_1 = arith.constant 0 : i32
    return %arg0, %c0_i32, %c0_i32_0 : i32, i32, i32
  }
}

</mosaic_0001>

<llo_original>
// kernel: tpu_custom_call.1
$region0: #{tpu_custom_call.1}
  #allocation0 [shape = 'u32[]', space=smem, size = 0x4, offset = 0x4, fixed_abs, tag = 'smem constant byte address 0x4 - core index']
  #allocation1 [shape = 'u32[72,128]{1,0:T(1,128)}', space=vmem, size = 0x9000, scoped, tag = 'internal scratch']
  #allocation2 [shape = 'f32[288,16]{1,0:T(8,128)}', space=vmem, size = 0x24000, scoped, tag = 'scratch operand']
  %s0 = inlined_call_operand.vmem [shape: f32[2,326,4], index: 0, kind: input, shape index: {}]
  %s1 = inlined_call_operand.vmem [shape: f32[9,4,16], index: 1, kind: input, shape index: {}]
  %s2 = inlined_call_operand.vmem [shape: f32[1,16], index: 2, kind: input, shape index: {}]
  %s3 = inlined_call_operand.vmem [shape: f32[2,288,16], index: 3, kind: output, shape index: {}]
  %s4 = sld [smem:[#allocation0]]
  $region45: #{tpu_custom_call.1} parent=0
    _
  %s6 = ssub.s32 1, %s4
  %s7 = scalar_select 0, %s6, %s4
  loop: start=0, step=1, limit=4
  $region2: #{tpu_custom_call.1} parent=0 // loop_pre_header
    _
  $region3: #{tpu_custom_call.1} parent=0 // loop_header
    %s9 = sphi 0, %s13
    %p10 = scmp.ge.s32.totalorder %s9, 4
    %s19 = sphi 0, %s21
    %s22 = sphi 0, %s19
    %s23 = sphi 0, %s22
    %s39 = sphi 0, %s23
    %s43 = sphi 0, %s43
    %s45 = sphi 0, %s43
    %s46 = sphi 0, %s45
    %s60 = sphi 0, %s46
    %s64 = sphi 0, %s64
    %s66 = sphi 0, %s64
    %s67 = sphi 0, %s66
    %s81 = sphi 0, %s67
    %s87 = sphi 0, %s89
    %s90 = sphi 0, %s87
    %s91 = sphi 0, %s90
    %s107 = sphi 0, %s91
  $region4: #{tpu_custom_call.1} parent=0 // loop_header_branch
    %12 = sbr.rel (%p10) target = $region8
  $region5: #{tpu_custom_call.1} parent=0 // loop_body
    %s14 = ssub.s32 %s9, 1
    %s15 = ssub.s32 %s9, 2
    %s16 = sadd.s32 %s9, 1
    %s17 = ssub.s32 %s9, %s16
    %p18 = scmp.eq.s32.totalorder %s17, 0
    %s20 = sadd.s32 %s19, 1
    %s21 = scalar_select %p18, %s19, %s20
    %p24 = pneg %p18
    %p25 = scmp.eq.s32.totalorder %s9, 1
    %p26 = por %p24, %p25
    %p27 = scmp.ne.s32.totalorder %s19, %s22
    %p28 = scmp.eq.s32.totalorder %s9, 0
    %p29 = por %p27, %p28
    %p30 = scmp.ne.s32.totalorder %s19, %s22
    %p31 = scmp.eq.s32.totalorder %s14, 1
    %p32 = por %p30, %p31
    %p33 = scmp.ne.s32.totalorder %s22, %s23
    %p34 = scmp.eq.s32.totalorder %s14, 0
    %p35 = por %p33, %p34
    %p36 = scmp.ne.s32.totalorder %s22, %s23
    %p37 = scmp.eq.s32.totalorder %s15, 1
    %p38 = por %p36, %p37
    %p40 = scmp.ne.s32.totalorder %s23, %s39
    %p41 = scmp.eq.s32.totalorder %s15, 0
    %p42 = por %p40, %p41
    %s44 = sadd.s32 %s43, 1
    %p47 = scmp.eq.s32.totalorder %s9, 1
    %p48 = scmp.ne.s32.totalorder %s43, %s45
    %p49 = scmp.eq.s32.totalorder %s9, 0
    %p50 = por %p48, %p49
    %p51 = scmp.ne.s32.totalorder %s43, %s45
    %p52 = scmp.eq.s32.totalorder %s14, 1
    %p53 = por %p51, %p52
    %p54 = scmp.ne.s32.totalorder %s45, %s46
    %p55 = scmp.eq.s32.totalorder %s14, 0
    %p56 = por %p54, %p55
    %p57 = scmp.ne.s32.totalorder %s45, %s46
    %p58 = scmp.eq.s32.totalorder %s15, 1
    %p59 = por %p57, %p58
    %p61 = scmp.ne.s32.totalorder %s46, %s60
    %p62 = scmp.eq.s32.totalorder %s15, 0
    %p63 = por %p61, %p62
    %s65 = sadd.s32 %s64, 1
    %p68 = scmp.eq.s32.totalorder %s9, 1
    %p69 = scmp.ne.s32.totalorder %s64, %s66
    %p70 = scmp.eq.s32.totalorder %s9, 0
    %p71 = por %p69, %p70
    %p72 = scmp.ne.s32.totalorder %s64, %s66
    %p73 = scmp.eq.s32.totalorder %s14, 1
    %p74 = por %p72, %p73
    %p75 = scmp.ne.s32.totalorder %s66, %s67
    %p76 = scmp.eq.s32.totalorder %s14, 0
    %p77 = por %p75, %p76
    %p78 = scmp.ne.s32.totalorder %s66, %s67
    %p79 = scmp.eq.s32.totalorder %s15, 1
    %p80 = por %p78, %p79
    %p82 = scmp.ne.s32.totalorder %s67, %s81
    %p83 = scmp.eq.s32.totalorder %s15, 0
    %p84 = por %p82, %p83
    %s85 = ssub.s32 %s9, %s16
    %p86 = scmp.eq.s32.totalorder %s85, 0
    %s88 = sadd.s32 %s87, 1
    %s89 = scalar_select %p86, %s87, %s88
    %p92 = pneg %p86
    %p93 = scmp.eq.s32.totalorder %s9, 1
    %p94 = por %p92, %p93
    %p95 = scmp.ne.s32.totalorder %s87, %s90
    %p96 = scmp.eq.s32.totalorder %s9, 0
    %p97 = por %p95, %p96
    %p98 = scmp.ne.s32.totalorder %s87, %s90
    %p99 = scmp.eq.s32.totalorder %s14, 1
    %p100 = por %p98, %p99
    %p101 = scmp.ne.s32.totalorder %s90, %s91
    %p102 = scmp.eq.s32.totalorder %s14, 0
    %p103 = por %p101, %p102
    %p104 = scmp.ne.s32.totalorder %s90, %s91
    %p105 = scmp.eq.s32.totalorder %s15, 1
    %p106 = por %p104, %p105
    %p108 = scmp.ne.s32.totalorder %s91, %s107
    %p109 = scmp.eq.s32.totalorder %s15, 0
    %p110 = por %p108, %p109
    %p111 = scmp.le.s32.totalorder 1, %s9
    %p112 = scmp.lt.s32.totalorder %s9, 3
    %p113 = pnand %p111, %p112
    %p114 = pneg %p113
    // Predicated region
    $region9: #{tpu_custom_call.1} parent=5 // pred_check
      _
    $region10: #{tpu_custom_call.1} parent=5 // pred_check_branch
      %116 = sbr.rel (%p113) target = $region12
    $region11: #{tpu_custom_call.1} parent=5 // pred_region
      %s117 = ssub.s32 %s9, 1
      // Predicated region
      $region13: #{tpu_custom_call.1} parent=11 // pred_check
        %p118 = pneg %p56
      $region14: #{tpu_custom_call.1} parent=11 // pred_check_branch
        %120 = sbr.rel (%p118) target = $region16
      $region15: #{tpu_custom_call.1} parent=11 // pred_region
        _
      $region16: #{tpu_custom_call.1} parent=11 // pred_fallthru
        _
      // Predicated region
      $region17: #{tpu_custom_call.1} parent=11 // pred_check
        %p121 = pneg %p77
      $region18: #{tpu_custom_call.1} parent=11 // pred_check_branch
        %123 = sbr.rel (%p121) target = $region20
      $region19: #{tpu_custom_call.1} parent=11 // pred_region
        _
      $region20: #{tpu_custom_call.1} parent=11 // pred_fallthru
        _
    $region12: #{tpu_custom_call.1} parent=5 // pred_fallthru
      _
    %p124 = scmp.lt.s32.totalorder %s9, 2
    // Predicated region
    $region21: #{tpu_custom_call.1} parent=5 // pred_check
      %p125 = pneg %p124
    $region22: #{tpu_custom_call.1} parent=5 // pred_check_branch
      %127 = sbr.rel (%p125) target = $region24
    $region23: #{tpu_custom_call.1} parent=5 // pred_region
      // Predicated region
      $region25: #{tpu_custom_call.1} parent=23 // pred_check
        %p128 = pneg %p29
      $region26: #{tpu_custom_call.1} parent=23 // pred_check_branch
        %130 = sbr.rel (%p128) target = $region28
      $region27: #{tpu_custom_call.1} parent=23 // pred_region
        %p131 = scmp.lt.s32.totalorder %s9, 1
        %s132 = scalar_select %p131, %s9, 1
        %s133 = smul.addr %s132, 41
        %s134 = smul.addr %s133, 8
        %s135 = scalar_lea.vmem %s0, %s134
      $region28: #{tpu_custom_call.1} parent=23 // pred_fallthru
        _
    $region24: #{tpu_custom_call.1} parent=5 // pred_fallthru
      _
    %p136 = scmp.le.s32.totalorder 1, %s9
    %p137 = scmp.lt.s32.totalorder %s9, 3
    %p138 = pnand %p136, %p137
    %p139 = pneg %p138
    // Predicated region
    $region29: #{tpu_custom_call.1} parent=5 // pred_check
      _
    $region30: #{tpu_custom_call.1} parent=5 // pred_check_branch
      %141 = sbr.rel (%p138) target = $region32
    $region31: #{tpu_custom_call.1} parent=5 // pred_region
      %s142 = ssub.s32 %s9, 1
      %p143 = scmp.lt.s32.totalorder %s14, 1
      %s144 = scalar_select %p143, %s14, 1
      %s145 = smul.addr %s144, 41
      %s146 = smul.addr %s145, 8
      %s147 = scalar_lea.vmem %s0, %s146
      %p148 = pneg %p35
      %p149 = pneg %p32
      %p150 = pneg %p56
      %p151 = pneg %p53
      %p152 = pneg %p77
      %p153 = pneg %p74
      %p154 = pneg %p103
      %p155 = pneg %p100
      %p156 = scmp.lt.s32.totalorder %s14, 1
      %s157 = scalar_select %p156, %s14, 1
      %s158 = smul.addr %s157, 36
      %s159 = smul.addr %s158, 8
      %s160 = scalar_lea.vmem %s3, %s159
      %p161 = scmp.lt.s32.totalorder %s14, 1
      %s162 = scalar_select %p161, %s14, 1
      %s163 = smul.addr %s162, 41
      %s164 = smul.addr %s163, 8
      %s165 = scalar_lea.vmem %s0, %s164
      %p166 = scmp.lt.s32.totalorder %s14, 1
      %s167 = scalar_select %p166, %s14, 1
      %s168 = smul.addr %s167, 36
      %s169 = smul.addr %s168, 8
      %s170 = scalar_lea.vmem %s3, %s169
      %vm171 = vcmask 130048
      %172 = vst.msk [vmem:[#allocation2] sm:$0xff] %vm171, 0.0
      %173 = vst.msk [vmem:[#allocation2 + $0x8] sm:$0xff] %vm171, 0.0
      %174 = vst.msk [vmem:[#allocation2 + $0x10] sm:$0xff] %vm171, 0.0
      %175 = vst.msk [vmem:[#allocation2 + $0x18] sm:$0xff] %vm171, 0.0
      %176 = vst.msk [vmem:[#allocation2 + $0x20] sm:$0xff] %vm171, 0.0
      %177 = vst.msk [vmem:[#allocation2 + $0x28] sm:$0xff] %vm171, 0.0
      %178 = vst.msk [vmem:[#allocation2 + $0x30] sm:$0xff] %vm171, 0.0
      %179 = vst.msk [vmem:[#allocation2 + $0x38] sm:$0xff] %vm171, 0.0
      %180 = vst.msk [vmem:[#allocation2 + $0x40] sm:$0xff] %vm171, 0.0
      %181 = vst.msk [vmem:[#allocation2 + $0x48] sm:$0xff] %vm171, 0.0
      %182 = vst.msk [vmem:[#allocation2 + $0x50] sm:$0xff] %vm171, 0.0
      %183 = vst.msk [vmem:[#allocation2 + $0x58] sm:$0xff] %vm171, 0.0
      %184 = vst.msk [vmem:[#allocation2 + $0x60] sm:$0xff] %vm171, 0.0
      %185 = vst.msk [vmem:[#allocation2 + $0x68] sm:$0xff] %vm171, 0.0
      %186 = vst.msk [vmem:[#allocation2 + $0x70] sm:$0xff] %vm171, 0.0
      %187 = vst.msk [vmem:[#allocation2 + $0x78] sm:$0xff] %vm171, 0.0
      %188 = vst.msk [vmem:[#allocation2 + $0x80] sm:$0xff] %vm171, 0.0
      %189 = vst.msk [vmem:[#allocation2 + $0x88] sm:$0xff] %vm171, 0.0
      %190 = vst.msk [vmem:[#allocation2 + $0x90] sm:$0xff] %vm171, 0.0
      %191 = vst.msk [vmem:[#allocation2 + $0x98] sm:$0xff] %vm171, 0.0
      %192 = vst.msk [vmem:[#allocation2 + $0xa0] sm:$0xff] %vm171, 0.0
      %193 = vst.msk [vmem:[#allocation2 + $0xa8] sm:$0xff] %vm171, 0.0
      %194 = vst.msk [vmem:[#allocation2 + $0xb0] sm:$0xff] %vm171, 0.0
      %195 = vst.msk [vmem:[#allocation2 + $0xb8] sm:$0xff] %vm171, 0.0
      %196 = vst.msk [vmem:[#allocation2 + $0xc0] sm:$0xff] %vm171, 0.0
      %197 = vst.msk [vmem:[#allocation2 + $0xc8] sm:$0xff] %vm171, 0.0
      %198 = vst.msk [vmem:[#allocation2 + $0xd0] sm:$0xff] %vm171, 0.0
      %199 = vst.msk [vmem:[#allocation2 + $0xd8] sm:$0xff] %vm171, 0.0
      %200 = vst.msk [vmem:[#allocation2 + $0xe0] sm:$0xff] %vm171, 0.0
      %201 = vst.msk [vmem:[#allocation2 + $0xe8] sm:$0xff] %vm171, 0.0
      %202 = vst.msk [vmem:[#allocation2 + $0xf0] sm:$0xff] %vm171, 0.0
      %203 = vst.msk [vmem:[#allocation2 + $0xf8] sm:$0xff] %vm171, 0.0
      %204 = vst.msk [vmem:[#allocation2 + $0x100] sm:$0xff] %vm171, 0.0
      %205 = vst.msk [vmem:[#allocation2 + $0x108] sm:$0xff] %vm171, 0.0
      %206 = vst.msk [vmem:[#allocation2 + $0x110] sm:$0xff] %vm171, 0.0
      %207 = vst.msk [vmem:[#allocation2 + $0x118] sm:$0xff] %vm171, 0.0
      %v208 = vld [vmem:[%s165] sm:$0xff]
      %v209 = vld [vmem:[%s165 + $0x8] sm:$0xff]
      %v210 = vld [vmem:[%s165 + $0x10] sm:$0xff]
      %v211 = vld [vmem:[%s165 + $0x18] sm:$0xff]
      %v212 = vld [vmem:[%s165 + $0x20] sm:$0xff]
      %v213 = vld [vmem:[%s165 + $0x28] sm:$0xff]
      %v214 = vld [vmem:[%s165 + $0x30] sm:$0xff]
      %v215 = vld [vmem:[%s165 + $0x38] sm:$0xff]
      %v216 = vld [vmem:[%s165 + $0x40] sm:$0xff]
      %v217 = vld [vmem:[%s165 + $0x48] sm:$0xff]
      %v218 = vld [vmem:[%s165 + $0x50] sm:$0xff]
      %v219 = vld [vmem:[%s165 + $0x58] sm:$0xff]
      %v220 = vld [vmem:[%s165 + $0x60] sm:$0xff]
      %v221 = vld [vmem:[%s165 + $0x68] sm:$0xff]
      %v222 = vld [vmem:[%s165 + $0x70] sm:$0xff]
      %v223 = vld [vmem:[%s165 + $0x78] sm:$0xff]
      %v224 = vld [vmem:[%s165 + $0x80] sm:$0xff]
      %v225 = vld [vmem:[%s165 + $0x88] sm:$0xff]
      %v226 = vld [vmem:[%s165 + $0x90] sm:$0xff]
      %v227 = vld [vmem:[%s165 + $0x98] sm:$0xff]
      %v228 = vld [vmem:[%s165 + $0xa0] sm:$0xff]
      %v229 = vld [vmem:[%s165 + $0xa8] sm:$0xff]
      %v230 = vld [vmem:[%s165 + $0xb0] sm:$0xff]
      %v231 = vld [vmem:[%s165 + $0xb8] sm:$0xff]
      %v232 = vld [vmem:[%s165 + $0xc0] sm:$0xff]
      %v233 = vld [vmem:[%s165 + $0xc8] sm:$0xff]
      %v234 = vld [vmem:[%s165 + $0xd0] sm:$0xff]
      %v235 = vld [vmem:[%s165 + $0xd8] sm:$0xff]
      %v236 = vld [vmem:[%s165 + $0xe0] sm:$0xff]
      %v237 = vld [vmem:[%s165 + $0xe8] sm:$0xff]
      %v238 = vld [vmem:[%s165 + $0xf0] sm:$0xff]
      %v239 = vld [vmem:[%s165 + $0xf8] sm:$0xff]
      %v240 = vld [vmem:[%s165 + $0x100] sm:$0xff]
      %v241 = vld [vmem:[%s165 + $0x108] sm:$0xff]
      %v242 = vld [vmem:[%s165 + $0x110] sm:$0xff]
      %v243 = vld [vmem:[%s165 + $0x118] sm:$0xff]
      %v244 = vld [vmem:[#allocation2] sm:$0xff]
      %v245 = vld [vmem:[#allocation2 + $0x8] sm:$0xff]
      %v246 = vld [vmem:[#allocation2 + $0x10] sm:$0xff]
      %v247 = vld [vmem:[#allocation2 + $0x18] sm:$0xff]
      %v248 = vld [vmem:[#allocation2 + $0x20] sm:$0xff]
      %v249 = vld [vmem:[#allocation2 + $0x28] sm:$0xff]
      %v250 = vld [vmem:[#allocation2 + $0x30] sm:$0xff]
      %v251 = vld [vmem:[#allocation2 + $0x38] sm:$0xff]
      %v252 = vld [vmem:[#allocation2 + $0x40] sm:$0xff]
      %v253 = vld [vmem:[#allocation2 + $0x48] sm:$0xff]
      %v254 = vld [vmem:[#allocation2 + $0x50] sm:$0xff]
      %v255 = vld [vmem:[#allocation2 + $0x58] sm:$0xff]
      %v256 = vld [vmem:[#allocation2 + $0x60] sm:$0xff]
      %v257 = vld [vmem:[#allocation2 + $0x68] sm:$0xff]
      %v258 = vld [vmem:[#allocation2 + $0x70] sm:$0xff]
      %v259 = vld [vmem:[#allocation2 + $0x78] sm:$0xff]
      %v260 = vld [vmem:[#allocation2 + $0x80] sm:$0xff]
      %v261 = vld [vmem:[#allocation2 + $0x88] sm:$0xff]
      %v262 = vld [vmem:[#allocation2 + $0x90] sm:$0xff]
      %v263 = vld [vmem:[#allocation2 + $0x98] sm:$0xff]
      %v264 = vld [vmem:[#allocation2 + $0xa0] sm:$0xff]
      %v265 = vld [vmem:[#allocation2 + $0xa8] sm:$0xff]
      %v266 = vld [vmem:[#allocation2 + $0xb0] sm:$0xff]
      %v267 = vld [vmem:[#allocation2 + $0xb8] sm:$0xff]
      %v268 = vld [vmem:[#allocation2 + $0xc0] sm:$0xff]
      %v269 = vld [vmem:[#allocation2 + $0xc8] sm:$0xff]
      %v270 = vld [vmem:[#allocation2 + $0xd0] sm:$0xff]
      %v271 = vld [vmem:[#allocation2 + $0xd8] sm:$0xff]
      %v272 = vld [vmem:[#allocation2 + $0xe0] sm:$0xff]
      %v273 = vld [vmem:[#allocation2 + $0xe8] sm:$0xff]
      %v274 = vld [vmem:[#allocation2 + $0xf0] sm:$0xff]
      %v275 = vld [vmem:[#allocation2 + $0xf8] sm:$0xff]
      %v276 = vld [vmem:[#allocation2 + $0x100] sm:$0xff]
      %v277 = vld [vmem:[#allocation2 + $0x108] sm:$0xff]
      %v278 = vld [vmem:[#allocation2 + $0x110] sm:$0xff]
      %v279 = vld [vmem:[#allocation2 + $0x118] sm:$0xff]
      %v280 = vld [vmem:[%s1] sm:$0xf]
      %vm281 = vcmask 31744
      %v283 = vsel %vm281, %v208, 0
      %v286 = vsel %vm281, %v209, 0
      %v289 = vsel %vm281, %v210, 0
      %v292 = vsel %vm281, %v211, 0
      %v295 = vsel %vm281, %v212, 0
      %v298 = vsel %vm281, %v213, 0
      %v301 = vsel %vm281, %v214, 0
      %v304 = vsel %vm281, %v215, 0
      %v307 = vsel %vm281, %v216, 0
      %v310 = vsel %vm281, %v217, 0
      %v313 = vsel %vm281, %v218, 0
      %v316 = vsel %vm281, %v219, 0
      %v319 = vsel %vm281, %v220, 0
      %v322 = vsel %vm281, %v221, 0
      %v325 = vsel %vm281, %v222, 0
      %v328 = vsel %vm281, %v223, 0
      %v331 = vsel %vm281, %v224, 0
      %v334 = vsel %vm281, %v225, 0
      %v337 = vsel %vm281, %v226, 0
      %v340 = vsel %vm281, %v227, 0
      %v343 = vsel %vm281, %v228, 0
      %v346 = vsel %vm281, %v229, 0
      %v349 = vsel %vm281, %v230, 0
      %v352 = vsel %vm281, %v231, 0
      %v355 = vsel %vm281, %v232, 0
      %v358 = vsel %vm281, %v233, 0
      %v361 = vsel %vm281, %v234, 0
      %v364 = vsel %vm281, %v235, 0
      %v367 = vsel %vm281, %v236, 0
      %v370 = vsel %vm281, %v237, 0
      %v373 = vsel %vm281, %v238, 0
      %v376 = vsel %vm281, %v239, 0
      %v379 = vsel %vm281, %v240, 0
      %v382 = vsel %vm281, %v241, 0
      %v385 = vsel %vm281, %v242, 0
      %v388 = vsel %vm281, %v243, 0
      %vm390 = vcmask 1043456
      %v392 = vsel %vm390, %v280, 0
      %394 = vmatpush.msra.mxu0 0.0
      %395 = vmatpush.msra.mxu0 0.0
      %396 = vmatpush.msra.mxu0 0.0
      %397 = vmatpush.msra.mxu0 0.0
      %398 = vmatpush.msra.mxu0 0.0
      %399 = vmatpush.msra.mxu0 0.0
      %400 = vmatpush.msra.mxu0 0.0
      %401 = vmatpush.msra.mxu0 0.0
      %402 = vmatpush.msra.mxu0 0.0
      %403 = vmatpush.msra.mxu0 0.0
      %404 = vmatpush.msra.mxu0 0.0
      %405 = vmatpush.msra.mxu0 0.0
      %406 = vmatpush.msra.mxu0 0.0
      %407 = vmatpush.msra.mxu0 0.0
      %408 = vmatpush.msra.mxu0 0.0
      %409 = vmatpush.msra.mxu0 %v392
      %410 = vmatmul.f32.gmra.mxu0 %v283
      %v411 = vpop.f32.mrf.mxu0
      %v412 = vadd.f32 0.0, %v411
      %413 = vmatmul.f32.gmra.mxu0 %v286
      %v414 = vpop.f32.mrf.mxu0
      %v415 = vadd.f32 0.0, %v414
      %416 = vmatmul.f32.gmra.mxu0 %v289
      %v417 = vpop.f32.mrf.mxu0
      %v418 = vadd.f32 0.0, %v417
      %419 = vmatmul.f32.gmra.mxu0 %v292
      %v420 = vpop.f32.mrf.mxu0
      %v421 = vadd.f32 0.0, %v420
      %422 = vmatmul.f32.gmra.mxu0 %v295
      %v423 = vpop.f32.mrf.mxu0
      %v424 = vadd.f32 0.0, %v423
      %425 = vmatmul.f32.gmra.mxu0 %v298
      %v426 = vpop.f32.mrf.mxu0
      %v427 = vadd.f32 0.0, %v426
      %428 = vmatmul.f32.gmra.mxu0 %v301
      %v429 = vpop.f32.mrf.mxu0
      %v430 = vadd.f32 0.0, %v429
      %431 = vmatmul.f32.gmra.mxu0 %v304
      %v432 = vpop.f32.mrf.mxu0
      %v433 = vadd.f32 0.0, %v432
      %434 = vmatmul.f32.gmra.mxu0 %v307
      %v435 = vpop.f32.mrf.mxu0
      %v436 = vadd.f32 0.0, %v435
      %437 = vmatmul.f32.gmra.mxu0 %v310
      %v438 = vpop.f32.mrf.mxu0
      %v439 = vadd.f32 0.0, %v438
      %440 = vmatmul.f32.gmra.mxu0 %v313
      %v441 = vpop.f32.mrf.mxu0
      %v442 = vadd.f32 0.0, %v441
      %443 = vmatmul.f32.gmra.mxu0 %v316
      %v444 = vpop.f32.mrf.mxu0
      %v445 = vadd.f32 0.0, %v444
      %446 = vmatmul.f32.gmra.mxu0 %v319
      %v447 = vpop.f32.mrf.mxu0
      %v448 = vadd.f32 0.0, %v447
      %449 = vmatmul.f32.gmra.mxu0 %v322
      %v450 = vpop.f32.mrf.mxu0
      %v451 = vadd.f32 0.0, %v450
      %452 = vmatmul.f32.gmra.mxu0 %v325
      %v453 = vpop.f32.mrf.mxu0
      %v454 = vadd.f32 0.0, %v453
      %455 = vmatmul.f32.gmra.mxu0 %v328
      %v456 = vpop.f32.mrf.mxu0
      %v457 = vadd.f32 0.0, %v456
      %458 = vmatmul.f32.gmra.mxu0 %v331
      %v459 = vpop.f32.mrf.mxu0
      %v460 = vadd.f32 0.0, %v459
      %461 = vmatmul.f32.gmra.mxu0 %v334
      %v462 = vpop.f32.mrf.mxu0
      %v463 = vadd.f32 0.0, %v462
      %464 = vmatmul.f32.gmra.mxu0 %v337
      %v465 = vpop.f32.mrf.mxu0
      %v466 = vadd.f32 0.0, %v465
      %467 = vmatmul.f32.gmra.mxu0 %v340
      %v468 = vpop.f32.mrf.mxu0
      %v469 = vadd.f32 0.0, %v468
      %470 = vmatmul.f32.gmra.mxu0 %v343
      %v471 = vpop.f32.mrf.mxu0
      %v472 = vadd.f32 0.0, %v471
      %473 = vmatmul.f32.gmra.mxu0 %v346
      %v474 = vpop.f32.mrf.mxu0
      %v475 = vadd.f32 0.0, %v474
      %476 = vmatmul.f32.gmra.mxu0 %v349
      %v477 = vpop.f32.mrf.mxu0
      %v478 = vadd.f32 0.0, %v477
      %479 = vmatmul.f32.gmra.mxu0 %v352
      %v480 = vpop.f32.mrf.mxu0
      %v481 = vadd.f32 0.0, %v480
      %482 = vmatmul.f32.gmra.mxu0 %v355
      %v483 = vpop.f32.mrf.mxu0
      %v484 = vadd.f32 0.0, %v483
      %485 = vmatmul.f32.gmra.mxu0 %v358
      %v486 = vpop.f32.mrf.mxu0
      %v487 = vadd.f32 0.0, %v486
      %488 = vmatmul.f32.gmra.mxu0 %v361
      %v489 = vpop.f32.mrf.mxu0
      %v490 = vadd.f32 0.0, %v489
      %491 = vmatmul.f32.gmra.mxu0 %v364
      %v492 = vpop.f32.mrf.mxu0
      %v493 = vadd.f32 0.0, %v492
      %494 = vmatmul.f32.gmra.mxu0 %v367
      %v495 = vpop.f32.mrf.mxu0
      %v496 = vadd.f32 0.0, %v495
      %497 = vmatmul.f32.gmra.mxu0 %v370
      %v498 = vpop.f32.mrf.mxu0
      %v499 = vadd.f32 0.0, %v498
      %500 = vmatmul.f32.gmra.mxu0 %v373
      %v501 = vpop.f32.mrf.mxu0
      %v502 = vadd.f32 0.0, %v501
      %503 = vmatmul.f32.gmra.mxu0 %v376
      %v504 = vpop.f32.mrf.mxu0
      %v505 = vadd.f32 0.0, %v504
      %506 = vmatmul.f32.gmra.mxu0 %v379
      %v507 = vpop.f32.mrf.mxu0
      %v508 = vadd.f32 0.0, %v507
      %509 = vmatmul.f32.gmra.mxu0 %v382
      %v510 = vpop.f32.mrf.mxu0
      %v511 = vadd.f32 0.0, %v510
      %512 = vmatmul.f32.gmra.mxu0 %v385
      %v513 = vpop.f32.mrf.mxu0
      %v514 = vadd.f32 0.0, %v513
      %515 = vmatmul.f32.gmra.mxu0 %v388
      %v516 = vpop.f32.mrf.mxu0
      %v517 = vadd.f32 0.0, %v516
      %518 = vdwg.mxu0
      %v519 = vadd.f32 %v244, %v412
      %v520 = vadd.f32 %v245, %v415
      %v521 = vadd.f32 %v246, %v418
      %v522 = vadd.f32 %v247, %v421
      %v523 = vadd.f32 %v248, %v424
      %v524 = vadd.f32 %v249, %v427
      %v525 = vadd.f32 %v250, %v430
      %v526 = vadd.f32 %v251, %v433
      %v527 = vadd.f32 %v252, %v436
      %v528 = vadd.f32 %v253, %v439
      %v529 = vadd.f32 %v254, %v442
      %v530 = vadd.f32 %v255, %v445
      %v531 = vadd.f32 %v256, %v448
      %v532 = vadd.f32 %v257, %v451
      %v533 = vadd.f32 %v258, %v454
      %v534 = vadd.f32 %v259, %v457
      %v535 = vadd.f32 %v260, %v460
      %v536 = vadd.f32 %v261, %v463
      %v537 = vadd.f32 %v262, %v466
      %v538 = vadd.f32 %v263, %v469
      %v539 = vadd.f32 %v264, %v472
      %v540 = vadd.f32 %v265, %v475
      %v541 = vadd.f32 %v266, %v478
      %v542 = vadd.f32 %v267, %v481
      %v543 = vadd.f32 %v268, %v484
      %v544 = vadd.f32 %v269, %v487
      %v545 = vadd.f32 %v270, %v490
      %v546 = vadd.f32 %v271, %v493
      %v547 = vadd.f32 %v272, %v496
      %v548 = vadd.f32 %v273, %v499
      %v549 = vadd.f32 %v274, %v502
      %v550 = vadd.f32 %v275, %v505
      %v551 = vadd.f32 %v276, %v508
      %v552 = vadd.f32 %v277, %v511
      %v553 = vadd.f32 %v278, %v514
      %v554 = vadd.f32 %v279, %v517
      %555 = vst.msk [vmem:[#allocation2] sm:$0xff] %vm171, %v519
      %556 = vst.msk [vmem:[#allocation2 + $0x8] sm:$0xff] %vm171, %v520
      %557 = vst.msk [vmem:[#allocation2 + $0x10] sm:$0xff] %vm171, %v521
      %558 = vst.msk [vmem:[#allocation2 + $0x18] sm:$0xff] %vm171, %v522
      %559 = vst.msk [vmem:[#allocation2 + $0x20] sm:$0xff] %vm171, %v523
      %560 = vst.msk [vmem:[#allocation2 + $0x28] sm:$0xff] %vm171, %v524
      %561 = vst.msk [vmem:[#allocation2 + $0x30] sm:$0xff] %vm171, %v525
      %562 = vst.msk [vmem:[#allocation2 + $0x38] sm:$0xff] %vm171, %v526
      %563 = vst.msk [vmem:[#allocation2 + $0x40] sm:$0xff] %vm171, %v527
      %564 = vst.msk [vmem:[#allocation2 + $0x48] sm:$0xff] %vm171, %v528
      %565 = vst.msk [vmem:[#allocation2 + $0x50] sm:$0xff] %vm171, %v529
      %566 = vst.msk [vmem:[#allocation2 + $0x58] sm:$0xff] %vm171, %v530
      %567 = vst.msk [vmem:[#allocation2 + $0x60] sm:$0xff] %vm171, %v531
      %568 = vst.msk [vmem:[#allocation2 + $0x68] sm:$0xff] %vm171, %v532
      %569 = vst.msk [vmem:[#allocation2 + $0x70] sm:$0xff] %vm171, %v533
      %570 = vst.msk [vmem:[#allocation2 + $0x78] sm:$0xff] %vm171, %v534
      %571 = vst.msk [vmem:[#allocation2 + $0x80] sm:$0xff] %vm171, %v535
      %572 = vst.msk [vmem:[#allocation2 + $0x88] sm:$0xff] %vm171, %v536
      %573 = vst.msk [vmem:[#allocation2 + $0x90] sm:$0xff] %vm171, %v537
      %574 = vst.msk [vmem:[#allocation2 + $0x98] sm:$0xff] %vm171, %v538
      %575 = vst.msk [vmem:[#allocation2 + $0xa0] sm:$0xff] %vm171, %v539
      %576 = vst.msk [vmem:[#allocation2 + $0xa8] sm:$0xff] %vm171, %v540
      %577 = vst.msk [vmem:[#allocation2 + $0xb0] sm:$0xff] %vm171, %v541
      %578 = vst.msk [vmem:[#allocation2 + $0xb8] sm:$0xff] %vm171, %v542
      %579 = vst.msk [vmem:[#allocation2 + $0xc0] sm:$0xff] %vm171, %v543
      %580 = vst.msk [vmem:[#allocation2 + $0xc8] sm:$0xff] %vm171, %v544
      %581 = vst.msk [vmem:[#allocation2 + $0xd0] sm:$0xff] %vm171, %v545
      %582 = vst.msk [vmem:[#allocation2 + $0xd8] sm:$0xff] %vm171, %v546
      %583 = vst.msk [vmem:[#allocation2 + $0xe0] sm:$0xff] %vm171, %v547
      %584 = vst.msk [vmem:[#allocation2 + $0xe8] sm:$0xff] %vm171, %v548
      %585 = vst.msk [vmem:[#allocation2 + $0xf0] sm:$0xff] %vm171, %v549
      %586 = vst.msk [vmem:[#allocation2 + $0xf8] sm:$0xff] %vm171, %v550
      %587 = vst.msk [vmem:[#allocation2 + $0x100] sm:$0xff] %vm171, %v551
      %588 = vst.msk [vmem:[#allocation2 + $0x108] sm:$0xff] %vm171, %v552
      %589 = vst.msk [vmem:[#allocation2 + $0x110] sm:$0xff] %vm171, %v553
      %590 = vst.msk [vmem:[#allocation2 + $0x118] sm:$0xff] %vm171, %v554
      %v591 = vld [vmem:[%s165 + $0x1] sm:$0xff]
      %v592 = vld [vmem:[%s165 + $0x9] sm:$0xff]
      %v593 = vld [vmem:[%s165 + $0x11] sm:$0xff]
      %v594 = vld [vmem:[%s165 + $0x19] sm:$0xff]
      %v595 = vld [vmem:[%s165 + $0x21] sm:$0xff]
      %v596 = vld [vmem:[%s165 + $0x29] sm:$0xff]
      %v597 = vld [vmem:[%s165 + $0x31] sm:$0xff]
      %v598 = vld [vmem:[%s165 + $0x39] sm:$0xff]
      %v599 = vld [vmem:[%s165 + $0x41] sm:$0xff]
      %v600 = vld [vmem:[%s165 + $0x49] sm:$0xff]
      %v601 = vld [vmem:[%s165 + $0x51] sm:$0xff]
      %v602 = vld [vmem:[%s165 + $0x59] sm:$0xff]
      %v603 = vld [vmem:[%s165 + $0x61] sm:$0xff]
      %v604 = vld [vmem:[%s165 + $0x69] sm:$0xff]
      %v605 = vld [vmem:[%s165 + $0x71] sm:$0xff]
      %v606 = vld [vmem:[%s165 + $0x79] sm:$0xff]
      %v607 = vld [vmem:[%s165 + $0x81] sm:$0xff]
      %v608 = vld [vmem:[%s165 + $0x89] sm:$0xff]
      %v609 = vld [vmem:[%s165 + $0x91] sm:$0xff]
      %v610 = vld [vmem:[%s165 + $0x99] sm:$0xff]
      %v611 = vld [vmem:[%s165 + $0xa1] sm:$0xff]
      %v612 = vld [vmem:[%s165 + $0xa9] sm:$0xff]
      %v613 = vld [vmem:[%s165 + $0xb1] sm:$0xff]
      %v614 = vld [vmem:[%s165 + $0xb9] sm:$0xff]
      %v615 = vld [vmem:[%s165 + $0xc1] sm:$0xff]
      %v616 = vld [vmem:[%s165 + $0xc9] sm:$0xff]
      %v617 = vld [vmem:[%s165 + $0xd1] sm:$0xff]
      %v618 = vld [vmem:[%s165 + $0xd9] sm:$0xff]
      %v619 = vld [vmem:[%s165 + $0xe1] sm:$0xff]
      %v620 = vld [vmem:[%s165 + $0xe9] sm:$0xff]
      %v621 = vld [vmem:[%s165 + $0xf1] sm:$0xff]
      %v622 = vld [vmem:[%s165 + $0xf9] sm:$0xff]
      %v623 = vld [vmem:[%s165 + $0x101] sm:$0xff]
      %v624 = vld [vmem:[%s165 + $0x109] sm:$0xff]
      %v625 = vld [vmem:[%s165 + $0x111] sm:$0xff]
      %v626 = vld [vmem:[%s165 + $0x119] sm:$0xff]
      %v627 = vld [vmem:[#allocation2] sm:$0xff]
      %v628 = vld [vmem:[#allocation2 + $0x8] sm:$0xff]
      %v629 = vld [vmem:[#allocation2 + $0x10] sm:$0xff]
      %v630 = vld [vmem:[#allocation2 + $0x18] sm:$0xff]
      %v631 = vld [vmem:[#allocation2 + $0x20] sm:$0xff]
      %v632 = vld [vmem:[#allocation2 + $0x28] sm:$0xff]
      %v633 = vld [vmem:[#allocation2 + $0x30] sm:$0xff]
      %v634 = vld [vmem:[#allocation2 + $0x38] sm:$0xff]
      %v635 = vld [vmem:[#allocation2 + $0x40] sm:$0xff]
      %v636 = vld [vmem:[#allocation2 + $0x48] sm:$0xff]
      %v637 = vld [vmem:[#allocation2 + $0x50] sm:$0xff]
      %v638 = vld [vmem:[#allocation2 + $0x58] sm:$0xff]
      %v639 = vld [vmem:[#allocation2 + $0x60] sm:$0xff]
      %v640 = vld [vmem:[#allocation2 + $0x68] sm:$0xff]
      %v641 = vld [vmem:[#allocation2 + $0x70] sm:$0xff]
      %v642 = vld [vmem:[#allocation2 + $0x78] sm:$0xff]
      %v643 = vld [vmem:[#allocation2 + $0x80] sm:$0xff]
      %v644 = vld [vmem:[#allocation2 + $0x88] sm:$0xff]
      %v645 = vld [vmem:[#allocation2 + $0x90] sm:$0xff]
      %v646 = vld [vmem:[#allocation2 + $0x98] sm:$0xff]
      %v647 = vld [vmem:[#allocation2 + $0xa0] sm:$0xff]
      %v648 = vld [vmem:[#allocation2 + $0xa8] sm:$0xff]
      %v649 = vld [vmem:[#allocation2 + $0xb0] sm:$0xff]
      %v650 = vld [vmem:[#allocation2 + $0xb8] sm:$0xff]
      %v651 = vld [vmem:[#allocation2 + $0xc0] sm:$0xff]
      %v652 = vld [vmem:[#allocation2 + $0xc8] sm:$0xff]
      %v653 = vld [vmem:[#allocation2 + $0xd0] sm:$0xff]
      %v654 = vld [vmem:[#allocation2 + $0xd8] sm:$0xff]
      %v655 = vld [vmem:[#allocation2 + $0xe0] sm:$0xff]
      %v656 = vld [vmem:[#allocation2 + $0xe8] sm:$0xff]
      %v657 = vld [vmem:[#allocation2 + $0xf0] sm:$0xff]
      %v658 = vld [vmem:[#allocation2 + $0xf8] sm:$0xff]
      %v659 = vld [vmem:[#allocation2 + $0x100] sm:$0xff]
      %v660 = vld [vmem:[#allocation2 + $0x108] sm:$0xff]
      %v661 = vld [vmem:[#allocation2 + $0x110] sm:$0xff]
      %v662 = vld [vmem:[#allocation2 + $0x118] sm:$0xff]
      %s663 = scalar_lea.vmem %s1, 4
      %v664 = vld [vmem:[%s663] sm:$0xf]
      %v666 = vsel %vm281, %v591, 0
      %v669 = vsel %vm281, %v592, 0
      %v672 = vsel %vm281, %v593, 0
      %v675 = vsel %vm281, %v594, 0
      %v678 = vsel %vm281, %v595, 0
      %v681 = vsel %vm281, %v596, 0
      %v684 = vsel %vm281, %v597, 0
      %v687 = vsel %vm281, %v598, 0
      %v690 = vsel %vm281, %v599, 0
      %v693 = vsel %vm281, %v600, 0
      %v696 = vsel %vm281, %v601, 0
      %v699 = vsel %vm281, %v602, 0
      %v702 = vsel %vm281, %v603, 0
      %v705 = vsel %vm281, %v604, 0
      %v708 = vsel %vm281, %v605, 0
      %v711 = vsel %vm281, %v606, 0
      %v714 = vsel %vm281, %v607, 0
      %v717 = vsel %vm281, %v608, 0
      %v720 = vsel %vm281, %v609, 0
      %v723 = vsel %vm281, %v610, 0
      %v726 = vsel %vm281, %v611, 0
      %v729 = vsel %vm281, %v612, 0
      %v732 = vsel %vm281, %v613, 0
      %v735 = vsel %vm281, %v614, 0
      %v738 = vsel %vm281, %v615, 0
      %v741 = vsel %vm281, %v616, 0
      %v744 = vsel %vm281, %v617, 0
      %v747 = vsel %vm281, %v618, 0
      %v750 = vsel %vm281, %v619, 0
      %v753 = vsel %vm281, %v620, 0
      %v756 = vsel %vm281, %v621, 0
      %v759 = vsel %vm281, %v622, 0
      %v762 = vsel %vm281, %v623, 0
      %v765 = vsel %vm281, %v624, 0
      %v768 = vsel %vm281, %v625, 0
      %v771 = vsel %vm281, %v626, 0
      %v774 = vsel %vm390, %v664, 0
      %776 = vmatpush.msra.mxu0 0.0
      %777 = vmatpush.msra.mxu0 0.0
      %778 = vmatpush.msra.mxu0 0.0
      %779 = vmatpush.msra.mxu0 0.0
      %780 = vmatpush.msra.mxu0 0.0
      %781 = vmatpush.msra.mxu0 0.0
      %782 = vmatpush.msra.mxu0 0.0
      %783 = vmatpush.msra.mxu0 0.0
      %784 = vmatpush.msra.mxu0 0.0
      %785 = vmatpush.msra.mxu0 0.0
      %786 = vmatpush.msra.mxu0 0.0
      %787 = vmatpush.msra.mxu0 0.0
      %788 = vmatpush.msra.mxu0 0.0
      %789 = vmatpush.msra.mxu0 0.0
      %790 = vmatpush.msra.mxu0 0.0
      %791 = vmatpush.msra.mxu0 %v774
      %792 = vmatmul.f32.gmra.mxu0 %v666
      %v793 = vpop.f32.mrf.mxu0
      %v794 = vadd.f32 0.0, %v793
      %795 = vmatmul.f32.gmra.mxu0 %v669
      %v796 = vpop.f32.mrf.mxu0
      %v797 = vadd.f32 0.0, %v796
      %798 = vmatmul.f32.gmra.mxu0 %v672
      %v799 = vpop.f32.mrf.mxu0
      %v800 = vadd.f32 0.0, %v799
      %801 = vmatmul.f32.gmra.mxu0 %v675
      %v802 = vpop.f32.mrf.mxu0
      %v803 = vadd.f32 0.0, %v802
      %804 = vmatmul.f32.gmra.mxu0 %v678
      %v805 = vpop.f32.mrf.mxu0
      %v806 = vadd.f32 0.0, %v805
      %807 = vmatmul.f32.gmra.mxu0 %v681
      %v808 = vpop.f32.mrf.mxu0
      %v809 = vadd.f32 0.0, %v808
      %810 = vmatmul.f32.gmra.mxu0 %v684
      %v811 = vpop.f32.mrf.mxu0
      %v812 = vadd.f32 0.0, %v811
      %813 = vmatmul.f32.gmra.mxu0 %v687
      %v814 = vpop.f32.mrf.mxu0
      %v815 = vadd.f32 0.0, %v814
      %816 = vmatmul.f32.gmra.mxu0 %v690
      %v817 = vpop.f32.mrf.mxu0
      %v818 = vadd.f32 0.0, %v817
      %819 = vmatmul.f32.gmra.mxu0 %v693
      %v820 = vpop.f32.mrf.mxu0
      %v821 = vadd.f32 0.0, %v820
      %822 = vmatmul.f32.gmra.mxu0 %v696
      %v823 = vpop.f32.mrf.mxu0
      %v824 = vadd.f32 0.0, %v823
      %825 = vmatmul.f32.gmra.mxu0 %v699
      %v826 = vpop.f32.mrf.mxu0
      %v827 = vadd.f32 0.0, %v826
      %828 = vmatmul.f32.gmra.mxu0 %v702
      %v829 = vpop.f32.mrf.mxu0
      %v830 = vadd.f32 0.0, %v829
      %831 = vmatmul.f32.gmra.mxu0 %v705
      %v832 = vpop.f32.mrf.mxu0
      %v833 = vadd.f32 0.0, %v832
      %834 = vmatmul.f32.gmra.mxu0 %v708
      %v835 = vpop.f32.mrf.mxu0
      %v836 = vadd.f32 0.0, %v835
      %837 = vmatmul.f32.gmra.mxu0 %v711
      %v838 = vpop.f32.mrf.mxu0
      %v839 = vadd.f32 0.0, %v838
      %840 = vmatmul.f32.gmra.mxu0 %v714
      %v841 = vpop.f32.mrf.mxu0
      %v842 = vadd.f32 0.0, %v841
      %843 = vmatmul.f32.gmra.mxu0 %v717
      %v844 = vpop.f32.mrf.mxu0
      %v845 = vadd.f32 0.0, %v844
      %846 = vmatmul.f32.gmra.mxu0 %v720
      %v847 = vpop.f32.mrf.mxu0
      %v848 = vadd.f32 0.0, %v847
      %849 = vmatmul.f32.gmra.mxu0 %v723
      %v850 = vpop.f32.mrf.mxu0
      %v851 = vadd.f32 0.0, %v850
      %852 = vmatmul.f32.gmra.mxu0 %v726
      %v853 = vpop.f32.mrf.mxu0
      %v854 = vadd.f32 0.0, %v853
      %855 = vmatmul.f32.gmra.mxu0 %v729
      %v856 = vpop.f32.mrf.mxu0
      %v857 = vadd.f32 0.0, %v856
      %858 = vmatmul.f32.gmra.mxu0 %v732
      %v859 = vpop.f32.mrf.mxu0
      %v860 = vadd.f32 0.0, %v859
      %861 = vmatmul.f32.gmra.mxu0 %v735
      %v862 = vpop.f32.mrf.mxu0
      %v863 = vadd.f32 0.0, %v862
      %864 = vmatmul.f32.gmra.mxu0 %v738
      %v865 = vpop.f32.mrf.mxu0
      %v866 = vadd.f32 0.0, %v865
      %867 = vmatmul.f32.gmra.mxu0 %v741
      %v868 = vpop.f32.mrf.mxu0
      %v869 = vadd.f32 0.0, %v868
      %870 = vmatmul.f32.gmra.mxu0 %v744
      %v871 = vpop.f32.mrf.mxu0
      %v872 = vadd.f32 0.0, %v871
      %873 = vmatmul.f32.gmra.mxu0 %v747
      %v874 = vpop.f32.mrf.mxu0
      %v875 = vadd.f32 0.0, %v874
      %876 = vmatmul.f32.gmra.mxu0 %v750
      %v877 = vpop.f32.mrf.mxu0
      %v878 = vadd.f32 0.0, %v877
      %879 = vmatmul.f32.gmra.mxu0 %v753
      %v880 = vpop.f32.mrf.mxu0
      %v881 = vadd.f32 0.0, %v880
      %882 = vmatmul.f32.gmra.mxu0 %v756
      %v883 = vpop.f32.mrf.mxu0
      %v884 = vadd.f32 0.0, %v883
      %885 = vmatmul.f32.gmra.mxu0 %v759
      %v886 = vpop.f32.mrf.mxu0
      %v887 = vadd.f32 0.0, %v886
      %888 = vmatmul.f32.gmra.mxu0 %v762
      %v889 = vpop.f32.mrf.mxu0
      %v890 = vadd.f32 0.0, %v889
      %891 = vmatmul.f32.gmra.mxu0 %v765
      %v892 = vpop.f32.mrf.mxu0
      %v893 = vadd.f32 0.0, %v892
      %894 = vmatmul.f32.gmra.mxu0 %v768
      %v895 = vpop.f32.mrf.mxu0
      %v896 = vadd.f32 0.0, %v895
      %897 = vmatmul.f32.gmra.mxu0 %v771
      %v898 = vpop.f32.mrf.mxu0
      %v899 = vadd.f32 0.0, %v898
      %900 = vdwg.mxu0
      %v901 = vadd.f32 %v627, %v794
      %v902 = vadd.f32 %v628, %v797
      %v903 = vadd.f32 %v629, %v800
      %v904 = vadd.f32 %v630, %v803
      %v905 = vadd.f32 %v631, %v806
      %v906 = vadd.f32 %v632, %v809
      %v907 = vadd.f32 %v633, %v812
      %v908 = vadd.f32 %v634, %v815
      %v909 = vadd.f32 %v635, %v818
      %v910 = vadd.f32 %v636, %v821
      %v911 = vadd.f32 %v637, %v824
      %v912 = vadd.f32 %v638, %v827
      %v913 = vadd.f32 %v639, %v830
      %v914 = vadd.f32 %v640, %v833
      %v915 = vadd.f32 %v641, %v836
      %v916 = vadd.f32 %v642, %v839
      %v917 = vadd.f32 %v643, %v842
      %v918 = vadd.f32 %v644, %v845
      %v919 = vadd.f32 %v645, %v848
      %v920 = vadd.f32 %v646, %v851
      %v921 = vadd.f32 %v647, %v854
      %v922 = vadd.f32 %v648, %v857
      %v923 = vadd.f32 %v649, %v860
      %v924 = vadd.f32 %v650, %v863
      %v925 = vadd.f32 %v651, %v866
      %v926 = vadd.f32 %v652, %v869
      %v927 = vadd.f32 %v653, %v872
      %v928 = vadd.f32 %v654, %v875
      %v929 = vadd.f32 %v655, %v878
      %v930 = vadd.f32 %v656, %v881
      %v931 = vadd.f32 %v657, %v884
      %v932 = vadd.f32 %v658, %v887
      %v933 = vadd.f32 %v659, %v890
      %v934 = vadd.f32 %v660, %v893
      %v935 = vadd.f32 %v661, %v896
      %v936 = vadd.f32 %v662, %v899
      %937 = vst.msk [vmem:[#allocation2] sm:$0xff] %vm171, %v901
      %938 = vst.msk [vmem:[#allocation2 + $0x8] sm:$0xff] %vm171, %v902
      %939 = vst.msk [vmem:[#allocation2 + $0x10] sm:$0xff] %vm171, %v903
      %940 = vst.msk [vmem:[#allocation2 + $0x18] sm:$0xff] %vm171, %v904
      %941 = vst.msk [vmem:[#allocation2 + $0x20] sm:$0xff] %vm171, %v905
      %942 = vst.msk [vmem:[#allocation2 + $0x28] sm:$0xff] %vm171, %v906
      %943 = vst.msk [vmem:[#allocation2 + $0x30] sm:$0xff] %vm171, %v907
      %944 = vst.msk [vmem:[#allocation2 + $0x38] sm:$0xff] %vm171, %v908
      %945 = vst.msk [vmem:[#allocation2 + $0x40] sm:$0xff] %vm171, %v909
      %946 = vst.msk [vmem:[#allocation2 + $0x48] sm:$0xff] %vm171, %v910
      %947 = vst.msk [vmem:[#allocation2 + $0x50] sm:$0xff] %vm171, %v911
      %948 = vst.msk [vmem:[#allocation2 + $0x58] sm:$0xff] %vm171, %v912
      %949 = vst.msk [vmem:[#allocation2 + $0x60] sm:$0xff] %vm171, %v913
      %950 = vst.msk [vmem:[#allocation2 + $0x68] sm:$0xff] %vm171, %v914
      %951 = vst.msk [vmem:[#allocation2 + $0x70] sm:$0xff] %vm171, %v915
      %952 = vst.msk [vmem:[#allocation2 + $0x78] sm:$0xff] %vm171, %v916
      %953 = vst.msk [vmem:[#allocation2 + $0x80] sm:$0xff] %vm171, %v917
      %954 = vst.msk [vmem:[#allocation2 + $0x88] sm:$0xff] %vm171, %v918
      %955 = vst.msk [vmem:[#allocation2 + $0x90] sm:$0xff] %vm171, %v919
      %956 = vst.msk [vmem:[#allocation2 + $0x98] sm:$0xff] %vm171, %v920
      %957 = vst.msk [vmem:[#allocation2 + $0xa0] sm:$0xff] %vm171, %v921
      %958 = vst.msk [vmem:[#allocation2 + $0xa8] sm:$0xff] %vm171, %v922
      %959 = vst.msk [vmem:[#allocation2 + $0xb0] sm:$0xff] %vm171, %v923
      %960 = vst.msk [vmem:[#allocation2 + $0xb8] sm:$0xff] %vm171, %v924
      %961 = vst.msk [vmem:[#allocation2 + $0xc0] sm:$0xff] %vm171, %v925
      %962 = vst.msk [vmem:[#allocation2 + $0xc8] sm:$0xff] %vm171, %v926
      %963 = vst.msk [vmem:[#allocation2 + $0xd0] sm:$0xff] %vm171, %v927
      %964 = vst.msk [vmem:[#allocation2 + $0xd8] sm:$0xff] %vm171, %v928
      %965 = vst.msk [vmem:[#allocation2 + $0xe0] sm:$0xff] %vm171, %v929
      %966 = vst.msk [vmem:[#allocation2 + $0xe8] sm:$0xff] %vm171, %v930
      %967 = vst.msk [vmem:[#allocation2 + $0xf0] sm:$0xff] %vm171, %v931
      %968 = vst.msk [vmem:[#allocation2 + $0xf8] sm:$0xff] %vm171, %v932
      %969 = vst.msk [vmem:[#allocation2 + $0x100] sm:$0xff] %vm171, %v933
      %970 = vst.msk [vmem:[#allocation2 + $0x108] sm:$0xff] %vm171, %v934
      %971 = vst.msk [vmem:[#allocation2 + $0x110] sm:$0xff] %vm171, %v935
      %972 = vst.msk [vmem:[#allocation2 + $0x118] sm:$0xff] %vm171, %v936
      %v973 = vld [vmem:[%s165 + $0x2] sm:$0xff]
      %v974 = vld [vmem:[%s165 + $0xa] sm:$0xff]
      %v975 = vld [vmem:[%s165 + $0x12] sm:$0xff]
      %v976 = vld [vmem:[%s165 + $0x1a] sm:$0xff]
      %v977 = vld [vmem:[%s165 + $0x22] sm:$0xff]
      %v978 = vld [vmem:[%s165 + $0x2a] sm:$0xff]
      %v979 = vld [vmem:[%s165 + $0x32] sm:$0xff]
      %v980 = vld [vmem:[%s165 + $0x3a] sm:$0xff]
      %v981 = vld [vmem:[%s165 + $0x42] sm:$0xff]
      %v982 = vld [vmem:[%s165 + $0x4a] sm:$0xff]
      %v983 = vld [vmem:[%s165 + $0x52] sm:$0xff]
      %v984 = vld [vmem:[%s165 + $0x5a] sm:$0xff]
      %v985 = vld [vmem:[%s165 + $0x62] sm:$0xff]
      %v986 = vld [vmem:[%s165 + $0x6a] sm:$0xff]
      %v987 = vld [vmem:[%s165 + $0x72] sm:$0xff]
      %v988 = vld [vmem:[%s165 + $0x7a] sm:$0xff]
      %v989 = vld [vmem:[%s165 + $0x82] sm:$0xff]
      %v990 = vld [vmem:[%s165 + $0x8a] sm:$0xff]
      %v991 = vld [vmem:[%s165 + $0x92] sm:$0xff]
      %v992 = vld [vmem:[%s165 + $0x9a] sm:$0xff]
      %v993 = vld [vmem:[%s165 + $0xa2] sm:$0xff]
      %v994 = vld [vmem:[%s165 + $0xaa] sm:$0xff]
      %v995 = vld [vmem:[%s165 + $0xb2] sm:$0xff]
      %v996 = vld [vmem:[%s165 + $0xba] sm:$0xff]
      %v997 = vld [vmem:[%s165 + $0xc2] sm:$0xff]
      %v998 = vld [vmem:[%s165 + $0xca] sm:$0xff]
      %v999 = vld [vmem:[%s165 + $0xd2] sm:$0xff]
      %v1000 = vld [vmem:[%s165 + $0xda] sm:$0xff]
      %v1001 = vld [vmem:[%s165 + $0xe2] sm:$0xff]
      %v1002 = vld [vmem:[%s165 + $0xea] sm:$0xff]
      %v1003 = vld [vmem:[%s165 + $0xf2] sm:$0xff]
      %v1004 = vld [vmem:[%s165 + $0xfa] sm:$0xff]
      %v1005 = vld [vmem:[%s165 + $0x102] sm:$0xff]
      %v1006 = vld [vmem:[%s165 + $0x10a] sm:$0xff]
      %v1007 = vld [vmem:[%s165 + $0x112] sm:$0xff]
      %v1008 = vld [vmem:[%s165 + $0x11a] sm:$0xff]
      %v1009 = vld [vmem:[#allocation2] sm:$0xff]
      %v1010 = vld [vmem:[#allocation2 + $0x8] sm:$0xff]
      %v1011 = vld [vmem:[#allocation2 + $0x10] sm:$0xff]
      %v1012 = vld [vmem:[#allocation2 + $0x18] sm:$0xff]
      %v1013 = vld [vmem:[#allocation2 + $0x20] sm:$0xff]
      %v1014 = vld [vmem:[#allocation2 + $0x28] sm:$0xff]
      %v1015 = vld [vmem:[#allocation2 + $0x30] sm:$0xff]
      %v1016 = vld [vmem:[#allocation2 + $0x38] sm:$0xff]
      %v1017 = vld [vmem:[#allocation2 + $0x40] sm:$0xff]
      %v1018 = vld [vmem:[#allocation2 + $0x48] sm:$0xff]
      %v1019 = vld [vmem:[#allocation2 + $0x50] sm:$0xff]
      %v1020 = vld [vmem:[#allocation2 + $0x58] sm:$0xff]
      %v1021 = vld [vmem:[#allocation2 + $0x60] sm:$0xff]
      %v1022 = vld [vmem:[#allocation2 + $0x68] sm:$0xff]
      %v1023 = vld [vmem:[#allocation2 + $0x70] sm:$0xff]
      %v1024 = vld [vmem:[#allocation2 + $0x78] sm:$0xff]
      %v1025 = vld [vmem:[#allocation2 + $0x80] sm:$0xff]
      %v1026 = vld [vmem:[#allocation2 + $0x88] sm:$0xff]
      %v1027 = vld [vmem:[#allocation2 + $0x90] sm:$0xff]
      %v1028 = vld [vmem:[#allocation2 + $0x98] sm:$0xff]
      %v1029 = vld [vmem:[#allocation2 + $0xa0] sm:$0xff]
      %v1030 = vld [vmem:[#allocation2 + $0xa8] sm:$0xff]
      %v1031 = vld [vmem:[#allocation2 + $0xb0] sm:$0xff]
      %v1032 = vld [vmem:[#allocation2 + $0xb8] sm:$0xff]
      %v1033 = vld [vmem:[#allocation2 + $0xc0] sm:$0xff]
      %v1034 = vld [vmem:[#allocation2 + $0xc8] sm:$0xff]
      %v1035 = vld [vmem:[#allocation2 + $0xd0] sm:$0xff]
      %v1036 = vld [vmem:[#allocation2 + $0xd8] sm:$0xff]
      %v1037 = vld [vmem:[#allocation2 + $0xe0] sm:$0xff]
      %v1038 = vld [vmem:[#allocation2 + $0xe8] sm:$0xff]
      %v1039 = vld [vmem:[#allocation2 + $0xf0] sm:$0xff]
      %v1040 = vld [vmem:[#allocation2 + $0xf8] sm:$0xff]
      %v1041 = vld [vmem:[#allocation2 + $0x100] sm:$0xff]
      %v1042 = vld [vmem:[#allocation2 + $0x108] sm:$0xff]
      %v1043 = vld [vmem:[#allocation2 + $0x110] sm:$0xff]
      %v1044 = vld [vmem:[#allocation2 + $0x118] sm:$0xff]
      %s1045 = scalar_lea.vmem %s1, 8
      %v1046 = vld [vmem:[%s1045] sm:$0xf]
      %v1048 = vsel %vm281, %v973, 0
      %v1051 = vsel %vm281, %v974, 0
      %v1054 = vsel %vm281, %v975, 0
      %v1057 = vsel %vm281, %v976, 0
      %v1060 = vsel %vm281, %v977, 0
      %v1063 = vsel %vm281, %v978, 0
      %v1066 = vsel %vm281, %v979, 0
      %v1069 = vsel %vm281, %v980, 0
      %v1072 = vsel %vm281, %v981, 0
      %v1075 = vsel %vm281, %v982, 0
      %v1078 = vsel %vm281, %v983, 0
      %v1081 = vsel %vm281, %v984, 0
      %v1084 = vsel %vm281, %v985, 0
      %v1087 = vsel %vm281, %v986, 0
      %v1090 = vsel %vm281, %v987, 0
      %v1093 = vsel %vm281, %v988, 0
      %v1096 = vsel %vm281, %v989, 0
      %v1099 = vsel %vm281, %v990, 0
      %v1102 = vsel %vm281, %v991, 0
      %v1105 = vsel %vm281, %v992, 0
      %v1108 = vsel %vm281, %v993, 0
      %v1111 = vsel %vm281, %v994, 0
      %v1114 = vsel %vm281, %v995, 0
      %v1117 = vsel %vm281, %v996, 0
      %v1120 = vsel %vm281, %v997, 0
      %v1123 = vsel %vm281, %v998, 0
      %v1126 = vsel %vm281, %v999, 0
      %v1129 = vsel %vm281, %v1000, 0
      %v1132 = vsel %vm281, %v1001, 0
      %v1135 = vsel %vm281, %v1002, 0
      %v1138 = vsel %vm281, %v1003, 0
      %v1141 = vsel %vm281, %v1004, 0
      %v1144 = vsel %vm281, %v1005, 0
      %v1147 = vsel %vm281, %v1006, 0
      %v1150 = vsel %vm281, %v1007, 0
      %v1153 = vsel %vm281, %v1008, 0
      %v1156 = vsel %vm390, %v1046, 0
      %1158 = vmatpush.msra.mxu0 0.0
      %1159 = vmatpush.msra.mxu0 0.0
      %1160 = vmatpush.msra.mxu0 0.0
      %1161 = vmatpush.msra.mxu0 0.0
      %1162 = vmatpush.msra.mxu0 0.0
      %1163 = vmatpush.msra.mxu0 0.0
      %1164 = vmatpush.msra.mxu0 0.0
      %1165 = vmatpush.msra.mxu0 0.0
      %1166 = vmatpush.msra.mxu0 0.0
      %1167 = vmatpush.msra.mxu0 0.0
      %1168 = vmatpush.msra.mxu0 0.0
      %1169 = vmatpush.msra.mxu0 0.0
      %1170 = vmatpush.msra.mxu0 0.0
      %1171 = vmatpush.msra.mxu0 0.0
      %1172 = vmatpush.msra.mxu0 0.0
      %1173 = vmatpush.msra.mxu0 %v1156
      %1174 = vmatmul.f32.gmra.mxu0 %v1048
      %v1175 = vpop.f32.mrf.mxu0
      %v1176 = vadd.f32 0.0, %v1175
      %1177 = vmatmul.f32.gmra.mxu0 %v1051
      %v1178 = vpop.f32.mrf.mxu0
      %v1179 = vadd.f32 0.0, %v1178
      %1180 = vmatmul.f32.gmra.mxu0 %v1054
      %v1181 = vpop.f32.mrf.mxu0
      %v1182 = vadd.f32 0.0, %v1181
      %1183 = vmatmul.f32.gmra.mxu0 %v1057
      %v1184 = vpop.f32.mrf.mxu0
      %v1185 = vadd.f32 0.0, %v1184
      %1186 = vmatmul.f32.gmra.mxu0 %v1060
      %v1187 = vpop.f32.mrf.mxu0
      %v1188 = vadd.f32 0.0, %v1187
      %1189 = vmatmul.f32.gmra.mxu0 %v1063
      %v1190 = vpop.f32.mrf.mxu0
      %v1191 = vadd.f32 0.0, %v1190
      %1192 = vmatmul.f32.gmra.mxu0 %v1066
      %v1193 = vpop.f32.mrf.mxu0
      %v1194 = vadd.f32 0.0, %v1193
      %1195 = vmatmul.f32.gmra.mxu0 %v1069
      %v1196 = vpop.f32.mrf.mxu0
      %v1197 = vadd.f32 0.0, %v1196
      %1198 = vmatmul.f32.gmra.mxu0 %v1072
      %v1199 = vpop.f32.mrf.mxu0
      %v1200 = vadd.f32 0.0, %v1199
      %1201 = vmatmul.f32.gmra.mxu0 %v1075
      %v1202 = vpop.f32.mrf.mxu0
      %v1203 = vadd.f32 0.0, %v1202
      %1204 = vmatmul.f32.gmra.mxu0 %v1078
      %v1205 = vpop.f32.mrf.mxu0
      %v1206 = vadd.f32 0.0, %v1205
      %1207 = vmatmul.f32.gmra.mxu0 %v1081
      %v1208 = vpop.f32.mrf.mxu0
      %v1209 = vadd.f32 0.0, %v1208
      %1210 = vmatmul.f32.gmra.mxu0 %v1084
      %v1211 = vpop.f32.mrf.mxu0
      %v1212 = vadd.f32 0.0, %v1211
      %1213 = vmatmul.f32.gmra.mxu0 %v1087
      %v1214 = vpop.f32.mrf.mxu0
      %v1215 = vadd.f32 0.0, %v1214
      %1216 = vmatmul.f32.gmra.mxu0 %v1090
      %v1217 = vpop.f32.mrf.mxu0
      %v1218 = vadd.f32 0.0, %v1217
      %1219 = vmatmul.f32.gmra.mxu0 %v1093
      %v1220 = vpop.f32.mrf.mxu0
      %v1221 = vadd.f32 0.0, %v1220
      %1222 = vmatmul.f32.gmra.mxu0 %v1096
      %v1223 = vpop.f32.mrf.mxu0
      %v1224 = vadd.f32 0.0, %v1223
      %1225 = vmatmul.f32.gmra.mxu0 %v1099
      %v1226 = vpop.f32.mrf.mxu0
      %v1227 = vadd.f32 0.0, %v1226
      %1228 = vmatmul.f32.gmra.mxu0 %v1102
      %v1229 = vpop.f32.mrf.mxu0
      %v1230 = vadd.f32 0.0, %v1229
      %1231 = vmatmul.f32.gmra.mxu0 %v1105
      %v1232 = vpop.f32.mrf.mxu0
      %v1233 = vadd.f32 0.0, %v1232
      %1234 = vmatmul.f32.gmra.mxu0 %v1108
      %v1235 = vpop.f32.mrf.mxu0
      %v1236 = vadd.f32 0.0, %v1235
      %1237 = vmatmul.f32.gmra.mxu0 %v1111
      %v1238 = vpop.f32.mrf.mxu0
      %v1239 = vadd.f32 0.0, %v1238
      %1240 = vmatmul.f32.gmra.mxu0 %v1114
      %v1241 = vpop.f32.mrf.mxu0
      %v1242 = vadd.f32 0.0, %v1241
      %1243 = vmatmul.f32.gmra.mxu0 %v1117
      %v1244 = vpop.f32.mrf.mxu0
      %v1245 = vadd.f32 0.0, %v1244
      %1246 = vmatmul.f32.gmra.mxu0 %v1120
      %v1247 = vpop.f32.mrf.mxu0
      %v1248 = vadd.f32 0.0, %v1247
      %1249 = vmatmul.f32.gmra.mxu0 %v1123
      %v1250 = vpop.f32.mrf.mxu0
      %v1251 = vadd.f32 0.0, %v1250
      %1252 = vmatmul.f32.gmra.mxu0 %v1126
      %v1253 = vpop.f32.mrf.mxu0
      %v1254 = vadd.f32 0.0, %v1253
      %1255 = vmatmul.f32.gmra.mxu0 %v1129
      %v1256 = vpop.f32.mrf.mxu0
      %v1257 = vadd.f32 0.0, %v1256
      %1258 = vmatmul.f32.gmra.mxu0 %v1132
      %v1259 = vpop.f32.mrf.mxu0
      %v1260 = vadd.f32 0.0, %v1259
      %1261 = vmatmul.f32.gmra.mxu0 %v1135
      %v1262 = vpop.f32.mrf.mxu0
      %v1263 = vadd.f32 0.0, %v1262
      %1264 = vmatmul.f32.gmra.mxu0 %v1138
      %v1265 = vpop.f32.mrf.mxu0
      %v1266 = vadd.f32 0.0, %v1265
      %1267 = vmatmul.f32.gmra.mxu0 %v1141
      %v1268 = vpop.f32.mrf.mxu0
      %v1269 = vadd.f32 0.0, %v1268
      %1270 = vmatmul.f32.gmra.mxu0 %v1144
      %v1271 = vpop.f32.mrf.mxu0
      %v1272 = vadd.f32 0.0, %v1271
      %1273 = vmatmul.f32.gmra.mxu0 %v1147
      %v1274 = vpop.f32.mrf.mxu0
      %v1275 = vadd.f32 0.0, %v1274
      %1276 = vmatmul.f32.gmra.mxu0 %v1150
      %v1277 = vpop.f32.mrf.mxu0
      %v1278 = vadd.f32 0.0, %v1277
      %1279 = vmatmul.f32.gmra.mxu0 %v1153
      %v1280 = vpop.f32.mrf.mxu0
      %v1281 = vadd.f32 0.0, %v1280
      %1282 = vdwg.mxu0
      %v1283 = vadd.f32 %v1009, %v1176
      %v1284 = vadd.f32 %v1010, %v1179
      %v1285 = vadd.f32 %v1011, %v1182
      %v1286 = vadd.f32 %v1012, %v1185
      %v1287 = vadd.f32 %v1013, %v1188
      %v1288 = vadd.f32 %v1014, %v1191
      %v1289 = vadd.f32 %v1015, %v1194
      %v1290 = vadd.f32 %v1016, %v1197
      %v1291 = vadd.f32 %v1017, %v1200
      %v1292 = vadd.f32 %v1018, %v1203
      %v1293 = vadd.f32 %v1019, %v1206
      %v1294 = vadd.f32 %v1020, %v1209
      %v1295 = vadd.f32 %v1021, %v1212
      %v1296 = vadd.f32 %v1022, %v1215
      %v1297 = vadd.f32 %v1023, %v1218
      %v1298 = vadd.f32 %v1024, %v1221
      %v1299 = vadd.f32 %v1025, %v1224
      %v1300 = vadd.f32 %v1026, %v1227
      %v1301 = vadd.f32 %v1027, %v1230
      %v1302 = vadd.f32 %v1028, %v1233
      %v1303 = vadd.f32 %v1029, %v1236
      %v1304 = vadd.f32 %v1030, %v1239
      %v1305 = vadd.f32 %v1031, %v1242
      %v1306 = vadd.f32 %v1032, %v1245
      %v1307 = vadd.f32 %v1033, %v1248
      %v1308 = vadd.f32 %v1034, %v1251
      %v1309 = vadd.f32 %v1035, %v1254
      %v1310 = vadd.f32 %v1036, %v1257
      %v1311 = vadd.f32 %v1037, %v1260
      %v1312 = vadd.f32 %v1038, %v1263
      %v1313 = vadd.f32 %v1039, %v1266
      %v1314 = vadd.f32 %v1040, %v1269
      %v1315 = vadd.f32 %v1041, %v1272
      %v1316 = vadd.f32 %v1042, %v1275
      %v1317 = vadd.f32 %v1043, %v1278
      %v1318 = vadd.f32 %v1044, %v1281
      %1319 = vst.msk [vmem:[#allocation2] sm:$0xff] %vm171, %v1283
      %1320 = vst.msk [vmem:[#allocation2 + $0x8] sm:$0xff] %vm171, %v1284
      %1321 = vst.msk [vmem:[#allocation2 + $0x10] sm:$0xff] %vm171, %v1285
      %1322 = vst.msk [vmem:[#allocation2 + $0x18] sm:$0xff] %vm171, %v1286
      %1323 = vst.msk [vmem:[#allocation2 + $0x20] sm:$0xff] %vm171, %v1287
      %1324 = vst.msk [vmem:[#allocation2 + $0x28] sm:$0xff] %vm171, %v1288
      %1325 = vst.msk [vmem:[#allocation2 + $0x30] sm:$0xff] %vm171, %v1289
      %1326 = vst.msk [vmem:[#allocation2 + $0x38] sm:$0xff] %vm171, %v1290
      %1327 = vst.msk [vmem:[#allocation2 + $0x40] sm:$0xff] %vm171, %v1291
      %1328 = vst.msk [vmem:[#allocation2 + $0x48] sm:$0xff] %vm171, %v1292
      %1329 = vst.msk [vmem:[#allocation2 + $0x50] sm:$0xff] %vm171, %v1293
      %1330 = vst.msk [vmem:[#allocation2 + $0x58] sm:$0xff] %vm171, %v1294
      %1331 = vst.msk [vmem:[#allocation2 + $0x60] sm:$0xff] %vm171, %v1295
      %1332 = vst.msk [vmem:[#allocation2 + $0x68] sm:$0xff] %vm171, %v1296
      %1333 = vst.msk [vmem:[#allocation2 + $0x70] sm:$0xff] %vm171, %v1297
      %1334 = vst.msk [vmem:[#allocation2 + $0x78] sm:$0xff] %vm171, %v1298
      %1335 = vst.msk [vmem:[#allocation2 + $0x80] sm:$0xff] %vm171, %v1299
      %1336 = vst.msk [vmem:[#allocation2 + $0x88] sm:$0xff] %vm171, %v1300
      %1337 = vst.msk [vmem:[#allocation2 + $0x90] sm:$0xff] %vm171, %v1301
      %1338 = vst.msk [vmem:[#allocation2 + $0x98] sm:$0xff] %vm171, %v1302
      %1339 = vst.msk [vmem:[#allocation2 + $0xa0] sm:$0xff] %vm171, %v1303
      %1340 = vst.msk [vmem:[#allocation2 + $0xa8] sm:$0xff] %vm171, %v1304
      %1341 = vst.msk [vmem:[#allocation2 + $0xb0] sm:$0xff] %vm171, %v1305
      %1342 = vst.msk [vmem:[#allocation2 + $0xb8] sm:$0xff] %vm171, %v1306
      %1343 = vst.msk [vmem:[#allocation2 + $0xc0] sm:$0xff] %vm171, %v1307
      %1344 = vst.msk [vmem:[#allocation2 + $0xc8] sm:$0xff] %vm171, %v1308
      %1345 = vst.msk [vmem:[#allocation2 + $0xd0] sm:$0xff] %vm171, %v1309
      %1346 = vst.msk [vmem:[#allocation2 + $0xd8] sm:$0xff] %vm171, %v1310
      %1347 = vst.msk [vmem:[#allocation2 + $0xe0] sm:$0xff] %vm171, %v1311
      %1348 = vst.msk [vmem:[#allocation2 + $0xe8] sm:$0xff] %vm171, %v1312
      %1349 = vst.msk [vmem:[#allocation2 + $0xf0] sm:$0xff] %vm171, %v1313
      %1350 = vst.msk [vmem:[#allocation2 + $0xf8] sm:$0xff] %vm171, %v1314
      %1351 = vst.msk [vmem:[#allocation2 + $0x100] sm:$0xff] %vm171, %v1315
      %1352 = vst.msk [vmem:[#allocation2 + $0x108] sm:$0xff] %vm171, %v1316
      %1353 = vst.msk [vmem:[#allocation2 + $0x110] sm:$0xff] %vm171, %v1317
      %1354 = vst.msk [vmem:[#allocation2 + $0x118] sm:$0xff] %vm171, %v1318
      %v1355 = vld [vmem:[%s165 + $0x12] sm:$0xff]
      %v1356 = vld [vmem:[%s165 + $0x1a] sm:$0xff]
      %v1357 = vld [vmem:[%s165 + $0x22] sm:$0xff]
      %v1358 = vld [vmem:[%s165 + $0x2a] sm:$0xff]
      %v1359 = vld [vmem:[%s165 + $0x32] sm:$0xff]
      %v1360 = vld [vmem:[%s165 + $0x3a] sm:$0xff]
      %v1361 = vld [vmem:[%s165 + $0x42] sm:$0xff]
      %v1362 = vld [vmem:[%s165 + $0x4a] sm:$0xff]
      %v1363 = vld [vmem:[%s165 + $0x52] sm:$0xff]
      %v1364 = vld [vmem:[%s165 + $0x5a] sm:$0xff]
      %v1365 = vld [vmem:[%s165 + $0x62] sm:$0xff]
      %v1366 = vld [vmem:[%s165 + $0x6a] sm:$0xff]
      %v1367 = vld [vmem:[%s165 + $0x72] sm:$0xff]
      %v1368 = vld [vmem:[%s165 + $0x7a] sm:$0xff]
      %v1369 = vld [vmem:[%s165 + $0x82] sm:$0xff]
      %v1370 = vld [vmem:[%s165 + $0x8a] sm:$0xff]
      %v1371 = vld [vmem:[%s165 + $0x92] sm:$0xff]
      %v1372 = vld [vmem:[%s165 + $0x9a] sm:$0xff]
      %v1373 = vld [vmem:[%s165 + $0xa2] sm:$0xff]
      %v1374 = vld [vmem:[%s165 + $0xaa] sm:$0xff]
      %v1375 = vld [vmem:[%s165 + $0xb2] sm:$0xff]
      %v1376 = vld [vmem:[%s165 + $0xba] sm:$0xff]
      %v1377 = vld [vmem:[%s165 + $0xc2] sm:$0xff]
      %v1378 = vld [vmem:[%s165 + $0xca] sm:$0xff]
      %v1379 = vld [vmem:[%s165 + $0xd2] sm:$0xff]
      %v1380 = vld [vmem:[%s165 + $0xda] sm:$0xff]
      %v1381 = vld [vmem:[%s165 + $0xe2] sm:$0xff]
      %v1382 = vld [vmem:[%s165 + $0xea] sm:$0xff]
      %v1383 = vld [vmem:[%s165 + $0xf2] sm:$0xff]
      %v1384 = vld [vmem:[%s165 + $0xfa] sm:$0xff]
      %v1385 = vld [vmem:[%s165 + $0x102] sm:$0xff]
      %v1386 = vld [vmem:[%s165 + $0x10a] sm:$0xff]
      %v1387 = vld [vmem:[%s165 + $0x112] sm:$0xff]
      %v1388 = vld [vmem:[%s165 + $0x11a] sm:$0xff]
      %v1389 = vld [vmem:[%s165 + $0x122] sm:$0xff]
      %v1390 = vld [vmem:[%s165 + $0x12a] sm:$0xff]
      %v1391 = vld [vmem:[#allocation2] sm:$0xff]
      %v1392 = vld [vmem:[#allocation2 + $0x8] sm:$0xff]
      %v1393 = vld [vmem:[#allocation2 + $0x10] sm:$0xff]
      %v1394 = vld [vmem:[#allocation2 + $0x18] sm:$0xff]
      %v1395 = vld [vmem:[#allocation2 + $0x20] sm:$0xff]
      %v1396 = vld [vmem:[#allocation2 + $0x28] sm:$0xff]
      %v1397 = vld [vmem:[#allocation2 + $0x30] sm:$0xff]
      %v1398 = vld [vmem:[#allocation2 + $0x38] sm:$0xff]
      %v1399 = vld [vmem:[#allocation2 + $0x40] sm:$0xff]
      %v1400 = vld [vmem:[#allocation2 + $0x48] sm:$0xff]
      %v1401 = vld [vmem:[#allocation2 + $0x50] sm:$0xff]
      %v1402 = vld [vmem:[#allocation2 + $0x58] sm:$0xff]
      %v1403 = vld [vmem:[#allocation2 + $0x60] sm:$0xff]
      %v1404 = vld [vmem:[#allocation2 + $0x68] sm:$0xff]
      %v1405 = vld [vmem:[#allocation2 + $0x70] sm:$0xff]
      %v1406 = vld [vmem:[#allocation2 + $0x78] sm:$0xff]
      %v1407 = vld [vmem:[#allocation2 + $0x80] sm:$0xff]
      %v1408 = vld [vmem:[#allocation2 + $0x88] sm:$0xff]
      %v1409 = vld [vmem:[#allocation2 + $0x90] sm:$0xff]
      %v1410 = vld [vmem:[#allocation2 + $0x98] sm:$0xff]
      %v1411 = vld [vmem:[#allocation2 + $0xa0] sm:$0xff]
      %v1412 = vld [vmem:[#allocation2 + $0xa8] sm:$0xff]
      %v1413 = vld [vmem:[#allocation2 + $0xb0] sm:$0xff]
      %v1414 = vld [vmem:[#allocation2 + $0xb8] sm:$0xff]
      %v1415 = vld [vmem:[#allocation2 + $0xc0] sm:$0xff]
      %v1416 = vld [vmem:[#allocation2 + $0xc8] sm:$0xff]
      %v1417 = vld [vmem:[#allocation2 + $0xd0] sm:$0xff]
      %v1418 = vld [vmem:[#allocation2 + $0xd8] sm:$0xff]
      %v1419 = vld [vmem:[#allocation2 + $0xe0] sm:$0xff]
      %v1420 = vld [vmem:[#allocation2 + $0xe8] sm:$0xff]
      %v1421 = vld [vmem:[#allocation2 + $0xf0] sm:$0xff]
      %v1422 = vld [vmem:[#allocation2 + $0xf8] sm:$0xff]
      %v1423 = vld [vmem:[#allocation2 + $0x100] sm:$0xff]
      %v1424 = vld [vmem:[#allocation2 + $0x108] sm:$0xff]
      %v1425 = vld [vmem:[#allocation2 + $0x110] sm:$0xff]
      %v1426 = vld [vmem:[#allocation2 + $0x118] sm:$0xff]
      %s1427 = scalar_lea.vmem %s1, 12
      %v1428 = vld [vmem:[%s1427] sm:$0xf]
      %v1430 = vsel %vm281, %v1355, 0
      %v1433 = vsel %vm281, %v1356, 0
      %v1436 = vsel %vm281, %v1357, 0
      %v1439 = vsel %vm281, %v1358, 0
      %v1442 = vsel %vm281, %v1359, 0
      %v1445 = vsel %vm281, %v1360, 0
      %v1448 = vsel %vm281, %v1361, 0
      %v1451 = vsel %vm281, %v1362, 0
      %v1454 = vsel %vm281, %v1363, 0
      %v1457 = vsel %vm281, %v1364, 0
      %v1460 = vsel %vm281, %v1365, 0
      %v1463 = vsel %vm281, %v1366, 0
      %v1466 = vsel %vm281, %v1367, 0
      %v1469 = vsel %vm281, %v1368, 0
      %v1472 = vsel %vm281, %v1369, 0
      %v1475 = vsel %vm281, %v1370, 0
      %v1478 = vsel %vm281, %v1371, 0
      %v1481 = vsel %vm281, %v1372, 0
      %v1484 = vsel %vm281, %v1373, 0
      %v1487 = vsel %vm281, %v1374, 0
      %v1490 = vsel %vm281, %v1375, 0
      %v1493 = vsel %vm281, %v1376, 0
      %v1496 = vsel %vm281, %v1377, 0
      %v1499 = vsel %vm281, %v1378, 0
      %v1502 = vsel %vm281, %v1379, 0
      %v1505 = vsel %vm281, %v1380, 0
      %v1508 = vsel %vm281, %v1381, 0
      %v1511 = vsel %vm281, %v1382, 0
      %v1514 = vsel %vm281, %v1383, 0
      %v1517 = vsel %vm281, %v1384, 0
      %v1520 = vsel %vm281, %v1385, 0
      %v1523 = vsel %vm281, %v1386, 0
      %v1526 = vsel %vm281, %v1387, 0
      %v1529 = vsel %vm281, %v1388, 0
      %v1532 = vsel %vm281, %v1389, 0
      %v1535 = vsel %vm281, %v1390, 0
      %v1538 = vsel %vm390, %v1428, 0
      %1540 = vmatpush.msra.mxu0 0.0
      %1541 = vmatpush.msra.mxu0 0.0
      %1542 = vmatpush.msra.mxu0 0.0
      %1543 = vmatpush.msra.mxu0 0.0
      %1544 = vmatpush.msra.mxu0 0.0
      %1545 = vmatpush.msra.mxu0 0.0
      %1546 = vmatpush.msra.mxu0 0.0
      %1547 = vmatpush.msra.mxu0 0.0
      %1548 = vmatpush.msra.mxu0 0.0
      %1549 = vmatpush.msra.mxu0 0.0
      %1550 = vmatpush.msra.mxu0 0.0
      %1551 = vmatpush.msra.mxu0 0.0
      %1552 = vmatpush.msra.mxu0 0.0
      %1553 = vmatpush.msra.mxu0 0.0
      %1554 = vmatpush.msra.mxu0 0.0
      %1555 = vmatpush.msra.mxu0 %v1538
      %1556 = vmatmul.f32.gmra.mxu0 %v1430
      %v1557 = vpop.f32.mrf.mxu0
      %v1558 = vadd.f32 0.0, %v1557
      %1559 = vmatmul.f32.gmra.mxu0 %v1433
      %v1560 = vpop.f32.mrf.mxu0
      %v1561 = vadd.f32 0.0, %v1560
      %1562 = vmatmul.f32.gmra.mxu0 %v1436
      %v1563 = vpop.f32.mrf.mxu0
      %v1564 = vadd.f32 0.0, %v1563
      %1565 = vmatmul.f32.gmra.mxu0 %v1439
      %v1566 = vpop.f32.mrf.mxu0
      %v1567 = vadd.f32 0.0, %v1566
      %1568 = vmatmul.f32.gmra.mxu0 %v1442
      %v1569 = vpop.f32.mrf.mxu0
      %v1570 = vadd.f32 0.0, %v1569
      %1571 = vmatmul.f32.gmra.mxu0 %v1445
      %v1572 = vpop.f32.mrf.mxu0
      %v1573 = vadd.f32 0.0, %v1572
      %1574 = vmatmul.f32.gmra.mxu0 %v1448
      %v1575 = vpop.f32.mrf.mxu0
      %v1576 = vadd.f32 0.0, %v1575
      %1577 = vmatmul.f32.gmra.mxu0 %v1451
      %v1578 = vpop.f32.mrf.mxu0
      %v1579 = vadd.f32 0.0, %v1578
      %1580 = vmatmul.f32.gmra.mxu0 %v1454
      %v1581 = vpop.f32.mrf.mxu0
      %v1582 = vadd.f32 0.0, %v1581
      %1583 = vmatmul.f32.gmra.mxu0 %v1457
      %v1584 = vpop.f32.mrf.mxu0
      %v1585 = vadd.f32 0.0, %v1584
      %1586 = vmatmul.f32.gmra.mxu0 %v1460
      %v1587 = vpop.f32.mrf.mxu0
      %v1588 = vadd.f32 0.0, %v1587
      %1589 = vmatmul.f32.gmra.mxu0 %v1463
      %v1590 = vpop.f32.mrf.mxu0
      %v1591 = vadd.f32 0.0, %v1590
      %1592 = vmatmul.f32.gmra.mxu0 %v1466
      %v1593 = vpop.f32.mrf.mxu0
      %v1594 = vadd.f32 0.0, %v1593
      %1595 = vmatmul.f32.gmra.mxu0 %v1469
      %v1596 = vpop.f32.mrf.mxu0
      %v1597 = vadd.f32 0.0, %v1596
      %1598 = vmatmul.f32.gmra.mxu0 %v1472
      %v1599 = vpop.f32.mrf.mxu0
      %v1600 = vadd.f32 0.0, %v1599
      %1601 = vmatmul.f32.gmra.mxu0 %v1475
      %v1602 = vpop.f32.mrf.mxu0
      %v1603 = vadd.f32 0.0, %v1602
      %1604 = vmatmul.f32.gmra.mxu0 %v1478
      %v1605 = vpop.f32.mrf.mxu0
      %v1606 = vadd.f32 0.0, %v1605
      %1607 = vmatmul.f32.gmra.mxu0 %v1481
      %v1608 = vpop.f32.mrf.mxu0
      %v1609 = vadd.f32 0.0, %v1608
      %1610 = vmatmul.f32.gmra.mxu0 %v1484
      %v1611 = vpop.f32.mrf.mxu0
      %v1612 = vadd.f32 0.0, %v1611
      %1613 = vmatmul.f32.gmra.mxu0 %v1487
      %v1614 = vpop.f32.mrf.mxu0
      %v1615 = vadd.f32 0.0, %v1614
      %1616 = vmatmul.f32.gmra.mxu0 %v1490
      %v1617 = vpop.f32.mrf.mxu0
      %v1618 = vadd.f32 0.0, %v1617
      %1619 = vmatmul.f32.gmra.mxu0 %v1493
      %v1620 = vpop.f32.mrf.mxu0
      %v1621 = vadd.f32 0.0, %v1620
      %1622 = vmatmul.f32.gmra.mxu0 %v1496
      %v1623 = vpop.f32.mrf.mxu0
      %v1624 = vadd.f32 0.0, %v1623
      %1625 = vmatmul.f32.gmra.mxu0 %v1499
      %v1626 = vpop.f32.mrf.mxu0
      %v1627 = vadd.f32 0.0, %v1626
      %1628 = vmatmul.f32.gmra.mxu0 %v1502
      %v1629 = vpop.f32.mrf.mxu0
      %v1630 = vadd.f32 0.0, %v1629
      %1631 = vmatmul.f32.gmra.mxu0 %v1505
      %v1632 = vpop.f32.mrf.mxu0
      %v1633 = vadd.f32 0.0, %v1632
      %1634 = vmatmul.f32.gmra.mxu0 %v1508
      %v1635 = vpop.f32.mrf.mxu0
      %v1636 = vadd.f32 0.0, %v1635
      %1637 = vmatmul.f32.gmra.mxu0 %v1511
      %v1638 = vpop.f32.mrf.mxu0
      %v1639 = vadd.f32 0.0, %v1638
      %1640 = vmatmul.f32.gmra.mxu0 %v1514
      %v1641 = vpop.f32.mrf.mxu0
      %v1642 = vadd.f32 0.0, %v1641
      %1643 = vmatmul.f32.gmra.mxu0 %v1517
      %v1644 = vpop.f32.mrf.mxu0
      %v1645 = vadd.f32 0.0, %v1644
      %1646 = vmatmul.f32.gmra.mxu0 %v1520
      %v1647 = vpop.f32.mrf.mxu0
      %v1648 = vadd.f32 0.0, %v1647
      %1649 = vmatmul.f32.gmra.mxu0 %v1523
      %v1650 = vpop.f32.mrf.mxu0
      %v1651 = vadd.f32 0.0, %v1650
      %1652 = vmatmul.f32.gmra.mxu0 %v1526
      %v1653 = vpop.f32.mrf.mxu0
      %v1654 = vadd.f32 0.0, %v1653
      %1655 = vmatmul.f32.gmra.mxu0 %v1529
      %v1656 = vpop.f32.mrf.mxu0
      %v1657 = vadd.f32 0.0, %v1656
      %1658 = vmatmul.f32.gmra.mxu0 %v1532
      %v1659 = vpop.f32.mrf.mxu0
      %v1660 = vadd.f32 0.0, %v1659
      %1661 = vmatmul.f32.gmra.mxu0 %v1535
      %v1662 = vpop.f32.mrf.mxu0
      %v1663 = vadd.f32 0.0, %v1662
      %1664 = vdwg.mxu0
      %v1665 = vadd.f32 %v1391, %v1558
      %v1666 = vadd.f32 %v1392, %v1561
      %v1667 = vadd.f32 %v1393, %v1564
      %v1668 = vadd.f32 %v1394, %v1567
      %v1669 = vadd.f32 %v1395, %v1570
      %v1670 = vadd.f32 %v1396, %v1573
      %v1671 = vadd.f32 %v1397, %v1576
      %v1672 = vadd.f32 %v1398, %v1579
      %v1673 = vadd.f32 %v1399, %v1582
      %v1674 = vadd.f32 %v1400, %v1585
      %v1675 = vadd.f32 %v1401, %v1588
      %v1676 = vadd.f32 %v1402, %v1591
      %v1677 = vadd.f32 %v1403, %v1594
      %v1678 = vadd.f32 %v1404, %v1597
      %v1679 = vadd.f32 %v1405, %v1600
      %v1680 = vadd.f32 %v1406, %v1603
      %v1681 = vadd.f32 %v1407, %v1606
      %v1682 = vadd.f32 %v1408, %v1609
      %v1683 = vadd.f32 %v1409, %v1612
      %v1684 = vadd.f32 %v1410, %v1615
      %v1685 = vadd.f32 %v1411, %v1618
      %v1686 = vadd.f32 %v1412, %v1621
      %v1687 = vadd.f32 %v1413, %v1624
      %v1688 = vadd.f32 %v1414, %v1627
      %v1689 = vadd.f32 %v1415, %v1630
      %v1690 = vadd.f32 %v1416, %v1633
      %v1691 = vadd.f32 %v1417, %v1636
      %v1692 = vadd.f32 %v1418, %v1639
      %v1693 = vadd.f32 %v1419, %v1642
      %v1694 = vadd.f32 %v1420, %v1645
      %v1695 = vadd.f32 %v1421, %v1648
      %v1696 = vadd.f32 %v1422, %v1651
      %v1697 = vadd.f32 %v1423, %v1654
      %v1698 = vadd.f32 %v1424, %v1657
      %v1699 = vadd.f32 %v1425, %v1660
      %v1700 = vadd.f32 %v1426, %v1663
      %1701 = vst.msk [vmem:[#allocation2] sm:$0xff] %vm171, %v1665
      %1702 = vst.msk [vmem:[#allocation2 + $0x8] sm:$0xff] %vm171, %v1666
      %1703 = vst.msk [vmem:[#allocation2 + $0x10] sm:$0xff] %vm171, %v1667
      %1704 = vst.msk [vmem:[#allocation2 + $0x18] sm:$0xff] %vm171, %v1668
      %1705 = vst.msk [vmem:[#allocation2 + $0x20] sm:$0xff] %vm171, %v1669
      %1706 = vst.msk [vmem:[#allocation2 + $0x28] sm:$0xff] %vm171, %v1670
      %1707 = vst.msk [vmem:[#allocation2 + $0x30] sm:$0xff] %vm171, %v1671
      %1708 = vst.msk [vmem:[#allocation2 + $0x38] sm:$0xff] %vm171, %v1672
      %1709 = vst.msk [vmem:[#allocation2 + $0x40] sm:$0xff] %vm171, %v1673
      %1710 = vst.msk [vmem:[#allocation2 + $0x48] sm:$0xff] %vm171, %v1674
      %1711 = vst.msk [vmem:[#allocation2 + $0x50] sm:$0xff] %vm171, %v1675
      %1712 = vst.msk [vmem:[#allocation2 + $0x58] sm:$0xff] %vm171, %v1676
      %1713 = vst.msk [vmem:[#allocation2 + $0x60] sm:$0xff] %vm171, %v1677
      %1714 = vst.msk [vmem:[#allocation2 + $0x68] sm:$0xff] %vm171, %v1678
      %1715 = vst.msk [vmem:[#allocation2 + $0x70] sm:$0xff] %vm171, %v1679
      %1716 = vst.msk [vmem:[#allocation2 + $0x78] sm:$0xff] %vm171, %v1680
      %1717 = vst.msk [vmem:[#allocation2 + $0x80] sm:$0xff] %vm171, %v1681
      %1718 = vst.msk [vmem:[#allocation2 + $0x88] sm:$0xff] %vm171, %v1682
      %1719 = vst.msk [vmem:[#allocation2 + $0x90] sm:$0xff] %vm171, %v1683
      %1720 = vst.msk [vmem:[#allocation2 + $0x98] sm:$0xff] %vm171, %v1684
      %1721 = vst.msk [vmem:[#allocation2 + $0xa0] sm:$0xff] %vm171, %v1685
      %1722 = vst.msk [vmem:[#allocation2 + $0xa8] sm:$0xff] %vm171, %v1686
      %1723 = vst.msk [vmem:[#allocation2 + $0xb0] sm:$0xff] %vm171, %v1687
      %1724 = vst.msk [vmem:[#allocation2 + $0xb8] sm:$0xff] %vm171, %v1688
      %1725 = vst.msk [vmem:[#allocation2 + $0xc0] sm:$0xff] %vm171, %v1689
      %1726 = vst.msk [vmem:[#allocation2 + $0xc8] sm:$0xff] %vm171, %v1690
      %1727 = vst.msk [vmem:[#allocation2 + $0xd0] sm:$0xff] %vm171, %v1691
      %1728 = vst.msk [vmem:[#allocation2 + $0xd8] sm:$0xff] %vm171, %v1692
      %1729 = vst.msk [vmem:[#allocation2 + $0xe0] sm:$0xff] %vm171, %v1693
      %1730 = vst.msk [vmem:[#allocation2 + $0xe8] sm:$0xff] %vm171, %v1694
      %1731 = vst.msk [vmem:[#allocation2 + $0xf0] sm:$0xff] %vm171, %v1695
      %1732 = vst.msk [vmem:[#allocation2 + $0xf8] sm:$0xff] %vm171, %v1696
      %1733 = vst.msk [vmem:[#allocation2 + $0x100] sm:$0xff] %vm171, %v1697
      %1734 = vst.msk [vmem:[#allocation2 + $0x108] sm:$0xff] %vm171, %v1698
      %1735 = vst.msk [vmem:[#allocation2 + $0x110] sm:$0xff] %vm171, %v1699
      %1736 = vst.msk [vmem:[#allocation2 + $0x118] sm:$0xff] %vm171, %v1700
      %v1737 = vld [vmem:[%s165 + $0x13] sm:$0xff]
      %v1738 = vld [vmem:[%s165 + $0x1b] sm:$0xff]
      %v1739 = vld [vmem:[%s165 + $0x23] sm:$0xff]
      %v1740 = vld [vmem:[%s165 + $0x2b] sm:$0xff]
      %v1741 = vld [vmem:[%s165 + $0x33] sm:$0xff]
      %v1742 = vld [vmem:[%s165 + $0x3b] sm:$0xff]
      %v1743 = vld [vmem:[%s165 + $0x43] sm:$0xff]
      %v1744 = vld [vmem:[%s165 + $0x4b] sm:$0xff]
      %v1745 = vld [vmem:[%s165 + $0x53] sm:$0xff]
      %v1746 = vld [vmem:[%s165 + $0x5b] sm:$0xff]
      %v1747 = vld [vmem:[%s165 + $0x63] sm:$0xff]
      %v1748 = vld [vmem:[%s165 + $0x6b] sm:$0xff]
      %v1749 = vld [vmem:[%s165 + $0x73] sm:$0xff]
      %v1750 = vld [vmem:[%s165 + $0x7b] sm:$0xff]
      %v1751 = vld [vmem:[%s165 + $0x83] sm:$0xff]
      %v1752 = vld [vmem:[%s165 + $0x8b] sm:$0xff]
      %v1753 = vld [vmem:[%s165 + $0x93] sm:$0xff]
      %v1754 = vld [vmem:[%s165 + $0x9b] sm:$0xff]
      %v1755 = vld [vmem:[%s165 + $0xa3] sm:$0xff]
      %v1756 = vld [vmem:[%s165 + $0xab] sm:$0xff]
      %v1757 = vld [vmem:[%s165 + $0xb3] sm:$0xff]
      %v1758 = vld [vmem:[%s165 + $0xbb] sm:$0xff]
      %v1759 = vld [vmem:[%s165 + $0xc3] sm:$0xff]
      %v1760 = vld [vmem:[%s165 + $0xcb] sm:$0xff]
      %v1761 = vld [vmem:[%s165 + $0xd3] sm:$0xff]
      %v1762 = vld [vmem:[%s165 + $0xdb] sm:$0xff]
      %v1763 = vld [vmem:[%s165 + $0xe3] sm:$0xff]
      %v1764 = vld [vmem:[%s165 + $0xeb] sm:$0xff]
      %v1765 = vld [vmem:[%s165 + $0xf3] sm:$0xff]
      %v1766 = vld [vmem:[%s165 + $0xfb] sm:$0xff]
      %v1767 = vld [vmem:[%s165 + $0x103] sm:$0xff]
      %v1768 = vld [vmem:[%s165 + $0x10b] sm:$0xff]
      %v1769 = vld [vmem:[%s165 + $0x113] sm:$0xff]
      %v1770 = vld [vmem:[%s165 + $0x11b] sm:$0xff]
      %v1771 = vld [vmem:[%s165 + $0x123] sm:$0xff]
      %v1772 = vld [vmem:[%s165 + $0x12b] sm:$0xff]
      %v1773 = vld [vmem:[#allocation2] sm:$0xff]
      %v1774 = vld [vmem:[#allocation2 + $0x8] sm:$0xff]
      %v1775 = vld [vmem:[#allocation2 + $0x10] sm:$0xff]
      %v1776 = vld [vmem:[#allocation2 + $0x18] sm:$0xff]
      %v1777 = vld [vmem:[#allocation2 + $0x20] sm:$0xff]
      %v1778 = vld [vmem:[#allocation2 + $0x28] sm:$0xff]
      %v1779 = vld [vmem:[#allocation2 + $0x30] sm:$0xff]
      %v1780 = vld [vmem:[#allocation2 + $0x38] sm:$0xff]
      %v1781 = vld [vmem:[#allocation2 + $0x40] sm:$0xff]
      %v1782 = vld [vmem:[#allocation2 + $0x48] sm:$0xff]
      %v1783 = vld [vmem:[#allocation2 + $0x50] sm:$0xff]
      %v1784 = vld [vmem:[#allocation2 + $0x58] sm:$0xff]
      %v1785 = vld [vmem:[#allocation2 + $0x60] sm:$0xff]
      %v1786 = vld [vmem:[#allocation2 + $0x68] sm:$0xff]
      %v1787 = vld [vmem:[#allocation2 + $0x70] sm:$0xff]
      %v1788 = vld [vmem:[#allocation2 + $0x78] sm:$0xff]
      %v1789 = vld [vmem:[#allocation2 + $0x80] sm:$0xff]
      %v1790 = vld [vmem:[#allocation2 + $0x88] sm:$0xff]
      %v1791 = vld [vmem:[#allocation2 + $0x90] sm:$0xff]
      %v1792 = vld [vmem:[#allocation2 + $0x98] sm:$0xff]
      %v1793 = vld [vmem:[#allocation2 + $0xa0] sm:$0xff]
      %v1794 = vld [vmem:[#allocation2 + $0xa8] sm:$0xff]
      %v1795 = vld [vmem:[#allocation2 + $0xb0] sm:$0xff]
      %v1796 = vld [vmem:[#allocation2 + $0xb8] sm:$0xff]
      %v1797 = vld [vmem:[#allocation2 + $0xc0] sm:$0xff]
      %v1798 = vld [vmem:[#allocation2 + $0xc8] sm:$0xff]
      %v1799 = vld [vmem:[#allocation2 + $0xd0] sm:$0xff]
      %v1800 = vld [vmem:[#allocation2 + $0xd8] sm:$0xff]
      %v1801 = vld [vmem:[#allocation2 + $0xe0] sm:$0xff]
      %v1802 = vld [vmem:[#allocation2 + $0xe8] sm:$0xff]
      %v1803 = vld [vmem:[#allocation2 + $0xf0] sm:$0xff]
      %v1804 = vld [vmem:[#allocation2 + $0xf8] sm:$0xff]
      %v1805 = vld [vmem:[#allocation2 + $0x100] sm:$0xff]
      %v1806 = vld [vmem:[#allocation2 + $0x108] sm:$0xff]
      %v1807 = vld [vmem:[#allocation2 + $0x110] sm:$0xff]
      %v1808 = vld [vmem:[#allocation2 + $0x118] sm:$0xff]
      %s1809 = scalar_lea.vmem %s1, 16
      %v1810 = vld [vmem:[%s1809] sm:$0xf]
      %v1812 = vsel %vm281, %v1737, 0
      %v1815 = vsel %vm281, %v1738, 0
      %v1818 = vsel %vm281, %v1739, 0
      %v1821 = vsel %vm281, %v1740, 0
      %v1824 = vsel %vm281, %v1741, 0
      %v1827 = vsel %vm281, %v1742, 0
      %v1830 = vsel %vm281, %v1743, 0
      %v1833 = vsel %vm281, %v1744, 0
      %v1836 = vsel %vm281, %v1745, 0
      %v1839 = vsel %vm281, %v1746, 0
      %v1842 = vsel %vm281, %v1747, 0
      %v1845 = vsel %vm281, %v1748, 0
      %v1848 = vsel %vm281, %v1749, 0
      %v1851 = vsel %vm281, %v1750, 0
      %v1854 = vsel %vm281, %v1751, 0
      %v1857 = vsel %vm281, %v1752, 0
      %v1860 = vsel %vm281, %v1753, 0
      %v1863 = vsel %vm281, %v1754, 0
      %v1866 = vsel %vm281, %v1755, 0
      %v1869 = vsel %vm281, %v1756, 0
      %v1872 = vsel %vm281, %v1757, 0
      %v1875 = vsel %vm281, %v1758, 0
      %v1878 = vsel %vm281, %v1759, 0
      %v1881 = vsel %vm281, %v1760, 0
      %v1884 = vsel %vm281, %v1761, 0
      %v1887 = vsel %vm281, %v1762, 0
      %v1890 = vsel %vm281, %v1763, 0
      %v1893 = vsel %vm281, %v1764, 0
      %v1896 = vsel %vm281, %v1765, 0
      %v1899 = vsel %vm281, %v1766, 0
      %v1902 = vsel %vm281, %v1767, 0
      %v1905 = vsel %vm281, %v1768, 0
      %v1908 = vsel %vm281, %v1769, 0
      %v1911 = vsel %vm281, %v1770, 0
      %v1914 = vsel %vm281, %v1771, 0
      %v1917 = vsel %vm281, %v1772, 0
      %v1920 = vsel %vm390, %v1810, 0
      %1922 = vmatpush.msra.mxu0 0.0
      %1923 = vmatpush.msra.mxu0 0.0
      %1924 = vmatpush.msra.mxu0 0.0
      %1925 = vmatpush.msra.mxu0 0.0
      %1926 = vmatpush.msra.mxu0 0.0
      %1927 = vmatpush.msra.mxu0 0.0
      %1928 = vmatpush.msra.mxu0 0.0
      %1929 = vmatpush.msra.mxu0 0.0
      %1930 = vmatpush.msra.mxu0 0.0
      %1931 = vmatpush.msra.mxu0 0.0
      %1932 = vmatpush.msra.mxu0 0.0
      %1933 = vmatpush.msra.mxu0 0.0
      %1934 = vmatpush.msra.mxu0 0.0
      %1935 = vmatpush.msra.mxu0 0.0
      %1936 = vmatpush.msra.mxu0 0.0
      %1937 = vmatpush.msra.mxu0 %v1920
      %1938 = vmatmul.f32.gmra.mxu0 %v1812
      %v1939 = vpop.f32.mrf.mxu0
      %v1940 = vadd.f32 0.0, %v1939
      %1941 = vmatmul.f32.gmra.mxu0 %v1815
      %v1942 = vpop.f32.mrf.mxu0
      %v1943 = vadd.f32 0.0, %v1942
      %1944 = vmatmul.f32.gmra.mxu0 %v1818
      %v1945 = vpop.f32.mrf.mxu0
      %v1946 = vadd.f32 0.0, %v1945
      %1947 = vmatmul.f32.gmra.mxu0 %v1821
      %v1948 = vpop.f32.mrf.mxu0
      %v1949 = vadd.f32 0.0, %v1948
      %1950 = vmatmul.f32.gmra.mxu0 %v1824
      %v1951 = vpop.f32.mrf.mxu0
      %v1952 = vadd.f32 0.0, %v1951
      %1953 = vmatmul.f32.gmra.mxu0 %v1827
      %v1954 = vpop.f32.mrf.mxu0
      %v1955 = vadd.f32 0.0, %v1954
      %1956 = vmatmul.f32.gmra.mxu0 %v1830
      %v1957 = vpop.f32.mrf.mxu0
      %v1958 = vadd.f32 0.0, %v1957
      %1959 = vmatmul.f32.gmra.mxu0 %v1833
      %v1960 = vpop.f32.mrf.mxu0
      %v1961 = vadd.f32 0.0, %v1960
      %1962 = vmatmul.f32.gmra.mxu0 %v1836
      %v1963 = vpop.f32.mrf.mxu0
      %v1964 = vadd.f32 0.0, %v1963
      %1965 = vmatmul.f32.gmra.mxu0 %v1839
      %v1966 = vpop.f32.mrf.mxu0
      %v1967 = vadd.f32 0.0, %v1966
      %1968 = vmatmul.f32.gmra.mxu0 %v1842
      %v1969 = vpop.f32.mrf.mxu0
      %v1970 = vadd.f32 0.0, %v1969
      %1971 = vmatmul.f32.gmra.mxu0 %v1845
      %v1972 = vpop.f32.mrf.mxu0
      %v1973 = vadd.f32 0.0, %v1972
      %1974 = vmatmul.f32.gmra.mxu0 %v1848
      %v1975 = vpop.f32.mrf.mxu0
      %v1976 = vadd.f32 0.0, %v1975
      %1977 = vmatmul.f32.gmra.mxu0 %v1851
      %v1978 = vpop.f32.mrf.mxu0
      %v1979 = vadd.f32 0.0, %v1978
      %1980 = vmatmul.f32.gmra.mxu0 %v1854
      %v1981 = vpop.f32.mrf.mxu0
      %v1982 = vadd.f32 0.0, %v1981
      %1983 = vmatmul.f32.gmra.mxu0 %v1857
      %v1984 = vpop.f32.mrf.mxu0
      %v1985 = vadd.f32 0.0, %v1984
      %1986 = vmatmul.f32.gmra.mxu0 %v1860
      %v1987 = vpop.f32.mrf.mxu0
      %v1988 = vadd.f32 0.0, %v1987
      %1989 = vmatmul.f32.gmra.mxu0 %v1863
      %v1990 = vpop.f32.mrf.mxu0
      %v1991 = vadd.f32 0.0, %v1990
      %1992 = vmatmul.f32.gmra.mxu0 %v1866
      %v1993 = vpop.f32.mrf.mxu0
      %v1994 = vadd.f32 0.0, %v1993
      %1995 = vmatmul.f32.gmra.mxu0 %v1869
      %v1996 = vpop.f32.mrf.mxu0
      %v1997 = vadd.f32 0.0, %v1996
      %1998 = vmatmul.f32.gmra.mxu0 %v1872
      %v1999 = vpop.f32.mrf.mxu0
      %v2000 = vadd.f32 0.0, %v1999
      %2001 = vmatmul.f32.gmra.mxu0 %v1875
      %v2002 = vpop.f32.mrf.mxu0
      %v2003 = vadd.f32 0.0, %v2002
      %2004 = vmatmul.f32.gmra.mxu0 %v1878
      %v2005 = vpop.f32.mrf.mxu0
      %v2006 = vadd.f32 0.0, %v2005
      %2007 = vmatmul.f32.gmra.mxu0 %v1881
      %v2008 = vpop.f32.mrf.mxu0
      %v2009 = vadd.f32 0.0, %v2008
      %2010 = vmatmul.f32.gmra.mxu0 %v1884
      %v2011 = vpop.f32.mrf.mxu0
      %v2012 = vadd.f32 0.0, %v2011
      %2013 = vmatmul.f32.gmra.mxu0 %v1887
      %v2014 = vpop.f32.mrf.mxu0
      %v2015 = vadd.f32 0.0, %v2014
      %2016 = vmatmul.f32.gmra.mxu0 %v1890
      %v2017 = vpop.f32.mrf.mxu0
      %v2018 = vadd.f32 0.0, %v2017
      %2019 = vmatmul.f32.gmra.mxu0 %v1893
      %v2020 = vpop.f32.mrf.mxu0
      %v2021 = vadd.f32 0.0, %v2020
      %2022 = vmatmul.f32.gmra.mxu0 %v1896
      %v2023 = vpop.f32.mrf.mxu0
      %v2024 = vadd.f32 0.0, %v2023
      %2025 = vmatmul.f32.gmra.mxu0 %v1899
      %v2026 = vpop.f32.mrf.mxu0
      %v2027 = vadd.f32 0.0, %v2026
      %2028 = vmatmul.f32.gmra.mxu0 %v1902
      %v2029 = vpop.f32.mrf.mxu0
      %v2030 = vadd.f32 0.0, %v2029
      %2031 = vmatmul.f32.gmra.mxu0 %v1905
      %v2032 = vpop.f32.mrf.mxu0
      %v2033 = vadd.f32 0.0, %v2032
      %2034 = vmatmul.f32.gmra.mxu0 %v1908
      %v2035 = vpop.f32.mrf.mxu0
      %v2036 = vadd.f32 0.0, %v2035
      %2037 = vmatmul.f32.gmra.mxu0 %v1911
      %v2038 = vpop.f32.mrf.mxu0
      %v2039 = vadd.f32 0.0, %v2038
      %2040 = vmatmul.f32.gmra.mxu0 %v1914
      %v2041 = vpop.f32.mrf.mxu0
      %v2042 = vadd.f32 0.0, %v2041
      %2043 = vmatmul.f32.gmra.mxu0 %v1917
      %v2044 = vpop.f32.mrf.mxu0
      %v2045 = vadd.f32 0.0, %v2044
      %2046 = vdwg.mxu0
      %v2047 = vadd.f32 %v1773, %v1940
      %v2048 = vadd.f32 %v1774, %v1943
      %v2049 = vadd.f32 %v1775, %v1946
      %v2050 = vadd.f32 %v1776, %v1949
      %v2051 = vadd.f32 %v1777, %v1952
      %v2052 = vadd.f32 %v1778, %v1955
      %v2053 = vadd.f32 %v1779, %v1958
      %v2054 = vadd.f32 %v1780, %v1961
      %v2055 = vadd.f32 %v1781, %v1964
      %v2056 = vadd.f32 %v1782, %v1967
      %v2057 = vadd.f32 %v1783, %v1970
      %v2058 = vadd.f32 %v1784, %v1973
      %v2059 = vadd.f32 %v1785, %v1976
      %v2060 = vadd.f32 %v1786, %v1979
      %v2061 = vadd.f32 %v1787, %v1982
      %v2062 = vadd.f32 %v1788, %v1985
      %v2063 = vadd.f32 %v1789, %v1988
      %v2064 = vadd.f32 %v1790, %v1991
      %v2065 = vadd.f32 %v1791, %v1994
      %v2066 = vadd.f32 %v1792, %v1997
      %v2067 = vadd.f32 %v1793, %v2000
      %v2068 = vadd.f32 %v1794, %v2003
      %v2069 = vadd.f32 %v1795, %v2006
      %v2070 = vadd.f32 %v1796, %v2009
      %v2071 = vadd.f32 %v1797, %v2012
      %v2072 = vadd.f32 %v1798, %v2015
      %v2073 = vadd.f32 %v1799, %v2018
      %v2074 = vadd.f32 %v1800, %v2021
      %v2075 = vadd.f32 %v1801, %v2024
      %v2076 = vadd.f32 %v1802, %v2027
      %v2077 = vadd.f32 %v1803, %v2030
      %v2078 = vadd.f32 %v1804, %v2033
      %v2079 = vadd.f32 %v1805, %v2036
      %v2080 = vadd.f32 %v1806, %v2039
      %v2081 = vadd.f32 %v1807, %v2042
      %v2082 = vadd.f32 %v1808, %v2045
      %2083 = vst.msk [vmem:[#allocation2] sm:$0xff] %vm171, %v2047
      %2084 = vst.msk [vmem:[#allocation2 + $0x8] sm:$0xff] %vm171, %v2048
      %2085 = vst.msk [vmem:[#allocation2 + $0x10] sm:$0xff] %vm171, %v2049
      %2086 = vst.msk [vmem:[#allocation2 + $0x18] sm:$0xff] %vm171, %v2050
      %2087 = vst.msk [vmem:[#allocation2 + $0x20] sm:$0xff] %vm171, %v2051
      %2088 = vst.msk [vmem:[#allocation2 + $0x28] sm:$0xff] %vm171, %v2052
      %2089 = vst.msk [vmem:[#allocation2 + $0x30] sm:$0xff] %vm171, %v2053
      %2090 = vst.msk [vmem:[#allocation2 + $0x38] sm:$0xff] %vm171, %v2054
      %2091 = vst.msk [vmem:[#allocation2 + $0x40] sm:$0xff] %vm171, %v2055
      %2092 = vst.msk [vmem:[#allocation2 + $0x48] sm:$0xff] %vm171, %v2056
      %2093 = vst.msk [vmem:[#allocation2 + $0x50] sm:$0xff] %vm171, %v2057
      %2094 = vst.msk [vmem:[#allocation2 + $0x58] sm:$0xff] %vm171, %v2058
      %2095 = vst.msk [vmem:[#allocation2 + $0x60] sm:$0xff] %vm171, %v2059
      %2096 = vst.msk [vmem:[#allocation2 + $0x68] sm:$0xff] %vm171, %v2060
      %2097 = vst.msk [vmem:[#allocation2 + $0x70] sm:$0xff] %vm171, %v2061
      %2098 = vst.msk [vmem:[#allocation2 + $0x78] sm:$0xff] %vm171, %v2062
      %2099 = vst.msk [vmem:[#allocation2 + $0x80] sm:$0xff] %vm171, %v2063
      %2100 = vst.msk [vmem:[#allocation2 + $0x88] sm:$0xff] %vm171, %v2064
      %2101 = vst.msk [vmem:[#allocation2 + $0x90] sm:$0xff] %vm171, %v2065
      %2102 = vst.msk [vmem:[#allocation2 + $0x98] sm:$0xff] %vm171, %v2066
      %2103 = vst.msk [vmem:[#allocation2 + $0xa0] sm:$0xff] %vm171, %v2067
      %2104 = vst.msk [vmem:[#allocation2 + $0xa8] sm:$0xff] %vm171, %v2068
      %2105 = vst.msk [vmem:[#allocation2 + $0xb0] sm:$0xff] %vm171, %v2069
      %2106 = vst.msk [vmem:[#allocation2 + $0xb8] sm:$0xff] %vm171, %v2070
      %2107 = vst.msk [vmem:[#allocation2 + $0xc0] sm:$0xff] %vm171, %v2071
      %2108 = vst.msk [vmem:[#allocation2 + $0xc8] sm:$0xff] %vm171, %v2072
      %2109 = vst.msk [vmem:[#allocation2 + $0xd0] sm:$0xff] %vm171, %v2073
      %2110 = vst.msk [vmem:[#allocation2 + $0xd8] sm:$0xff] %vm171, %v2074
      %2111 = vst.msk [vmem:[#allocation2 + $0xe0] sm:$0xff] %vm171, %v2075
      %2112 = vst.msk [vmem:[#allocation2 + $0xe8] sm:$0xff] %vm171, %v2076
      %2113 = vst.msk [vmem:[#allocation2 + $0xf0] sm:$0xff] %vm171, %v2077
      %2114 = vst.msk [vmem:[#allocation2 + $0xf8] sm:$0xff] %vm171, %v2078
      %2115 = vst.msk [vmem:[#allocation2 + $0x100] sm:$0xff] %vm171, %v2079
      %2116 = vst.msk [vmem:[#allocation2 + $0x108] sm:$0xff] %vm171, %v2080
      %2117 = vst.msk [vmem:[#allocation2 + $0x110] sm:$0xff] %vm171, %v2081
      %2118 = vst.msk [vmem:[#allocation2 + $0x118] sm:$0xff] %vm171, %v2082
      %v2119 = vld [vmem:[%s165 + $0x14] sm:$0xff]
      %v2120 = vld [vmem:[%s165 + $0x1c] sm:$0xff]
      %v2121 = vld [vmem:[%s165 + $0x24] sm:$0xff]
      %v2122 = vld [vmem:[%s165 + $0x2c] sm:$0xff]
      %v2123 = vld [vmem:[%s165 + $0x34] sm:$0xff]
      %v2124 = vld [vmem:[%s165 + $0x3c] sm:$0xff]
      %v2125 = vld [vmem:[%s165 + $0x44] sm:$0xff]
      %v2126 = vld [vmem:[%s165 + $0x4c] sm:$0xff]
      %v2127 = vld [vmem:[%s165 + $0x54] sm:$0xff]
      %v2128 = vld [vmem:[%s165 + $0x5c] sm:$0xff]
      %v2129 = vld [vmem:[%s165 + $0x64] sm:$0xff]
      %v2130 = vld [vmem:[%s165 + $0x6c] sm:$0xff]
      %v2131 = vld [vmem:[%s165 + $0x74] sm:$0xff]
      %v2132 = vld [vmem:[%s165 + $0x7c] sm:$0xff]
      %v2133 = vld [vmem:[%s165 + $0x84] sm:$0xff]
      %v2134 = vld [vmem:[%s165 + $0x8c] sm:$0xff]
      %v2135 = vld [vmem:[%s165 + $0x94] sm:$0xff]
      %v2136 = vld [vmem:[%s165 + $0x9c] sm:$0xff]
      %v2137 = vld [vmem:[%s165 + $0xa4] sm:$0xff]
      %v2138 = vld [vmem:[%s165 + $0xac] sm:$0xff]
      %v2139 = vld [vmem:[%s165 + $0xb4] sm:$0xff]
      %v2140 = vld [vmem:[%s165 + $0xbc] sm:$0xff]
      %v2141 = vld [vmem:[%s165 + $0xc4] sm:$0xff]
      %v2142 = vld [vmem:[%s165 + $0xcc] sm:$0xff]
      %v2143 = vld [vmem:[%s165 + $0xd4] sm:$0xff]
      %v2144 = vld [vmem:[%s165 + $0xdc] sm:$0xff]
      %v2145 = vld [vmem:[%s165 + $0xe4] sm:$0xff]
      %v2146 = vld [vmem:[%s165 + $0xec] sm:$0xff]
      %v2147 = vld [vmem:[%s165 + $0xf4] sm:$0xff]
      %v2148 = vld [vmem:[%s165 + $0xfc] sm:$0xff]
      %v2149 = vld [vmem:[%s165 + $0x104] sm:$0xff]
      %v2150 = vld [vmem:[%s165 + $0x10c] sm:$0xff]
      %v2151 = vld [vmem:[%s165 + $0x114] sm:$0xff]
      %v2152 = vld [vmem:[%s165 + $0x11c] sm:$0xff]
      %v2153 = vld [vmem:[%s165 + $0x124] sm:$0xff]
      %v2154 = vld [vmem:[%s165 + $0x12c] sm:$0xff]
      %v2155 = vld [vmem:[#allocation2] sm:$0xff]
      %v2156 = vld [vmem:[#allocation2 + $0x8] sm:$0xff]
      %v2157 = vld [vmem:[#allocation2 + $0x10] sm:$0xff]
      %v2158 = vld [vmem:[#allocation2 + $0x18] sm:$0xff]
      %v2159 = vld [vmem:[#allocation2 + $0x20] sm:$0xff]
      %v2160 = vld [vmem:[#allocation2 + $0x28] sm:$0xff]
      %v2161 = vld [vmem:[#allocation2 + $0x30] sm:$0xff]
      %v2162 = vld [vmem:[#allocation2 + $0x38] sm:$0xff]
      %v2163 = vld [vmem:[#allocation2 + $0x40] sm:$0xff]
      %v2164 = vld [vmem:[#allocation2 + $0x48] sm:$0xff]
      %v2165 = vld [vmem:[#allocation2 + $0x50] sm:$0xff]
      %v2166 = vld [vmem:[#allocation2 + $0x58] sm:$0xff]
      %v2167 = vld [vmem:[#allocation2 + $0x60] sm:$0xff]
      %v2168 = vld [vmem:[#allocation2 + $0x68] sm:$0xff]
      %v2169 = vld [vmem:[#allocation2 + $0x70] sm:$0xff]
      %v2170 = vld [vmem:[#allocation2 + $0x78] sm:$0xff]
      %v2171 = vld [vmem:[#allocation2 + $0x80] sm:$0xff]
      %v2172 = vld [vmem:[#allocation2 + $0x88] sm:$0xff]
      %v2173 = vld [vmem:[#allocation2 + $0x90] sm:$0xff]
      %v2174 = vld [vmem:[#allocation2 + $0x98] sm:$0xff]
      %v2175 = vld [vmem:[#allocation2 + $0xa0] sm:$0xff]
      %v2176 = vld [vmem:[#allocation2 + $0xa8] sm:$0xff]
      %v2177 = vld [vmem:[#allocation2 + $0xb0] sm:$0xff]
      %v2178 = vld [vmem:[#allocation2 + $0xb8] sm:$0xff]
      %v2179 = vld [vmem:[#allocation2 + $0xc0] sm:$0xff]
      %v2180 = vld [vmem:[#allocation2 + $0xc8] sm:$0xff]
      %v2181 = vld [vmem:[#allocation2 + $0xd0] sm:$0xff]
      %v2182 = vld [vmem:[#allocation2 + $0xd8] sm:$0xff]
      %v2183 = vld [vmem:[#allocation2 + $0xe0] sm:$0xff]
      %v2184 = vld [vmem:[#allocation2 + $0xe8] sm:$0xff]
      %v2185 = vld [vmem:[#allocation2 + $0xf0] sm:$0xff]
      %v2186 = vld [vmem:[#allocation2 + $0xf8] sm:$0xff]
      %v2187 = vld [vmem:[#allocation2 + $0x100] sm:$0xff]
      %v2188 = vld [vmem:[#allocation2 + $0x108] sm:$0xff]
      %v2189 = vld [vmem:[#allocation2 + $0x110] sm:$0xff]
      %v2190 = vld [vmem:[#allocation2 + $0x118] sm:$0xff]
      %s2191 = scalar_lea.vmem %s1, 20
      %v2192 = vld [vmem:[%s2191] sm:$0xf]
      %v2194 = vsel %vm281, %v2119, 0
      %v2197 = vsel %vm281, %v2120, 0
      %v2200 = vsel %vm281, %v2121, 0
      %v2203 = vsel %vm281, %v2122, 0
      %v2206 = vsel %vm281, %v2123, 0
      %v2209 = vsel %vm281, %v2124, 0
      %v2212 = vsel %vm281, %v2125, 0
      %v2215 = vsel %vm281, %v2126, 0
      %v2218 = vsel %vm281, %v2127, 0
      %v2221 = vsel %vm281, %v2128, 0
      %v2224 = vsel %vm281, %v2129, 0
      %v2227 = vsel %vm281, %v2130, 0
      %v2230 = vsel %vm281, %v2131, 0
      %v2233 = vsel %vm281, %v2132, 0
      %v2236 = vsel %vm281, %v2133, 0
      %v2239 = vsel %vm281, %v2134, 0
      %v2242 = vsel %vm281, %v2135, 0
      %v2245 = vsel %vm281, %v2136, 0
      %v2248 = vsel %vm281, %v2137, 0
      %v2251 = vsel %vm281, %v2138, 0
      %v2254 = vsel %vm281, %v2139, 0
      %v2257 = vsel %vm281, %v2140, 0
      %v2260 = vsel %vm281, %v2141, 0
      %v2263 = vsel %vm281, %v2142, 0
      %v2266 = vsel %vm281, %v2143, 0
      %v2269 = vsel %vm281, %v2144, 0
      %v2272 = vsel %vm281, %v2145, 0
      %v2275 = vsel %vm281, %v2146, 0
      %v2278 = vsel %vm281, %v2147, 0
      %v2281 = vsel %vm281, %v2148, 0
      %v2284 = vsel %vm281, %v2149, 0
      %v2287 = vsel %vm281, %v2150, 0
      %v2290 = vsel %vm281, %v2151, 0
      %v2293 = vsel %vm281, %v2152, 0
      %v2296 = vsel %vm281, %v2153, 0
      %v2299 = vsel %vm281, %v2154, 0
      %v2302 = vsel %vm390, %v2192, 0
      %2304 = vmatpush.msra.mxu0 0.0
      %2305 = vmatpush.msra.mxu0 0.0
      %2306 = vmatpush.msra.mxu0 0.0
      %2307 = vmatpush.msra.mxu0 0.0
      %2308 = vmatpush.msra.mxu0 0.0
      %2309 = vmatpush.msra.mxu0 0.0
      %2310 = vmatpush.msra.mxu0 0.0
      %2311 = vmatpush.msra.mxu0 0.0
      %2312 = vmatpush.msra.mxu0 0.0
      %2313 = vmatpush.msra.mxu0 0.0
      %2314 = vmatpush.msra.mxu0 0.0
      %2315 = vmatpush.msra.mxu0 0.0
      %2316 = vmatpush.msra.mxu0 0.0
      %2317 = vmatpush.msra.mxu0 0.0
      %2318 = vmatpush.msra.mxu0 0.0
      %2319 = vmatpush.msra.mxu0 %v2302
      %2320 = vmatmul.f32.gmra.mxu0 %v2194
      %v2321 = vpop.f32.mrf.mxu0
      %v2322 = vadd.f32 0.0, %v2321
      %2323 = vmatmul.f32.gmra.mxu0 %v2197
      %v2324 = vpop.f32.mrf.mxu0
      %v2325 = vadd.f32 0.0, %v2324
      %2326 = vmatmul.f32.gmra.mxu0 %v2200
      %v2327 = vpop.f32.mrf.mxu0
      %v2328 = vadd.f32 0.0, %v2327
      %2329 = vmatmul.f32.gmra.mxu0 %v2203
      %v2330 = vpop.f32.mrf.mxu0
      %v2331 = vadd.f32 0.0, %v2330
      %2332 = vmatmul.f32.gmra.mxu0 %v2206
      %v2333 = vpop.f32.mrf.mxu0
      %v2334 = vadd.f32 0.0, %v2333
      %2335 = vmatmul.f32.gmra.mxu0 %v2209
      %v2336 = vpop.f32.mrf.mxu0
      %v2337 = vadd.f32 0.0, %v2336
      %2338 = vmatmul.f32.gmra.mxu0 %v2212
      %v2339 = vpop.f32.mrf.mxu0
      %v2340 = vadd.f32 0.0, %v2339
      %2341 = vmatmul.f32.gmra.mxu0 %v2215
      %v2342 = vpop.f32.mrf.mxu0
      %v2343 = vadd.f32 0.0, %v2342
      %2344 = vmatmul.f32.gmra.mxu0 %v2218
      %v2345 = vpop.f32.mrf.mxu0
      %v2346 = vadd.f32 0.0, %v2345
      %2347 = vmatmul.f32.gmra.mxu0 %v2221
      %v2348 = vpop.f32.mrf.mxu0
      %v2349 = vadd.f32 0.0, %v2348
      %2350 = vmatmul.f32.gmra.mxu0 %v2224
      %v2351 = vpop.f32.mrf.mxu0
      %v2352 = vadd.f32 0.0, %v2351
      %2353 = vmatmul.f32.gmra.mxu0 %v2227
      %v2354 = vpop.f32.mrf.mxu0
      %v2355 = vadd.f32 0.0, %v2354
      %2356 = vmatmul.f32.gmra.mxu0 %v2230
      %v2357 = vpop.f32.mrf.mxu0
      %v2358 = vadd.f32 0.0, %v2357
      %2359 = vmatmul.f32.gmra.mxu0 %v2233
      %v2360 = vpop.f32.mrf.mxu0
      %v2361 = vadd.f32 0.0, %v2360
      %2362 = vmatmul.f32.gmra.mxu0 %v2236
      %v2363 = vpop.f32.mrf.mxu0
      %v2364 = vadd.f32 0.0, %v2363
      %2365 = vmatmul.f32.gmra.mxu0 %v2239
      %v2366 = vpop.f32.mrf.mxu0
      %v2367 = vadd.f32 0.0, %v2366
      %2368 = vmatmul.f32.gmra.mxu0 %v2242
      %v2369 = vpop.f32.mrf.mxu0
      %v2370 = vadd.f32 0.0, %v2369
      %2371 = vmatmul.f32.gmra.mxu0 %v2245
      %v2372 = vpop.f32.mrf.mxu0
      %v2373 = vadd.f32 0.0, %v2372
      %2374 = vmatmul.f32.gmra.mxu0 %v2248
      %v2375 = vpop.f32.mrf.mxu0
      %v2376 = vadd.f32 0.0, %v2375
      %2377 = vmatmul.f32.gmra.mxu0 %v2251
      %v2378 = vpop.f32.mrf.mxu0
      %v2379 = vadd.f32 0.0, %v2378
      %2380 = vmatmul.f32.gmra.mxu0 %v2254
      %v2381 = vpop.f32.mrf.mxu0
      %v2382 = vadd.f32 0.0, %v2381
      %2383 = vmatmul.f32.gmra.mxu0 %v2257
      %v2384 = vpop.f32.mrf.mxu0
      %v2385 = vadd.f32 0.0, %v2384
      %2386 = vmatmul.f32.gmra.mxu0 %v2260
      %v2387 = vpop.f32.mrf.mxu0
      %v2388 = vadd.f32 0.0, %v2387
      %2389 = vmatmul.f32.gmra.mxu0 %v2263
      %v2390 = vpop.f32.mrf.mxu0
      %v2391 = vadd.f32 0.0, %v2390
      %2392 = vmatmul.f32.gmra.mxu0 %v2266
      %v2393 = vpop.f32.mrf.mxu0
      %v2394 = vadd.f32 0.0, %v2393
      %2395 = vmatmul.f32.gmra.mxu0 %v2269
      %v2396 = vpop.f32.mrf.mxu0
      %v2397 = vadd.f32 0.0, %v2396
      %2398 = vmatmul.f32.gmra.mxu0 %v2272
      %v2399 = vpop.f32.mrf.mxu0
      %v2400 = vadd.f32 0.0, %v2399
      %2401 = vmatmul.f32.gmra.mxu0 %v2275
      %v2402 = vpop.f32.mrf.mxu0
      %v2403 = vadd.f32 0.0, %v2402
      %2404 = vmatmul.f32.gmra.mxu0 %v2278
      %v2405 = vpop.f32.mrf.mxu0
      %v2406 = vadd.f32 0.0, %v2405
      %2407 = vmatmul.f32.gmra.mxu0 %v2281
      %v2408 = vpop.f32.mrf.mxu0
      %v2409 = vadd.f32 0.0, %v2408
      %2410 = vmatmul.f32.gmra.mxu0 %v2284
      %v2411 = vpop.f32.mrf.mxu0
      %v2412 = vadd.f32 0.0, %v2411
      %2413 = vmatmul.f32.gmra.mxu0 %v2287
      %v2414 = vpop.f32.mrf.mxu0
      %v2415 = vadd.f32 0.0, %v2414
      %2416 = vmatmul.f32.gmra.mxu0 %v2290
      %v2417 = vpop.f32.mrf.mxu0
      %v2418 = vadd.f32 0.0, %v2417
      %2419 = vmatmul.f32.gmra.mxu0 %v2293
      %v2420 = vpop.f32.mrf.mxu0
      %v2421 = vadd.f32 0.0, %v2420
      %2422 = vmatmul.f32.gmra.mxu0 %v2296
      %v2423 = vpop.f32.mrf.mxu0
      %v2424 = vadd.f32 0.0, %v2423
      %2425 = vmatmul.f32.gmra.mxu0 %v2299
      %v2426 = vpop.f32.mrf.mxu0
      %v2427 = vadd.f32 0.0, %v2426
      %2428 = vdwg.mxu0
      %v2429 = vadd.f32 %v2155, %v2322
      %v2430 = vadd.f32 %v2156, %v2325
      %v2431 = vadd.f32 %v2157, %v2328
      %v2432 = vadd.f32 %v2158, %v2331
      %v2433 = vadd.f32 %v2159, %v2334
      %v2434 = vadd.f32 %v2160, %v2337
      %v2435 = vadd.f32 %v2161, %v2340
      %v2436 = vadd.f32 %v2162, %v2343
      %v2437 = vadd.f32 %v2163, %v2346
      %v2438 = vadd.f32 %v2164, %v2349
      %v2439 = vadd.f32 %v2165, %v2352
      %v2440 = vadd.f32 %v2166, %v2355
      %v2441 = vadd.f32 %v2167, %v2358
      %v2442 = vadd.f32 %v2168, %v2361
      %v2443 = vadd.f32 %v2169, %v2364
      %v2444 = vadd.f32 %v2170, %v2367
      %v2445 = vadd.f32 %v2171, %v2370
      %v2446 = vadd.f32 %v2172, %v2373
      %v2447 = vadd.f32 %v2173, %v2376
      %v2448 = vadd.f32 %v2174, %v2379
      %v2449 = vadd.f32 %v2175, %v2382
      %v2450 = vadd.f32 %v2176, %v2385
      %v2451 = vadd.f32 %v2177, %v2388
      %v2452 = vadd.f32 %v2178, %v2391
      %v2453 = vadd.f32 %v2179, %v2394
      %v2454 = vadd.f32 %v2180, %v2397
      %v2455 = vadd.f32 %v2181, %v2400
      %v2456 = vadd.f32 %v2182, %v2403
      %v2457 = vadd.f32 %v2183, %v2406
      %v2458 = vadd.f32 %v2184, %v2409
      %v2459 = vadd.f32 %v2185, %v2412
      %v2460 = vadd.f32 %v2186, %v2415
      %v2461 = vadd.f32 %v2187, %v2418
      %v2462 = vadd.f32 %v2188, %v2421
      %v2463 = vadd.f32 %v2189, %v2424
      %v2464 = vadd.f32 %v2190, %v2427
      %2465 = vst.msk [vmem:[#allocation2] sm:$0xff] %vm171, %v2429
      %2466 = vst.msk [vmem:[#allocation2 + $0x8] sm:$0xff] %vm171, %v2430
      %2467 = vst.msk [vmem:[#allocation2 + $0x10] sm:$0xff] %vm171, %v2431
      %2468 = vst.msk [vmem:[#allocation2 + $0x18] sm:$0xff] %vm171, %v2432
      %2469 = vst.msk [vmem:[#allocation2 + $0x20] sm:$0xff] %vm171, %v2433
      %2470 = vst.msk [vmem:[#allocation2 + $0x28] sm:$0xff] %vm171, %v2434
      %2471 = vst.msk [vmem:[#allocation2 + $0x30] sm:$0xff] %vm171, %v2435
      %2472 = vst.msk [vmem:[#allocation2 + $0x38] sm:$0xff] %vm171, %v2436
      %2473 = vst.msk [vmem:[#allocation2 + $0x40] sm:$0xff] %vm171, %v2437
      %2474 = vst.msk [vmem:[#allocation2 + $0x48] sm:$0xff] %vm171, %v2438
      %2475 = vst.msk [vmem:[#allocation2 + $0x50] sm:$0xff] %vm171, %v2439
      %2476 = vst.msk [vmem:[#allocation2 + $0x58] sm:$0xff] %vm171, %v2440
      %2477 = vst.msk [vmem:[#allocation2 + $0x60] sm:$0xff] %vm171, %v2441
      %2478 = vst.msk [vmem:[#allocation2 + $0x68] sm:$0xff] %vm171, %v2442
      %2479 = vst.msk [vmem:[#allocation2 + $0x70] sm:$0xff] %vm171, %v2443
      %2480 = vst.msk [vmem:[#allocation2 + $0x78] sm:$0xff] %vm171, %v2444
      %2481 = vst.msk [vmem:[#allocation2 + $0x80] sm:$0xff] %vm171, %v2445
      %2482 = vst.msk [vmem:[#allocation2 + $0x88] sm:$0xff] %vm171, %v2446
      %2483 = vst.msk [vmem:[#allocation2 + $0x90] sm:$0xff] %vm171, %v2447
      %2484 = vst.msk [vmem:[#allocation2 + $0x98] sm:$0xff] %vm171, %v2448
      %2485 = vst.msk [vmem:[#allocation2 + $0xa0] sm:$0xff] %vm171, %v2449
      %2486 = vst.msk [vmem:[#allocation2 + $0xa8] sm:$0xff] %vm171, %v2450
      %2487 = vst.msk [vmem:[#allocation2 + $0xb0] sm:$0xff] %vm171, %v2451
      %2488 = vst.msk [vmem:[#allocation2 + $0xb8] sm:$0xff] %vm171, %v2452
      %2489 = vst.msk [vmem:[#allocation2 + $0xc0] sm:$0xff] %vm171, %v2453
      %2490 = vst.msk [vmem:[#allocation2 + $0xc8] sm:$0xff] %vm171, %v2454
      %2491 = vst.msk [vmem:[#allocation2 + $0xd0] sm:$0xff] %vm171, %v2455
      %2492 = vst.msk [vmem:[#allocation2 + $0xd8] sm:$0xff] %vm171, %v2456
      %2493 = vst.msk [vmem:[#allocation2 + $0xe0] sm:$0xff] %vm171, %v2457
      %2494 = vst.msk [vmem:[#allocation2 + $0xe8] sm:$0xff] %vm171, %v2458
      %2495 = vst.msk [vmem:[#allocation2 + $0xf0] sm:$0xff] %vm171, %v2459
      %2496 = vst.msk [vmem:[#allocation2 + $0xf8] sm:$0xff] %vm171, %v2460
      %2497 = vst.msk [vmem:[#allocation2 + $0x100] sm:$0xff] %vm171, %v2461
      %2498 = vst.msk [vmem:[#allocation2 + $0x108] sm:$0xff] %vm171, %v2462
      %2499 = vst.msk [vmem:[#allocation2 + $0x110] sm:$0xff] %vm171, %v2463
      %2500 = vst.msk [vmem:[#allocation2 + $0x118] sm:$0xff] %vm171, %v2464
      %v2501 = vld [vmem:[%s165 + $0x24] sm:$0xff]
      %v2502 = vld [vmem:[%s165 + $0x2c] sm:$0xff]
      %v2503 = vld [vmem:[%s165 + $0x34] sm:$0xff]
      %v2504 = vld [vmem:[%s165 + $0x3c] sm:$0xff]
      %v2505 = vld [vmem:[%s165 + $0x44] sm:$0xff]
      %v2506 = vld [vmem:[%s165 + $0x4c] sm:$0xff]
      %v2507 = vld [vmem:[%s165 + $0x54] sm:$0xff]
      %v2508 = vld [vmem:[%s165 + $0x5c] sm:$0xff]
      %v2509 = vld [vmem:[%s165 + $0x64] sm:$0xff]
      %v2510 = vld [vmem:[%s165 + $0x6c] sm:$0xff]
      %v2511 = vld [vmem:[%s165 + $0x74] sm:$0xff]
      %v2512 = vld [vmem:[%s165 + $0x7c] sm:$0xff]
      %v2513 = vld [vmem:[%s165 + $0x84] sm:$0xff]
      %v2514 = vld [vmem:[%s165 + $0x8c] sm:$0xff]
      %v2515 = vld [vmem:[%s165 + $0x94] sm:$0xff]
      %v2516 = vld [vmem:[%s165 + $0x9c] sm:$0xff]
      %v2517 = vld [vmem:[%s165 + $0xa4] sm:$0xff]
      %v2518 = vld [vmem:[%s165 + $0xac] sm:$0xff]
      %v2519 = vld [vmem:[%s165 + $0xb4] sm:$0xff]
      %v2520 = vld [vmem:[%s165 + $0xbc] sm:$0xff]
      %v2521 = vld [vmem:[%s165 + $0xc4] sm:$0xff]
      %v2522 = vld [vmem:[%s165 + $0xcc] sm:$0xff]
      %v2523 = vld [vmem:[%s165 + $0xd4] sm:$0xff]
      %v2524 = vld [vmem:[%s165 + $0xdc] sm:$0xff]
      %v2525 = vld [vmem:[%s165 + $0xe4] sm:$0xff]
      %v2526 = vld [vmem:[%s165 + $0xec] sm:$0xff]
      %v2527 = vld [vmem:[%s165 + $0xf4] sm:$0xff]
      %v2528 = vld [vmem:[%s165 + $0xfc] sm:$0xff]
      %v2529 = vld [vmem:[%s165 + $0x104] sm:$0xff]
      %v2530 = vld [vmem:[%s165 + $0x10c] sm:$0xff]
      %v2531 = vld [vmem:[%s165 + $0x114] sm:$0xff]
      %v2532 = vld [vmem:[%s165 + $0x11c] sm:$0xff]
      %v2533 = vld [vmem:[%s165 + $0x124] sm:$0xff]
      %v2534 = vld [vmem:[%s165 + $0x12c] sm:$0xff]
      %v2535 = vld [vmem:[%s165 + $0x134] sm:$0xff]
      %v2536 = vld [vmem:[%s165 + $0x13c] sm:$0xff]
      %v2537 = vld [vmem:[#allocation2] sm:$0xff]
      %v2538 = vld [vmem:[#allocation2 + $0x8] sm:$0xff]
      %v2539 = vld [vmem:[#allocation2 + $0x10] sm:$0xff]
      %v2540 = vld [vmem:[#allocation2 + $0x18] sm:$0xff]
      %v2541 = vld [vmem:[#allocation2 + $0x20] sm:$0xff]
      %v2542 = vld [vmem:[#allocation2 + $0x28] sm:$0xff]
      %v2543 = vld [vmem:[#allocation2 + $0x30] sm:$0xff]
      %v2544 = vld [vmem:[#allocation2 + $0x38] sm:$0xff]
      %v2545 = vld [vmem:[#allocation2 + $0x40] sm:$0xff]
      %v2546 = vld [vmem:[#allocation2 + $0x48] sm:$0xff]
      %v2547 = vld [vmem:[#allocation2 + $0x50] sm:$0xff]
      %v2548 = vld [vmem:[#allocation2 + $0x58] sm:$0xff]
      %v2549 = vld [vmem:[#allocation2 + $0x60] sm:$0xff]
      %v2550 = vld [vmem:[#allocation2 + $0x68] sm:$0xff]
      %v2551 = vld [vmem:[#allocation2 + $0x70] sm:$0xff]
      %v2552 = vld [vmem:[#allocation2 + $0x78] sm:$0xff]
      %v2553 = vld [vmem:[#allocation2 + $0x80] sm:$0xff]
      %v2554 = vld [vmem:[#allocation2 + $0x88] sm:$0xff]
      %v2555 = vld [vmem:[#allocation2 + $0x90] sm:$0xff]
      %v2556 = vld [vmem:[#allocation2 + $0x98] sm:$0xff]
      %v2557 = vld [vmem:[#allocation2 + $0xa0] sm:$0xff]
      %v2558 = vld [vmem:[#allocation2 + $0xa8] sm:$0xff]
      %v2559 = vld [vmem:[#allocation2 + $0xb0] sm:$0xff]
      %v2560 = vld [vmem:[#allocation2 + $0xb8] sm:$0xff]
      %v2561 = vld [vmem:[#allocation2 + $0xc0] sm:$0xff]
      %v2562 = vld [vmem:[#allocation2 + $0xc8] sm:$0xff]
      %v2563 = vld [vmem:[#allocation2 + $0xd0] sm:$0xff]
      %v2564 = vld [vmem:[#allocation2 + $0xd8] sm:$0xff]
      %v2565 = vld [vmem:[#allocation2 + $0xe0] sm:$0xff]
      %v2566 = vld [vmem:[#allocation2 + $0xe8] sm:$0xff]
      %v2567 = vld [vmem:[#allocation2 + $0xf0] sm:$0xff]
      %v2568 = vld [vmem:[#allocation2 + $0xf8] sm:$0xff]
      %v2569 = vld [vmem:[#allocation2 + $0x100] sm:$0xff]
      %v2570 = vld [vmem:[#allocation2 + $0x108] sm:$0xff]
      %v2571 = vld [vmem:[#allocation2 + $0x110] sm:$0xff]
      %v2572 = vld [vmem:[#allocation2 + $0x118] sm:$0xff]
      %s2573 = scalar_lea.vmem %s1, 24
      %v2574 = vld [vmem:[%s2573] sm:$0xf]
      %v2576 = vsel %vm281, %v2501, 0
      %v2579 = vsel %vm281, %v2502, 0
      %v2582 = vsel %vm281, %v2503, 0
      %v2585 = vsel %vm281, %v2504, 0
      %v2588 = vsel %vm281, %v2505, 0
      %v2591 = vsel %vm281, %v2506, 0
      %v2594 = vsel %vm281, %v2507, 0
      %v2597 = vsel %vm281, %v2508, 0
      %v2600 = vsel %vm281, %v2509, 0
      %v2603 = vsel %vm281, %v2510, 0
      %v2606 = vsel %vm281, %v2511, 0
      %v2609 = vsel %vm281, %v2512, 0
      %v2612 = vsel %vm281, %v2513, 0
      %v2615 = vsel %vm281, %v2514, 0
      %v2618 = vsel %vm281, %v2515, 0
      %v2621 = vsel %vm281, %v2516, 0
      %v2624 = vsel %vm281, %v2517, 0
      %v2627 = vsel %vm281, %v2518, 0
      %v2630 = vsel %vm281, %v2519, 0
      %v2633 = vsel %vm281, %v2520, 0
      %v2636 = vsel %vm281, %v2521, 0
      %v2639 = vsel %vm281, %v2522, 0
      %v2642 = vsel %vm281, %v2523, 0
      %v2645 = vsel %vm281, %v2524, 0
      %v2648 = vsel %vm281, %v2525, 0
      %v2651 = vsel %vm281, %v2526, 0
      %v2654 = vsel %vm281, %v2527, 0
      %v2657 = vsel %vm281, %v2528, 0
      %v2660 = vsel %vm281, %v2529, 0
      %v2663 = vsel %vm281, %v2530, 0
      %v2666 = vsel %vm281, %v2531, 0
      %v2669 = vsel %vm281, %v2532, 0
      %v2672 = vsel %vm281, %v2533, 0
      %v2675 = vsel %vm281, %v2534, 0
      %v2678 = vsel %vm281, %v2535, 0
      %v2681 = vsel %vm281, %v2536, 0
      %v2684 = vsel %vm390, %v2574, 0
      %2686 = vmatpush.msra.mxu0 0.0
      %2687 = vmatpush.msra.mxu0 0.0
      %2688 = vmatpush.msra.mxu0 0.0
      %2689 = vmatpush.msra.mxu0 0.0
      %2690 = vmatpush.msra.mxu0 0.0
      %2691 = vmatpush.msra.mxu0 0.0
      %2692 = vmatpush.msra.mxu0 0.0
      %2693 = vmatpush.msra.mxu0 0.0
      %2694 = vmatpush.msra.mxu0 0.0
      %2695 = vmatpush.msra.mxu0 0.0
      %2696 = vmatpush.msra.mxu0 0.0
      %2697 = vmatpush.msra.mxu0 0.0
      %2698 = vmatpush.msra.mxu0 0.0
      %2699 = vmatpush.msra.mxu0 0.0
      %2700 = vmatpush.msra.mxu0 0.0
      %2701 = vmatpush.msra.mxu0 %v2684
      %2702 = vmatmul.f32.gmra.mxu0 %v2576
      %v2703 = vpop.f32.mrf.mxu0
      %v2704 = vadd.f32 0.0, %v2703
      %2705 = vmatmul.f32.gmra.mxu0 %v2579
      %v2706 = vpop.f32.mrf.mxu0
      %v2707 = vadd.f32 0.0, %v2706
      %2708 = vmatmul.f32.gmra.mxu0 %v2582
      %v2709 = vpop.f32.mrf.mxu0
      %v2710 = vadd.f32 0.0, %v2709
      %2711 = vmatmul.f32.gmra.mxu0 %v2585
      %v2712 = vpop.f32.mrf.mxu0
      %v2713 = vadd.f32 0.0, %v2712
      %2714 = vmatmul.f32.gmra.mxu0 %v2588
      %v2715 = vpop.f32.mrf.mxu0
      %v2716 = vadd.f32 0.0, %v2715
      %2717 = vmatmul.f32.gmra.mxu0 %v2591
      %v2718 = vpop.f32.mrf.mxu0
      %v2719 = vadd.f32 0.0, %v2718
      %2720 = vmatmul.f32.gmra.mxu0 %v2594
      %v2721 = vpop.f32.mrf.mxu0
      %v2722 = vadd.f32 0.0, %v2721
      %2723 = vmatmul.f32.gmra.mxu0 %v2597
      %v2724 = vpop.f32.mrf.mxu0
      %v2725 = vadd.f32 0.0, %v2724
      %2726 = vmatmul.f32.gmra.mxu0 %v2600
      %v2727 = vpop.f32.mrf.mxu0
      %v2728 = vadd.f32 0.0, %v2727
      %2729 = vmatmul.f32.gmra.mxu0 %v2603
      %v2730 = vpop.f32.mrf.mxu0
      %v2731 = vadd.f32 0.0, %v2730
      %2732 = vmatmul.f32.gmra.mxu0 %v2606
      %v2733 = vpop.f32.mrf.mxu0
      %v2734 = vadd.f32 0.0, %v2733
      %2735 = vmatmul.f32.gmra.mxu0 %v2609
      %v2736 = vpop.f32.mrf.mxu0
      %v2737 = vadd.f32 0.0, %v2736
      %2738 = vmatmul.f32.gmra.mxu0 %v2612
      %v2739 = vpop.f32.mrf.mxu0
      %v2740 = vadd.f32 0.0, %v2739
      %2741 = vmatmul.f32.gmra.mxu0 %v2615
      %v2742 = vpop.f32.mrf.mxu0
      %v2743 = vadd.f32 0.0, %v2742
      %2744 = vmatmul.f32.gmra.mxu0 %v2618
      %v2745 = vpop.f32.mrf.mxu0
      %v2746 = vadd.f32 0.0, %v2745
      %2747 = vmatmul.f32.gmra.mxu0 %v2621
      %v2748 = vpop.f32.mrf.mxu0
      %v2749 = vadd.f32 0.0, %v2748
      %2750 = vmatmul.f32.gmra.mxu0 %v2624
      %v2751 = vpop.f32.mrf.mxu0
      %v2752 = vadd.f32 0.0, %v2751
      %2753 = vmatmul.f32.gmra.mxu0 %v2627
      %v2754 = vpop.f32.mrf.mxu0
      %v2755 = vadd.f32 0.0, %v2754
      %2756 = vmatmul.f32.gmra.mxu0 %v2630
      %v2757 = vpop.f32.mrf.mxu0
      %v2758 = vadd.f32 0.0, %v2757
      %2759 = vmatmul.f32.gmra.mxu0 %v2633
      %v2760 = vpop.f32.mrf.mxu0
      %v2761 = vadd.f32 0.0, %v2760
      %2762 = vmatmul.f32.gmra.mxu0 %v2636
      %v2763 = vpop.f32.mrf.mxu0
      %v2764 = vadd.f32 0.0, %v2763
      %2765 = vmatmul.f32.gmra.mxu0 %v2639
      %v2766 = vpop.f32.mrf.mxu0
      %v2767 = vadd.f32 0.0, %v2766
      %2768 = vmatmul.f32.gmra.mxu0 %v2642
      %v2769 = vpop.f32.mrf.mxu0
      %v2770 = vadd.f32 0.0, %v2769
      %2771 = vmatmul.f32.gmra.mxu0 %v2645
      %v2772 = vpop.f32.mrf.mxu0
      %v2773 = vadd.f32 0.0, %v2772
      %2774 = vmatmul.f32.gmra.mxu0 %v2648
      %v2775 = vpop.f32.mrf.mxu0
      %v2776 = vadd.f32 0.0, %v2775
      %2777 = vmatmul.f32.gmra.mxu0 %v2651
      %v2778 = vpop.f32.mrf.mxu0
      %v2779 = vadd.f32 0.0, %v2778
      %2780 = vmatmul.f32.gmra.mxu0 %v2654
      %v2781 = vpop.f32.mrf.mxu0
      %v2782 = vadd.f32 0.0, %v2781
      %2783 = vmatmul.f32.gmra.mxu0 %v2657
      %v2784 = vpop.f32.mrf.mxu0
      %v2785 = vadd.f32 0.0, %v2784
      %2786 = vmatmul.f32.gmra.mxu0 %v2660
      %v2787 = vpop.f32.mrf.mxu0
      %v2788 = vadd.f32 0.0, %v2787
      %2789 = vmatmul.f32.gmra.mxu0 %v2663
      %v2790 = vpop.f32.mrf.mxu0
      %v2791 = vadd.f32 0.0, %v2790
      %2792 = vmatmul.f32.gmra.mxu0 %v2666
      %v2793 = vpop.f32.mrf.mxu0
      %v2794 = vadd.f32 0.0, %v2793
      %2795 = vmatmul.f32.gmra.mxu0 %v2669
      %v2796 = vpop.f32.mrf.mxu0
      %v2797 = vadd.f32 0.0, %v2796
      %2798 = vmatmul.f32.gmra.mxu0 %v2672
      %v2799 = vpop.f32.mrf.mxu0
      %v2800 = vadd.f32 0.0, %v2799
      %2801 = vmatmul.f32.gmra.mxu0 %v2675
      %v2802 = vpop.f32.mrf.mxu0
      %v2803 = vadd.f32 0.0, %v2802
      %2804 = vmatmul.f32.gmra.mxu0 %v2678
      %v2805 = vpop.f32.mrf.mxu0
      %v2806 = vadd.f32 0.0, %v2805
      %2807 = vmatmul.f32.gmra.mxu0 %v2681
      %v2808 = vpop.f32.mrf.mxu0
      %v2809 = vadd.f32 0.0, %v2808
      %2810 = vdwg.mxu0
      %v2811 = vadd.f32 %v2537, %v2704
      %v2812 = vadd.f32 %v2538, %v2707
      %v2813 = vadd.f32 %v2539, %v2710
      %v2814 = vadd.f32 %v2540, %v2713
      %v2815 = vadd.f32 %v2541, %v2716
      %v2816 = vadd.f32 %v2542, %v2719
      %v2817 = vadd.f32 %v2543, %v2722
      %v2818 = vadd.f32 %v2544, %v2725
      %v2819 = vadd.f32 %v2545, %v2728
      %v2820 = vadd.f32 %v2546, %v2731
      %v2821 = vadd.f32 %v2547, %v2734
      %v2822 = vadd.f32 %v2548, %v2737
      %v2823 = vadd.f32 %v2549, %v2740
      %v2824 = vadd.f32 %v2550, %v2743
      %v2825 = vadd.f32 %v2551, %v2746
      %v2826 = vadd.f32 %v2552, %v2749
      %v2827 = vadd.f32 %v2553, %v2752
      %v2828 = vadd.f32 %v2554, %v2755
      %v2829 = vadd.f32 %v2555, %v2758
      %v2830 = vadd.f32 %v2556, %v2761
      %v2831 = vadd.f32 %v2557, %v2764
      %v2832 = vadd.f32 %v2558, %v2767
      %v2833 = vadd.f32 %v2559, %v2770
      %v2834 = vadd.f32 %v2560, %v2773
      %v2835 = vadd.f32 %v2561, %v2776
      %v2836 = vadd.f32 %v2562, %v2779
      %v2837 = vadd.f32 %v2563, %v2782
      %v2838 = vadd.f32 %v2564, %v2785
      %v2839 = vadd.f32 %v2565, %v2788
      %v2840 = vadd.f32 %v2566, %v2791
      %v2841 = vadd.f32 %v2567, %v2794
      %v2842 = vadd.f32 %v2568, %v2797
      %v2843 = vadd.f32 %v2569, %v2800
      %v2844 = vadd.f32 %v2570, %v2803
      %v2845 = vadd.f32 %v2571, %v2806
      %v2846 = vadd.f32 %v2572, %v2809
      %2847 = vst.msk [vmem:[#allocation2] sm:$0xff] %vm171, %v2811
      %2848 = vst.msk [vmem:[#allocation2 + $0x8] sm:$0xff] %vm171, %v2812
      %2849 = vst.msk [vmem:[#allocation2 + $0x10] sm:$0xff] %vm171, %v2813
      %2850 = vst.msk [vmem:[#allocation2 + $0x18] sm:$0xff] %vm171, %v2814
      %2851 = vst.msk [vmem:[#allocation2 + $0x20] sm:$0xff] %vm171, %v2815
      %2852 = vst.msk [vmem:[#allocation2 + $0x28] sm:$0xff] %vm171, %v2816
      %2853 = vst.msk [vmem:[#allocation2 + $0x30] sm:$0xff] %vm171, %v2817
      %2854 = vst.msk [vmem:[#allocation2 + $0x38] sm:$0xff] %vm171, %v2818
      %2855 = vst.msk [vmem:[#allocation2 + $0x40] sm:$0xff] %vm171, %v2819
      %2856 = vst.msk [vmem:[#allocation2 + $0x48] sm:$0xff] %vm171, %v2820
      %2857 = vst.msk [vmem:[#allocation2 + $0x50] sm:$0xff] %vm171, %v2821
      %2858 = vst.msk [vmem:[#allocation2 + $0x58] sm:$0xff] %vm171, %v2822
      %2859 = vst.msk [vmem:[#allocation2 + $0x60] sm:$0xff] %vm171, %v2823
      %2860 = vst.msk [vmem:[#allocation2 + $0x68] sm:$0xff] %vm171, %v2824
      %2861 = vst.msk [vmem:[#allocation2 + $0x70] sm:$0xff] %vm171, %v2825
      %2862 = vst.msk [vmem:[#allocation2 + $0x78] sm:$0xff] %vm171, %v2826
      %2863 = vst.msk [vmem:[#allocation2 + $0x80] sm:$0xff] %vm171, %v2827
      %2864 = vst.msk [vmem:[#allocation2 + $0x88] sm:$0xff] %vm171, %v2828
      %2865 = vst.msk [vmem:[#allocation2 + $0x90] sm:$0xff] %vm171, %v2829
      %2866 = vst.msk [vmem:[#allocation2 + $0x98] sm:$0xff] %vm171, %v2830
      %2867 = vst.msk [vmem:[#allocation2 + $0xa0] sm:$0xff] %vm171, %v2831
      %2868 = vst.msk [vmem:[#allocation2 + $0xa8] sm:$0xff] %vm171, %v2832
      %2869 = vst.msk [vmem:[#allocation2 + $0xb0] sm:$0xff] %vm171, %v2833
      %2870 = vst.msk [vmem:[#allocation2 + $0xb8] sm:$0xff] %vm171, %v2834
      %2871 = vst.msk [vmem:[#allocation2 + $0xc0] sm:$0xff] %vm171, %v2835
      %2872 = vst.msk [vmem:[#allocation2 + $0xc8] sm:$0xff] %vm171, %v2836
      %2873 = vst.msk [vmem:[#allocation2 + $0xd0] sm:$0xff] %vm171, %v2837
      %2874 = vst.msk [vmem:[#allocation2 + $0xd8] sm:$0xff] %vm171, %v2838
      %2875 = vst.msk [vmem:[#allocation2 + $0xe0] sm:$0xff] %vm171, %v2839
      %2876 = vst.msk [vmem:[#allocation2 + $0xe8] sm:$0xff] %vm171, %v2840
      %2877 = vst.msk [vmem:[#allocation2 + $0xf0] sm:$0xff] %vm171, %v2841
      %2878 = vst.msk [vmem:[#allocation2 + $0xf8] sm:$0xff] %vm171, %v2842
      %2879 = vst.msk [vmem:[#allocation2 + $0x100] sm:$0xff] %vm171, %v2843
      %2880 = vst.msk [vmem:[#allocation2 + $0x108] sm:$0xff] %vm171, %v2844
      %2881 = vst.msk [vmem:[#allocation2 + $0x110] sm:$0xff] %vm171, %v2845
      %2882 = vst.msk [vmem:[#allocation2 + $0x118] sm:$0xff] %vm171, %v2846
      %v2883 = vld [vmem:[%s165 + $0x25] sm:$0xff]
      %v2884 = vld [vmem:[%s165 + $0x2d] sm:$0xff]
      %v2885 = vld [vmem:[%s165 + $0x35] sm:$0xff]
      %v2886 = vld [vmem:[%s165 + $0x3d] sm:$0xff]
      %v2887 = vld [vmem:[%s165 + $0x45] sm:$0xff]
      %v2888 = vld [vmem:[%s165 + $0x4d] sm:$0xff]
      %v2889 = vld [vmem:[%s165 + $0x55] sm:$0xff]
      %v2890 = vld [vmem:[%s165 + $0x5d] sm:$0xff]
      %v2891 = vld [vmem:[%s165 + $0x65] sm:$0xff]
      %v2892 = vld [vmem:[%s165 + $0x6d] sm:$0xff]
      %v2893 = vld [vmem:[%s165 + $0x75] sm:$0xff]
      %v2894 = vld [vmem:[%s165 + $0x7d] sm:$0xff]
      %v2895 = vld [vmem:[%s165 + $0x85] sm:$0xff]
      %v2896 = vld [vmem:[%s165 + $0x8d] sm:$0xff]
      %v2897 = vld [vmem:[%s165 + $0x95] sm:$0xff]
      %v2898 = vld [vmem:[%s165 + $0x9d] sm:$0xff]
      %v2899 = vld [vmem:[%s165 + $0xa5] sm:$0xff]
      %v2900 = vld [vmem:[%s165 + $0xad] sm:$0xff]
      %v2901 = vld [vmem:[%s165 + $0xb5] sm:$0xff]
      %v2902 = vld [vmem:[%s165 + $0xbd] sm:$0xff]
      %v2903 = vld [vmem:[%s165 + $0xc5] sm:$0xff]
      %v2904 = vld [vmem:[%s165 + $0xcd] sm:$0xff]
      %v2905 = vld [vmem:[%s165 + $0xd5] sm:$0xff]
      %v2906 = vld [vmem:[%s165 + $0xdd] sm:$0xff]
      %v2907 = vld [vmem:[%s165 + $0xe5] sm:$0xff]
      %v2908 = vld [vmem:[%s165 + $0xed] sm:$0xff]
      %v2909 = vld [vmem:[%s165 + $0xf5] sm:$0xff]
      %v2910 = vld [vmem:[%s165 + $0xfd] sm:$0xff]
      %v2911 = vld [vmem:[%s165 + $0x105] sm:$0xff]
      %v2912 = vld [vmem:[%s165 + $0x10d] sm:$0xff]
      %v2913 = vld [vmem:[%s165 + $0x115] sm:$0xff]
      %v2914 = vld [vmem:[%s165 + $0x11d] sm:$0xff]
      %v2915 = vld [vmem:[%s165 + $0x125] sm:$0xff]
      %v2916 = vld [vmem:[%s165 + $0x12d] sm:$0xff]
      %v2917 = vld [vmem:[%s165 + $0x135] sm:$0xff]
      %v2918 = vld [vmem:[%s165 + $0x13d] sm:$0xff]
      %v2919 = vld [vmem:[#allocation2] sm:$0xff]
      %v2920 = vld [vmem:[#allocation2 + $0x8] sm:$0xff]
      %v2921 = vld [vmem:[#allocation2 + $0x10] sm:$0xff]
      %v2922 = vld [vmem:[#allocation2 + $0x18] sm:$0xff]
      %v2923 = vld [vmem:[#allocation2 + $0x20] sm:$0xff]
      %v2924 = vld [vmem:[#allocation2 + $0x28] sm:$0xff]
      %v2925 = vld [vmem:[#allocation2 + $0x30] sm:$0xff]
      %v2926 = vld [vmem:[#allocation2 + $0x38] sm:$0xff]
      %v2927 = vld [vmem:[#allocation2 + $0x40] sm:$0xff]
      %v2928 = vld [vmem:[#allocation2 + $0x48] sm:$0xff]
      %v2929 = vld [vmem:[#allocation2 + $0x50] sm:$0xff]
      %v2930 = vld [vmem:[#allocation2 + $0x58] sm:$0xff]
      %v2931 = vld [vmem:[#allocation2 + $0x60] sm:$0xff]
      %v2932 = vld [vmem:[#allocation2 + $0x68] sm:$0xff]
      %v2933 = vld [vmem:[#allocation2 + $0x70] sm:$0xff]
      %v2934 = vld [vmem:[#allocation2 + $0x78] sm:$0xff]
      %v2935 = vld [vmem:[#allocation2 + $0x80] sm:$0xff]
      %v2936 = vld [vmem:[#allocation2 + $0x88] sm:$0xff]
      %v2937 = vld [vmem:[#allocation2 + $0x90] sm:$0xff]
      %v2938 = vld [vmem:[#allocation2 + $0x98] sm:$0xff]
      %v2939 = vld [vmem:[#allocation2 + $0xa0] sm:$0xff]
      %v2940 = vld [vmem:[#allocation2 + $0xa8] sm:$0xff]
      %v2941 = vld [vmem:[#allocation2 + $0xb0] sm:$0xff]
      %v2942 = vld [vmem:[#allocation2 + $0xb8] sm:$0xff]
      %v2943 = vld [vmem:[#allocation2 + $0xc0] sm:$0xff]
      %v2944 = vld [vmem:[#allocation2 + $0xc8] sm:$0xff]
      %v2945 = vld [vmem:[#allocation2 + $0xd0] sm:$0xff]
      %v2946 = vld [vmem:[#allocation2 + $0xd8] sm:$0xff]
      %v2947 = vld [vmem:[#allocation2 + $0xe0] sm:$0xff]
      %v2948 = vld [vmem:[#allocation2 + $0xe8] sm:$0xff]
      %v2949 = vld [vmem:[#allocation2 + $0xf0] sm:$0xff]
      %v2950 = vld [vmem:[#allocation2 + $0xf8] sm:$0xff]
      %v2951 = vld [vmem:[#allocation2 + $0x100] sm:$0xff]
      %v2952 = vld [vmem:[#allocation2 + $0x108] sm:$0xff]
      %v2953 = vld [vmem:[#allocation2 + $0x110] sm:$0xff]
      %v2954 = vld [vmem:[#allocation2 + $0x118] sm:$0xff]
      %s2955 = scalar_lea.vmem %s1, 28
      %v2956 = vld [vmem:[%s2955] sm:$0xf]
      %v2958 = vsel %vm281, %v2883, 0
      %v2961 = vsel %vm281, %v2884, 0
      %v2964 = vsel %vm281, %v2885, 0
      %v2967 = vsel %vm281, %v2886, 0
      %v2970 = vsel %vm281, %v2887, 0
      %v2973 = vsel %vm281, %v2888, 0
      %v2976 = vsel %vm281, %v2889, 0
      %v2979 = vsel %vm281, %v2890, 0
      %v2982 = vsel %vm281, %v2891, 0
      %v2985 = vsel %vm281, %v2892, 0
      %v2988 = vsel %vm281, %v2893, 0
      %v2991 = vsel %vm281, %v2894, 0
      %v2994 = vsel %vm281, %v2895, 0
      %v2997 = vsel %vm281, %v2896, 0
      %v3000 = vsel %vm281, %v2897, 0
      %v3003 = vsel %vm281, %v2898, 0
      %v3006 = vsel %vm281, %v2899, 0
      %v3009 = vsel %vm281, %v2900, 0
      %v3012 = vsel %vm281, %v2901, 0
      %v3015 = vsel %vm281, %v2902, 0
      %v3018 = vsel %vm281, %v2903, 0
      %v3021 = vsel %vm281, %v2904, 0
      %v3024 = vsel %vm281, %v2905, 0
      %v3027 = vsel %vm281, %v2906, 0
      %v3030 = vsel %vm281, %v2907, 0
      %v3033 = vsel %vm281, %v2908, 0
      %v3036 = vsel %vm281, %v2909, 0
      %v3039 = vsel %vm281, %v2910, 0
      %v3042 = vsel %vm281, %v2911, 0
      %v3045 = vsel %vm281, %v2912, 0
      %v3048 = vsel %vm281, %v2913, 0
      %v3051 = vsel %vm281, %v2914, 0
      %v3054 = vsel %vm281, %v2915, 0
      %v3057 = vsel %vm281, %v2916, 0
      %v3060 = vsel %vm281, %v2917, 0
      %v3063 = vsel %vm281, %v2918, 0
      %v3066 = vsel %vm390, %v2956, 0
      %3068 = vmatpush.msra.mxu0 0.0
      %3069 = vmatpush.msra.mxu0 0.0
      %3070 = vmatpush.msra.mxu0 0.0
      %3071 = vmatpush.msra.mxu0 0.0
      %3072 = vmatpush.msra.mxu0 0.0
      %3073 = vmatpush.msra.mxu0 0.0
      %3074 = vmatpush.msra.mxu0 0.0
      %3075 = vmatpush.msra.mxu0 0.0
      %3076 = vmatpush.msra.mxu0 0.0
      %3077 = vmatpush.msra.mxu0 0.0
      %3078 = vmatpush.msra.mxu0 0.0
      %3079 = vmatpush.msra.mxu0 0.0
      %3080 = vmatpush.msra.mxu0 0.0
      %3081 = vmatpush.msra.mxu0 0.0
      %3082 = vmatpush.msra.mxu0 0.0
      %3083 = vmatpush.msra.mxu0 %v3066
      %3084 = vmatmul.f32.gmra.mxu0 %v2958
      %v3085 = vpop.f32.mrf.mxu0
      %v3086 = vadd.f32 0.0, %v3085
      %3087 = vmatmul.f32.gmra.mxu0 %v2961
      %v3088 = vpop.f32.mrf.mxu0
      %v3089 = vadd.f32 0.0, %v3088
      %3090 = vmatmul.f32.gmra.mxu0 %v2964
      %v3091 = vpop.f32.mrf.mxu0
      %v3092 = vadd.f32 0.0, %v3091
      %3093 = vmatmul.f32.gmra.mxu0 %v2967
      %v3094 = vpop.f32.mrf.mxu0
      %v3095 = vadd.f32 0.0, %v3094
      %3096 = vmatmul.f32.gmra.mxu0 %v2970
      %v3097 = vpop.f32.mrf.mxu0
      %v3098 = vadd.f32 0.0, %v3097
      %3099 = vmatmul.f32.gmra.mxu0 %v2973
      %v3100 = vpop.f32.mrf.mxu0
      %v3101 = vadd.f32 0.0, %v3100
      %3102 = vmatmul.f32.gmra.mxu0 %v2976
      %v3103 = vpop.f32.mrf.mxu0
      %v3104 = vadd.f32 0.0, %v3103
      %3105 = vmatmul.f32.gmra.mxu0 %v2979
      %v3106 = vpop.f32.mrf.mxu0
      %v3107 = vadd.f32 0.0, %v3106
      %3108 = vmatmul.f32.gmra.mxu0 %v2982
      %v3109 = vpop.f32.mrf.mxu0
      %v3110 = vadd.f32 0.0, %v3109
      %3111 = vmatmul.f32.gmra.mxu0 %v2985
      %v3112 = vpop.f32.mrf.mxu0
      %v3113 = vadd.f32 0.0, %v3112
      %3114 = vmatmul.f32.gmra.mxu0 %v2988
      %v3115 = vpop.f32.mrf.mxu0
      %v3116 = vadd.f32 0.0, %v3115
      %3117 = vmatmul.f32.gmra.mxu0 %v2991
      %v3118 = vpop.f32.mrf.mxu0
      %v3119 = vadd.f32 0.0, %v3118
      %3120 = vmatmul.f32.gmra.mxu0 %v2994
      %v3121 = vpop.f32.mrf.mxu0
      %v3122 = vadd.f32 0.0, %v3121
      %3123 = vmatmul.f32.gmra.mxu0 %v2997
      %v3124 = vpop.f32.mrf.mxu0
      %v3125 = vadd.f32 0.0, %v3124
      %3126 = vmatmul.f32.gmra.mxu0 %v3000
      %v3127 = vpop.f32.mrf.mxu0
      %v3128 = vadd.f32 0.0, %v3127
      %3129 = vmatmul.f32.gmra.mxu0 %v3003
      %v3130 = vpop.f32.mrf.mxu0
      %v3131 = vadd.f32 0.0, %v3130
      %3132 = vmatmul.f32.gmra.mxu0 %v3006
      %v3133 = vpop.f32.mrf.mxu0
      %v3134 = vadd.f32 0.0, %v3133
      %3135 = vmatmul.f32.gmra.mxu0 %v3009
      %v3136 = vpop.f32.mrf.mxu0
      %v3137 = vadd.f32 0.0, %v3136
      %3138 = vmatmul.f32.gmra.mxu0 %v3012
      %v3139 = vpop.f32.mrf.mxu0
      %v3140 = vadd.f32 0.0, %v3139
      %3141 = vmatmul.f32.gmra.mxu0 %v3015
      %v3142 = vpop.f32.mrf.mxu0
      %v3143 = vadd.f32 0.0, %v3142
      %3144 = vmatmul.f32.gmra.mxu0 %v3018
      %v3145 = vpop.f32.mrf.mxu0
      %v3146 = vadd.f32 0.0, %v3145
      %3147 = vmatmul.f32.gmra.mxu0 %v3021
      %v3148 = vpop.f32.mrf.mxu0
      %v3149 = vadd.f32 0.0, %v3148
      %3150 = vmatmul.f32.gmra.mxu0 %v3024
      %v3151 = vpop.f32.mrf.mxu0
      %v3152 = vadd.f32 0.0, %v3151
      %3153 = vmatmul.f32.gmra.mxu0 %v3027
      %v3154 = vpop.f32.mrf.mxu0
      %v3155 = vadd.f32 0.0, %v3154
      %3156 = vmatmul.f32.gmra.mxu0 %v3030
      %v3157 = vpop.f32.mrf.mxu0
      %v3158 = vadd.f32 0.0, %v3157
      %3159 = vmatmul.f32.gmra.mxu0 %v3033
      %v3160 = vpop.f32.mrf.mxu0
      %v3161 = vadd.f32 0.0, %v3160
      %3162 = vmatmul.f32.gmra.mxu0 %v3036
      %v3163 = vpop.f32.mrf.mxu0
      %v3164 = vadd.f32 0.0, %v3163
      %3165 = vmatmul.f32.gmra.mxu0 %v3039
      %v3166 = vpop.f32.mrf.mxu0
      %v3167 = vadd.f32 0.0, %v3166
      %3168 = vmatmul.f32.gmra.mxu0 %v3042
      %v3169 = vpop.f32.mrf.mxu0
      %v3170 = vadd.f32 0.0, %v3169
      %3171 = vmatmul.f32.gmra.mxu0 %v3045
      %v3172 = vpop.f32.mrf.mxu0
      %v3173 = vadd.f32 0.0, %v3172
      %3174 = vmatmul.f32.gmra.mxu0 %v3048
      %v3175 = vpop.f32.mrf.mxu0
      %v3176 = vadd.f32 0.0, %v3175
      %3177 = vmatmul.f32.gmra.mxu0 %v3051
      %v3178 = vpop.f32.mrf.mxu0
      %v3179 = vadd.f32 0.0, %v3178
      %3180 = vmatmul.f32.gmra.mxu0 %v3054
      %v3181 = vpop.f32.mrf.mxu0
      %v3182 = vadd.f32 0.0, %v3181
      %3183 = vmatmul.f32.gmra.mxu0 %v3057
      %v3184 = vpop.f32.mrf.mxu0
      %v3185 = vadd.f32 0.0, %v3184
      %3186 = vmatmul.f32.gmra.mxu0 %v3060
      %v3187 = vpop.f32.mrf.mxu0
      %v3188 = vadd.f32 0.0, %v3187
      %3189 = vmatmul.f32.gmra.mxu0 %v3063
      %v3190 = vpop.f32.mrf.mxu0
      %v3191 = vadd.f32 0.0, %v3190
      %3192 = vdwg.mxu0
      %v3193 = vadd.f32 %v2919, %v3086
      %v3194 = vadd.f32 %v2920, %v3089
      %v3195 = vadd.f32 %v2921, %v3092
      %v3196 = vadd.f32 %v2922, %v3095
      %v3197 = vadd.f32 %v2923, %v3098
      %v3198 = vadd.f32 %v2924, %v3101
      %v3199 = vadd.f32 %v2925, %v3104
      %v3200 = vadd.f32 %v2926, %v3107
      %v3201 = vadd.f32 %v2927, %v3110
      %v3202 = vadd.f32 %v2928, %v3113
      %v3203 = vadd.f32 %v2929, %v3116
      %v3204 = vadd.f32 %v2930, %v3119
      %v3205 = vadd.f32 %v2931, %v3122
      %v3206 = vadd.f32 %v2932, %v3125
      %v3207 = vadd.f32 %v2933, %v3128
      %v3208 = vadd.f32 %v2934, %v3131
      %v3209 = vadd.f32 %v2935, %v3134
      %v3210 = vadd.f32 %v2936, %v3137
      %v3211 = vadd.f32 %v2937, %v3140
      %v3212 = vadd.f32 %v2938, %v3143
      %v3213 = vadd.f32 %v2939, %v3146
      %v3214 = vadd.f32 %v2940, %v3149
      %v3215 = vadd.f32 %v2941, %v3152
      %v3216 = vadd.f32 %v2942, %v3155
      %v3217 = vadd.f32 %v2943, %v3158
      %v3218 = vadd.f32 %v2944, %v3161
      %v3219 = vadd.f32 %v2945, %v3164
      %v3220 = vadd.f32 %v2946, %v3167
      %v3221 = vadd.f32 %v2947, %v3170
      %v3222 = vadd.f32 %v2948, %v3173
      %v3223 = vadd.f32 %v2949, %v3176
      %v3224 = vadd.f32 %v2950, %v3179
      %v3225 = vadd.f32 %v2951, %v3182
      %v3226 = vadd.f32 %v2952, %v3185
      %v3227 = vadd.f32 %v2953, %v3188
      %v3228 = vadd.f32 %v2954, %v3191
      %3229 = vst.msk [vmem:[#allocation2] sm:$0xff] %vm171, %v3193
      %3230 = vst.msk [vmem:[#allocation2 + $0x8] sm:$0xff] %vm171, %v3194
      %3231 = vst.msk [vmem:[#allocation2 + $0x10] sm:$0xff] %vm171, %v3195
      %3232 = vst.msk [vmem:[#allocation2 + $0x18] sm:$0xff] %vm171, %v3196
      %3233 = vst.msk [vmem:[#allocation2 + $0x20] sm:$0xff] %vm171, %v3197
      %3234 = vst.msk [vmem:[#allocation2 + $0x28] sm:$0xff] %vm171, %v3198
      %3235 = vst.msk [vmem:[#allocation2 + $0x30] sm:$0xff] %vm171, %v3199
      %3236 = vst.msk [vmem:[#allocation2 + $0x38] sm:$0xff] %vm171, %v3200
      %3237 = vst.msk [vmem:[#allocation2 + $0x40] sm:$0xff] %vm171, %v3201
      %3238 = vst.msk [vmem:[#allocation2 + $0x48] sm:$0xff] %vm171, %v3202
      %3239 = vst.msk [vmem:[#allocation2 + $0x50] sm:$0xff] %vm171, %v3203
      %3240 = vst.msk [vmem:[#allocation2 + $0x58] sm:$0xff] %vm171, %v3204
      %3241 = vst.msk [vmem:[#allocation2 + $0x60] sm:$0xff] %vm171, %v3205
      %3242 = vst.msk [vmem:[#allocation2 + $0x68] sm:$0xff] %vm171, %v3206
      %3243 = vst.msk [vmem:[#allocation2 + $0x70] sm:$0xff] %vm171, %v3207
      %3244 = vst.msk [vmem:[#allocation2 + $0x78] sm:$0xff] %vm171, %v3208
      %3245 = vst.msk [vmem:[#allocation2 + $0x80] sm:$0xff] %vm171, %v3209
      %3246 = vst.msk [vmem:[#allocation2 + $0x88] sm:$0xff] %vm171, %v3210
      %3247 = vst.msk [vmem:[#allocation2 + $0x90] sm:$0xff] %vm171, %v3211
      %3248 = vst.msk [vmem:[#allocation2 + $0x98] sm:$0xff] %vm171, %v3212
      %3249 = vst.msk [vmem:[#allocation2 + $0xa0] sm:$0xff] %vm171, %v3213
      %3250 = vst.msk [vmem:[#allocation2 + $0xa8] sm:$0xff] %vm171, %v3214
      %3251 = vst.msk [vmem:[#allocation2 + $0xb0] sm:$0xff] %vm171, %v3215
      %3252 = vst.msk [vmem:[#allocation2 + $0xb8] sm:$0xff] %vm171, %v3216
      %3253 = vst.msk [vmem:[#allocation2 + $0xc0] sm:$0xff] %vm171, %v3217
      %3254 = vst.msk [vmem:[#allocation2 + $0xc8] sm:$0xff] %vm171, %v3218
      %3255 = vst.msk [vmem:[#allocation2 + $0xd0] sm:$0xff] %vm171, %v3219
      %3256 = vst.msk [vmem:[#allocation2 + $0xd8] sm:$0xff] %vm171, %v3220
      %3257 = vst.msk [vmem:[#allocation2 + $0xe0] sm:$0xff] %vm171, %v3221
      %3258 = vst.msk [vmem:[#allocation2 + $0xe8] sm:$0xff] %vm171, %v3222
      %3259 = vst.msk [vmem:[#allocation2 + $0xf0] sm:$0xff] %vm171, %v3223
      %3260 = vst.msk [vmem:[#allocation2 + $0xf8] sm:$0xff] %vm171, %v3224
      %3261 = vst.msk [vmem:[#allocation2 + $0x100] sm:$0xff] %vm171, %v3225
      %3262 = vst.msk [vmem:[#allocation2 + $0x108] sm:$0xff] %vm171, %v3226
      %3263 = vst.msk [vmem:[#allocation2 + $0x110] sm:$0xff] %vm171, %v3227
      %3264 = vst.msk [vmem:[#allocation2 + $0x118] sm:$0xff] %vm171, %v3228
      %v3265 = vld [vmem:[%s165 + $0x26] sm:$0xff]
      %v3266 = vld [vmem:[%s165 + $0x2e] sm:$0xff]
      %v3267 = vld [vmem:[%s165 + $0x36] sm:$0xff]
      %v3268 = vld [vmem:[%s165 + $0x3e] sm:$0xff]
      %v3269 = vld [vmem:[%s165 + $0x46] sm:$0xff]
      %v3270 = vld [vmem:[%s165 + $0x4e] sm:$0xff]
      %v3271 = vld [vmem:[%s165 + $0x56] sm:$0xff]
      %v3272 = vld [vmem:[%s165 + $0x5e] sm:$0xff]
      %v3273 = vld [vmem:[%s165 + $0x66] sm:$0xff]
      %v3274 = vld [vmem:[%s165 + $0x6e] sm:$0xff]
      %v3275 = vld [vmem:[%s165 + $0x76] sm:$0xff]
      %v3276 = vld [vmem:[%s165 + $0x7e] sm:$0xff]
      %v3277 = vld [vmem:[%s165 + $0x86] sm:$0xff]
      %v3278 = vld [vmem:[%s165 + $0x8e] sm:$0xff]
      %v3279 = vld [vmem:[%s165 + $0x96] sm:$0xff]
      %v3280 = vld [vmem:[%s165 + $0x9e] sm:$0xff]
      %v3281 = vld [vmem:[%s165 + $0xa6] sm:$0xff]
      %v3282 = vld [vmem:[%s165 + $0xae] sm:$0xff]
      %v3283 = vld [vmem:[%s165 + $0xb6] sm:$0xff]
      %v3284 = vld [vmem:[%s165 + $0xbe] sm:$0xff]
      %v3285 = vld [vmem:[%s165 + $0xc6] sm:$0xff]
      %v3286 = vld [vmem:[%s165 + $0xce] sm:$0xff]
      %v3287 = vld [vmem:[%s165 + $0xd6] sm:$0xff]
      %v3288 = vld [vmem:[%s165 + $0xde] sm:$0xff]
      %v3289 = vld [vmem:[%s165 + $0xe6] sm:$0xff]
      %v3290 = vld [vmem:[%s165 + $0xee] sm:$0xff]
      %v3291 = vld [vmem:[%s165 + $0xf6] sm:$0xff]
      %v3292 = vld [vmem:[%s165 + $0xfe] sm:$0xff]
      %v3293 = vld [vmem:[%s165 + $0x106] sm:$0xff]
      %v3294 = vld [vmem:[%s165 + $0x10e] sm:$0xff]
      %v3295 = vld [vmem:[%s165 + $0x116] sm:$0xff]
      %v3296 = vld [vmem:[%s165 + $0x11e] sm:$0xff]
      %v3297 = vld [vmem:[%s165 + $0x126] sm:$0xff]
      %v3298 = vld [vmem:[%s165 + $0x12e] sm:$0xff]
      %v3299 = vld [vmem:[%s165 + $0x136] sm:$0xff]
      %v3300 = vld [vmem:[%s165 + $0x13e] sm:$0xff]
      %v3301 = vld [vmem:[#allocation2] sm:$0xff]
      %v3302 = vld [vmem:[#allocation2 + $0x8] sm:$0xff]
      %v3303 = vld [vmem:[#allocation2 + $0x10] sm:$0xff]
      %v3304 = vld [vmem:[#allocation2 + $0x18] sm:$0xff]
      %v3305 = vld [vmem:[#allocation2 + $0x20] sm:$0xff]
      %v3306 = vld [vmem:[#allocation2 + $0x28] sm:$0xff]
      %v3307 = vld [vmem:[#allocation2 + $0x30] sm:$0xff]
      %v3308 = vld [vmem:[#allocation2 + $0x38] sm:$0xff]
      %v3309 = vld [vmem:[#allocation2 + $0x40] sm:$0xff]
      %v3310 = vld [vmem:[#allocation2 + $0x48] sm:$0xff]
      %v3311 = vld [vmem:[#allocation2 + $0x50] sm:$0xff]
      %v3312 = vld [vmem:[#allocation2 + $0x58] sm:$0xff]
      %v3313 = vld [vmem:[#allocation2 + $0x60] sm:$0xff]
      %v3314 = vld [vmem:[#allocation2 + $0x68] sm:$0xff]
      %v3315 = vld [vmem:[#allocation2 + $0x70] sm:$0xff]
      %v3316 = vld [vmem:[#allocation2 + $0x78] sm:$0xff]
      %v3317 = vld [vmem:[#allocation2 + $0x80] sm:$0xff]
      %v3318 = vld [vmem:[#allocation2 + $0x88] sm:$0xff]
      %v3319 = vld [vmem:[#allocation2 + $0x90] sm:$0xff]
      %v3320 = vld [vmem:[#allocation2 + $0x98] sm:$0xff]
      %v3321 = vld [vmem:[#allocation2 + $0xa0] sm:$0xff]
      %v3322 = vld [vmem:[#allocation2 + $0xa8] sm:$0xff]
      %v3323 = vld [vmem:[#allocation2 + $0xb0] sm:$0xff]
      %v3324 = vld [vmem:[#allocation2 + $0xb8] sm:$0xff]
      %v3325 = vld [vmem:[#allocation2 + $0xc0] sm:$0xff]
      %v3326 = vld [vmem:[#allocation2 + $0xc8] sm:$0xff]
      %v3327 = vld [vmem:[#allocation2 + $0xd0] sm:$0xff]
      %v3328 = vld [vmem:[#allocation2 + $0xd8] sm:$0xff]
      %v3329 = vld [vmem:[#allocation2 + $0xe0] sm:$0xff]
      %v3330 = vld [vmem:[#allocation2 + $0xe8] sm:$0xff]
      %v3331 = vld [vmem:[#allocation2 + $0xf0] sm:$0xff]
      %v3332 = vld [vmem:[#allocation2 + $0xf8] sm:$0xff]
      %v3333 = vld [vmem:[#allocation2 + $0x100] sm:$0xff]
      %v3334 = vld [vmem:[#allocation2 + $0x108] sm:$0xff]
      %v3335 = vld [vmem:[#allocation2 + $0x110] sm:$0xff]
      %v3336 = vld [vmem:[#allocation2 + $0x118] sm:$0xff]
      %s3337 = scalar_lea.vmem %s1, 32
      %v3338 = vld [vmem:[%s3337] sm:$0xf]
      %v3340 = vsel %vm281, %v3265, 0
      %v3343 = vsel %vm281, %v3266, 0
      %v3346 = vsel %vm281, %v3267, 0
      %v3349 = vsel %vm281, %v3268, 0
      %v3352 = vsel %vm281, %v3269, 0
      %v3355 = vsel %vm281, %v3270, 0
      %v3358 = vsel %vm281, %v3271, 0
      %v3361 = vsel %vm281, %v3272, 0
      %v3364 = vsel %vm281, %v3273, 0
      %v3367 = vsel %vm281, %v3274, 0
      %v3370 = vsel %vm281, %v3275, 0
      %v3373 = vsel %vm281, %v3276, 0
      %v3376 = vsel %vm281, %v3277, 0
      %v3379 = vsel %vm281, %v3278, 0
      %v3382 = vsel %vm281, %v3279, 0
      %v3385 = vsel %vm281, %v3280, 0
      %v3388 = vsel %vm281, %v3281, 0
      %v3391 = vsel %vm281, %v3282, 0
      %v3394 = vsel %vm281, %v3283, 0
      %v3397 = vsel %vm281, %v3284, 0
      %v3400 = vsel %vm281, %v3285, 0
      %v3403 = vsel %vm281, %v3286, 0
      %v3406 = vsel %vm281, %v3287, 0
      %v3409 = vsel %vm281, %v3288, 0
      %v3412 = vsel %vm281, %v3289, 0
      %v3415 = vsel %vm281, %v3290, 0
      %v3418 = vsel %vm281, %v3291, 0
      %v3421 = vsel %vm281, %v3292, 0
      %v3424 = vsel %vm281, %v3293, 0
      %v3427 = vsel %vm281, %v3294, 0
      %v3430 = vsel %vm281, %v3295, 0
      %v3433 = vsel %vm281, %v3296, 0
      %v3436 = vsel %vm281, %v3297, 0
      %v3439 = vsel %vm281, %v3298, 0
      %v3442 = vsel %vm281, %v3299, 0
      %v3445 = vsel %vm281, %v3300, 0
      %v3448 = vsel %vm390, %v3338, 0
      %3450 = vmatpush.msra.mxu0 0.0
      %3451 = vmatpush.msra.mxu0 0.0
      %3452 = vmatpush.msra.mxu0 0.0
      %3453 = vmatpush.msra.mxu0 0.0
      %3454 = vmatpush.msra.mxu0 0.0
      %3455 = vmatpush.msra.mxu0 0.0
      %3456 = vmatpush.msra.mxu0 0.0
      %3457 = vmatpush.msra.mxu0 0.0
      %3458 = vmatpush.msra.mxu0 0.0
      %3459 = vmatpush.msra.mxu0 0.0
      %3460 = vmatpush.msra.mxu0 0.0
      %3461 = vmatpush.msra.mxu0 0.0
      %3462 = vmatpush.msra.mxu0 0.0
      %3463 = vmatpush.msra.mxu0 0.0
      %3464 = vmatpush.msra.mxu0 0.0
      %3465 = vmatpush.msra.mxu0 %v3448
      %3466 = vmatmul.f32.gmra.mxu0 %v3340
      %v3467 = vpop.f32.mrf.mxu0
      %v3468 = vadd.f32 0.0, %v3467
      %3469 = vmatmul.f32.gmra.mxu0 %v3343
      %v3470 = vpop.f32.mrf.mxu0
      %v3471 = vadd.f32 0.0, %v3470
      %3472 = vmatmul.f32.gmra.mxu0 %v3346
      %v3473 = vpop.f32.mrf.mxu0
      %v3474 = vadd.f32 0.0, %v3473
      %3475 = vmatmul.f32.gmra.mxu0 %v3349
      %v3476 = vpop.f32.mrf.mxu0
      %v3477 = vadd.f32 0.0, %v3476
      %3478 = vmatmul.f32.gmra.mxu0 %v3352
      %v3479 = vpop.f32.mrf.mxu0
      %v3480 = vadd.f32 0.0, %v3479
      %3481 = vmatmul.f32.gmra.mxu0 %v3355
      %v3482 = vpop.f32.mrf.mxu0
      %v3483 = vadd.f32 0.0, %v3482
      %3484 = vmatmul.f32.gmra.mxu0 %v3358
      %v3485 = vpop.f32.mrf.mxu0
      %v3486 = vadd.f32 0.0, %v3485
      %3487 = vmatmul.f32.gmra.mxu0 %v3361
      %v3488 = vpop.f32.mrf.mxu0
      %v3489 = vadd.f32 0.0, %v3488
      %3490 = vmatmul.f32.gmra.mxu0 %v3364
      %v3491 = vpop.f32.mrf.mxu0
      %v3492 = vadd.f32 0.0, %v3491
      %3493 = vmatmul.f32.gmra.mxu0 %v3367
      %v3494 = vpop.f32.mrf.mxu0
      %v3495 = vadd.f32 0.0, %v3494
      %3496 = vmatmul.f32.gmra.mxu0 %v3370
      %v3497 = vpop.f32.mrf.mxu0
      %v3498 = vadd.f32 0.0, %v3497
      %3499 = vmatmul.f32.gmra.mxu0 %v3373
      %v3500 = vpop.f32.mrf.mxu0
      %v3501 = vadd.f32 0.0, %v3500
      %3502 = vmatmul.f32.gmra.mxu0 %v3376
      %v3503 = vpop.f32.mrf.mxu0
      %v3504 = vadd.f32 0.0, %v3503
      %3505 = vmatmul.f32.gmra.mxu0 %v3379
      %v3506 = vpop.f32.mrf.mxu0
      %v3507 = vadd.f32 0.0, %v3506
      %3508 = vmatmul.f32.gmra.mxu0 %v3382
      %v3509 = vpop.f32.mrf.mxu0
      %v3510 = vadd.f32 0.0, %v3509
      %3511 = vmatmul.f32.gmra.mxu0 %v3385
      %v3512 = vpop.f32.mrf.mxu0
      %v3513 = vadd.f32 0.0, %v3512
      %3514 = vmatmul.f32.gmra.mxu0 %v3388
      %v3515 = vpop.f32.mrf.mxu0
      %v3516 = vadd.f32 0.0, %v3515
      %3517 = vmatmul.f32.gmra.mxu0 %v3391
      %v3518 = vpop.f32.mrf.mxu0
      %v3519 = vadd.f32 0.0, %v3518
      %3520 = vmatmul.f32.gmra.mxu0 %v3394
      %v3521 = vpop.f32.mrf.mxu0
      %v3522 = vadd.f32 0.0, %v3521
      %3523 = vmatmul.f32.gmra.mxu0 %v3397
      %v3524 = vpop.f32.mrf.mxu0
      %v3525 = vadd.f32 0.0, %v3524
      %3526 = vmatmul.f32.gmra.mxu0 %v3400
      %v3527 = vpop.f32.mrf.mxu0
      %v3528 = vadd.f32 0.0, %v3527
      %3529 = vmatmul.f32.gmra.mxu0 %v3403
      %v3530 = vpop.f32.mrf.mxu0
      %v3531 = vadd.f32 0.0, %v3530
      %3532 = vmatmul.f32.gmra.mxu0 %v3406
      %v3533 = vpop.f32.mrf.mxu0
      %v3534 = vadd.f32 0.0, %v3533
      %3535 = vmatmul.f32.gmra.mxu0 %v3409
      %v3536 = vpop.f32.mrf.mxu0
      %v3537 = vadd.f32 0.0, %v3536
      %3538 = vmatmul.f32.gmra.mxu0 %v3412
      %v3539 = vpop.f32.mrf.mxu0
      %v3540 = vadd.f32 0.0, %v3539
      %3541 = vmatmul.f32.gmra.mxu0 %v3415
      %v3542 = vpop.f32.mrf.mxu0
      %v3543 = vadd.f32 0.0, %v3542
      %3544 = vmatmul.f32.gmra.mxu0 %v3418
      %v3545 = vpop.f32.mrf.mxu0
      %v3546 = vadd.f32 0.0, %v3545
      %3547 = vmatmul.f32.gmra.mxu0 %v3421
      %v3548 = vpop.f32.mrf.mxu0
      %v3549 = vadd.f32 0.0, %v3548
      %3550 = vmatmul.f32.gmra.mxu0 %v3424
      %v3551 = vpop.f32.mrf.mxu0
      %v3552 = vadd.f32 0.0, %v3551
      %3553 = vmatmul.f32.gmra.mxu0 %v3427
      %v3554 = vpop.f32.mrf.mxu0
      %v3555 = vadd.f32 0.0, %v3554
      %3556 = vmatmul.f32.gmra.mxu0 %v3430
      %v3557 = vpop.f32.mrf.mxu0
      %v3558 = vadd.f32 0.0, %v3557
      %3559 = vmatmul.f32.gmra.mxu0 %v3433
      %v3560 = vpop.f32.mrf.mxu0
      %v3561 = vadd.f32 0.0, %v3560
      %3562 = vmatmul.f32.gmra.mxu0 %v3436
      %v3563 = vpop.f32.mrf.mxu0
      %v3564 = vadd.f32 0.0, %v3563
      %3565 = vmatmul.f32.gmra.mxu0 %v3439
      %v3566 = vpop.f32.mrf.mxu0
      %v3567 = vadd.f32 0.0, %v3566
      %3568 = vmatmul.f32.gmra.mxu0 %v3442
      %v3569 = vpop.f32.mrf.mxu0
      %v3570 = vadd.f32 0.0, %v3569
      %3571 = vmatmul.f32.gmra.mxu0 %v3445
      %v3572 = vpop.f32.mrf.mxu0
      %v3573 = vadd.f32 0.0, %v3572
      %3574 = vdwg.mxu0
      %v3575 = vadd.f32 %v3301, %v3468
      %v3576 = vadd.f32 %v3302, %v3471
      %v3577 = vadd.f32 %v3303, %v3474
      %v3578 = vadd.f32 %v3304, %v3477
      %v3579 = vadd.f32 %v3305, %v3480
      %v3580 = vadd.f32 %v3306, %v3483
      %v3581 = vadd.f32 %v3307, %v3486
      %v3582 = vadd.f32 %v3308, %v3489
      %v3583 = vadd.f32 %v3309, %v3492
      %v3584 = vadd.f32 %v3310, %v3495
      %v3585 = vadd.f32 %v3311, %v3498
      %v3586 = vadd.f32 %v3312, %v3501
      %v3587 = vadd.f32 %v3313, %v3504
      %v3588 = vadd.f32 %v3314, %v3507
      %v3589 = vadd.f32 %v3315, %v3510
      %v3590 = vadd.f32 %v3316, %v3513
      %v3591 = vadd.f32 %v3317, %v3516
      %v3592 = vadd.f32 %v3318, %v3519
      %v3593 = vadd.f32 %v3319, %v3522
      %v3594 = vadd.f32 %v3320, %v3525
      %v3595 = vadd.f32 %v3321, %v3528
      %v3596 = vadd.f32 %v3322, %v3531
      %v3597 = vadd.f32 %v3323, %v3534
      %v3598 = vadd.f32 %v3324, %v3537
      %v3599 = vadd.f32 %v3325, %v3540
      %v3600 = vadd.f32 %v3326, %v3543
      %v3601 = vadd.f32 %v3327, %v3546
      %v3602 = vadd.f32 %v3328, %v3549
      %v3603 = vadd.f32 %v3329, %v3552
      %v3604 = vadd.f32 %v3330, %v3555
      %v3605 = vadd.f32 %v3331, %v3558
      %v3606 = vadd.f32 %v3332, %v3561
      %v3607 = vadd.f32 %v3333, %v3564
      %v3608 = vadd.f32 %v3334, %v3567
      %v3609 = vadd.f32 %v3335, %v3570
      %v3610 = vadd.f32 %v3336, %v3573
      %3611 = vst.msk [vmem:[#allocation2] sm:$0xff] %vm171, %v3575
      %3612 = vst.msk [vmem:[#allocation2 + $0x8] sm:$0xff] %vm171, %v3576
      %3613 = vst.msk [vmem:[#allocation2 + $0x10] sm:$0xff] %vm171, %v3577
      %3614 = vst.msk [vmem:[#allocation2 + $0x18] sm:$0xff] %vm171, %v3578
      %3615 = vst.msk [vmem:[#allocation2 + $0x20] sm:$0xff] %vm171, %v3579
      %3616 = vst.msk [vmem:[#allocation2 + $0x28] sm:$0xff] %vm171, %v3580
      %3617 = vst.msk [vmem:[#allocation2 + $0x30] sm:$0xff] %vm171, %v3581
      %3618 = vst.msk [vmem:[#allocation2 + $0x38] sm:$0xff] %vm171, %v3582
      %3619 = vst.msk [vmem:[#allocation2 + $0x40] sm:$0xff] %vm171, %v3583
      %3620 = vst.msk [vmem:[#allocation2 + $0x48] sm:$0xff] %vm171, %v3584
      %3621 = vst.msk [vmem:[#allocation2 + $0x50] sm:$0xff] %vm171, %v3585
      %3622 = vst.msk [vmem:[#allocation2 + $0x58] sm:$0xff] %vm171, %v3586
      %3623 = vst.msk [vmem:[#allocation2 + $0x60] sm:$0xff] %vm171, %v3587
      %3624 = vst.msk [vmem:[#allocation2 + $0x68] sm:$0xff] %vm171, %v3588
      %3625 = vst.msk [vmem:[#allocation2 + $0x70] sm:$0xff] %vm171, %v3589
      %3626 = vst.msk [vmem:[#allocation2 + $0x78] sm:$0xff] %vm171, %v3590
      %3627 = vst.msk [vmem:[#allocation2 + $0x80] sm:$0xff] %vm171, %v3591
      %3628 = vst.msk [vmem:[#allocation2 + $0x88] sm:$0xff] %vm171, %v3592
      %3629 = vst.msk [vmem:[#allocation2 + $0x90] sm:$0xff] %vm171, %v3593
      %3630 = vst.msk [vmem:[#allocation2 + $0x98] sm:$0xff] %vm171, %v3594
      %3631 = vst.msk [vmem:[#allocation2 + $0xa0] sm:$0xff] %vm171, %v3595
      %3632 = vst.msk [vmem:[#allocation2 + $0xa8] sm:$0xff] %vm171, %v3596
      %3633 = vst.msk [vmem:[#allocation2 + $0xb0] sm:$0xff] %vm171, %v3597
      %3634 = vst.msk [vmem:[#allocation2 + $0xb8] sm:$0xff] %vm171, %v3598
      %3635 = vst.msk [vmem:[#allocation2 + $0xc0] sm:$0xff] %vm171, %v3599
      %3636 = vst.msk [vmem:[#allocation2 + $0xc8] sm:$0xff] %vm171, %v3600
      %3637 = vst.msk [vmem:[#allocation2 + $0xd0] sm:$0xff] %vm171, %v3601
      %3638 = vst.msk [vmem:[#allocation2 + $0xd8] sm:$0xff] %vm171, %v3602
      %3639 = vst.msk [vmem:[#allocation2 + $0xe0] sm:$0xff] %vm171, %v3603
      %3640 = vst.msk [vmem:[#allocation2 + $0xe8] sm:$0xff] %vm171, %v3604
      %3641 = vst.msk [vmem:[#allocation2 + $0xf0] sm:$0xff] %vm171, %v3605
      %3642 = vst.msk [vmem:[#allocation2 + $0xf8] sm:$0xff] %vm171, %v3606
      %3643 = vst.msk [vmem:[#allocation2 + $0x100] sm:$0xff] %vm171, %v3607
      %3644 = vst.msk [vmem:[#allocation2 + $0x108] sm:$0xff] %vm171, %v3608
      %3645 = vst.msk [vmem:[#allocation2 + $0x110] sm:$0xff] %vm171, %v3609
      %3646 = vst.msk [vmem:[#allocation2 + $0x118] sm:$0xff] %vm171, %v3610
      %v3647 = vld [vmem:[#allocation2] sm:$0xff]
      %v3648 = vld [vmem:[#allocation2 + $0x8] sm:$0xff]
      %v3649 = vld [vmem:[#allocation2 + $0x10] sm:$0xff]
      %v3650 = vld [vmem:[#allocation2 + $0x18] sm:$0xff]
      %v3651 = vld [vmem:[#allocation2 + $0x20] sm:$0xff]
      %v3652 = vld [vmem:[#allocation2 + $0x28] sm:$0xff]
      %v3653 = vld [vmem:[#allocation2 + $0x30] sm:$0xff]
      %v3654 = vld [vmem:[#allocation2 + $0x38] sm:$0xff]
      %v3655 = vld [vmem:[#allocation2 + $0x40] sm:$0xff]
      %v3656 = vld [vmem:[#allocation2 + $0x48] sm:$0xff]
      %v3657 = vld [vmem:[#allocation2 + $0x50] sm:$0xff]
      %v3658 = vld [vmem:[#allocation2 + $0x58] sm:$0xff]
      %v3659 = vld [vmem:[#allocation2 + $0x60] sm:$0xff]
      %v3660 = vld [vmem:[#allocation2 + $0x68] sm:$0xff]
      %v3661 = vld [vmem:[#allocation2 + $0x70] sm:$0xff]
      %v3662 = vld [vmem:[#allocation2 + $0x78] sm:$0xff]
      %v3663 = vld [vmem:[#allocation2 + $0x80] sm:$0xff]
      %v3664 = vld [vmem:[#allocation2 + $0x88] sm:$0xff]
      %v3665 = vld [vmem:[#allocation2 + $0x90] sm:$0xff]
      %v3666 = vld [vmem:[#allocation2 + $0x98] sm:$0xff]
      %v3667 = vld [vmem:[#allocation2 + $0xa0] sm:$0xff]
      %v3668 = vld [vmem:[#allocation2 + $0xa8] sm:$0xff]
      %v3669 = vld [vmem:[#allocation2 + $0xb0] sm:$0xff]
      %v3670 = vld [vmem:[#allocation2 + $0xb8] sm:$0xff]
      %v3671 = vld [vmem:[#allocation2 + $0xc0] sm:$0xff]
      %v3672 = vld [vmem:[#allocation2 + $0xc8] sm:$0xff]
      %v3673 = vld [vmem:[#allocation2 + $0xd0] sm:$0xff]
      %v3674 = vld [vmem:[#allocation2 + $0xd8] sm:$0xff]
      %v3675 = vld [vmem:[#allocation2 + $0xe0] sm:$0xff]
      %v3676 = vld [vmem:[#allocation2 + $0xe8] sm:$0xff]
      %v3677 = vld [vmem:[#allocation2 + $0xf0] sm:$0xff]
      %v3678 = vld [vmem:[#allocation2 + $0xf8] sm:$0xff]
      %v3679 = vld [vmem:[#allocation2 + $0x100] sm:$0xff]
      %v3680 = vld [vmem:[#allocation2 + $0x108] sm:$0xff]
      %v3681 = vld [vmem:[#allocation2 + $0x110] sm:$0xff]
      %v3682 = vld [vmem:[#allocation2 + $0x118] sm:$0xff]
      %v3683 = vld [vmem:[%s2] sm:$0x1]
      %v3685 = vperm.slane %v3683, 0
      %v3687 = vadd.f32 %v3647, %v3685
      %v3688 = vadd.f32 %v3648, %v3685
      %v3689 = vadd.f32 %v3649, %v3685
      %v3690 = vadd.f32 %v3650, %v3685
      %v3691 = vadd.f32 %v3651, %v3685
      %v3692 = vadd.f32 %v3652, %v3685
      %v3693 = vadd.f32 %v3653, %v3685
      %v3694 = vadd.f32 %v3654, %v3685
      %v3695 = vadd.f32 %v3655, %v3685
      %v3696 = vadd.f32 %v3656, %v3685
      %v3697 = vadd.f32 %v3657, %v3685
      %v3698 = vadd.f32 %v3658, %v3685
      %v3699 = vadd.f32 %v3659, %v3685
      %v3700 = vadd.f32 %v3660, %v3685
      %v3701 = vadd.f32 %v3661, %v3685
      %v3702 = vadd.f32 %v3662, %v3685
      %v3703 = vadd.f32 %v3663, %v3685
      %v3704 = vadd.f32 %v3664, %v3685
      %v3705 = vadd.f32 %v3665, %v3685
      %v3706 = vadd.f32 %v3666, %v3685
      %v3707 = vadd.f32 %v3667, %v3685
      %v3708 = vadd.f32 %v3668, %v3685
      %v3709 = vadd.f32 %v3669, %v3685
      %v3710 = vadd.f32 %v3670, %v3685
      %v3711 = vadd.f32 %v3671, %v3685
      %v3712 = vadd.f32 %v3672, %v3685
      %v3713 = vadd.f32 %v3673, %v3685
      %v3714 = vadd.f32 %v3674, %v3685
      %v3715 = vadd.f32 %v3675, %v3685
      %v3716 = vadd.f32 %v3676, %v3685
      %v3717 = vadd.f32 %v3677, %v3685
      %v3718 = vadd.f32 %v3678, %v3685
      %v3719 = vadd.f32 %v3679, %v3685
      %v3720 = vadd.f32 %v3680, %v3685
      %v3721 = vadd.f32 %v3681, %v3685
      %v3722 = vadd.f32 %v3682, %v3685
      %v3723 = vmax.f32 %v3687, 0.0
      %v3724 = vmax.f32 %v3688, 0.0
      %v3725 = vmax.f32 %v3689, 0.0
      %v3726 = vmax.f32 %v3690, 0.0
      %v3727 = vmax.f32 %v3691, 0.0
      %v3728 = vmax.f32 %v3692, 0.0
      %v3729 = vmax.f32 %v3693, 0.0
      %v3730 = vmax.f32 %v3694, 0.0
      %v3731 = vmax.f32 %v3695, 0.0
      %v3732 = vmax.f32 %v3696, 0.0
      %v3733 = vmax.f32 %v3697, 0.0
      %v3734 = vmax.f32 %v3698, 0.0
      %v3735 = vmax.f32 %v3699, 0.0
      %v3736 = vmax.f32 %v3700, 0.0
      %v3737 = vmax.f32 %v3701, 0.0
      %v3738 = vmax.f32 %v3702, 0.0
      %v3739 = vmax.f32 %v3703, 0.0
      %v3740 = vmax.f32 %v3704, 0.0
      %v3741 = vmax.f32 %v3705, 0.0
      %v3742 = vmax.f32 %v3706, 0.0
      %v3743 = vmax.f32 %v3707, 0.0
      %v3744 = vmax.f32 %v3708, 0.0
      %v3745 = vmax.f32 %v3709, 0.0
      %v3746 = vmax.f32 %v3710, 0.0
      %v3747 = vmax.f32 %v3711, 0.0
      %v3748 = vmax.f32 %v3712, 0.0
      %v3749 = vmax.f32 %v3713, 0.0
      %v3750 = vmax.f32 %v3714, 0.0
      %v3751 = vmax.f32 %v3715, 0.0
      %v3752 = vmax.f32 %v3716, 0.0
      %v3753 = vmax.f32 %v3717, 0.0
      %v3754 = vmax.f32 %v3718, 0.0
      %v3755 = vmax.f32 %v3719, 0.0
      %v3756 = vmax.f32 %v3720, 0.0
      %v3757 = vmax.f32 %v3721, 0.0
      %v3758 = vmax.f32 %v3722, 0.0
      %3759 = vst.msk [vmem:[%s170] sm:$0xff] %vm171, %v3723
      %3760 = vst.msk [vmem:[%s170 + $0x8] sm:$0xff] %vm171, %v3724
      %3761 = vst.msk [vmem:[%s170 + $0x10] sm:$0xff] %vm171, %v3725
      %3762 = vst.msk [vmem:[%s170 + $0x18] sm:$0xff] %vm171, %v3726
      %3763 = vst.msk [vmem:[%s170 + $0x20] sm:$0xff] %vm171, %v3727
      %3764 = vst.msk [vmem:[%s170 + $0x28] sm:$0xff] %vm171, %v3728
      %3765 = vst.msk [vmem:[%s170 + $0x30] sm:$0xff] %vm171, %v3729
      %3766 = vst.msk [vmem:[%s170 + $0x38] sm:$0xff] %vm171, %v3730
      %3767 = vst.msk [vmem:[%s170 + $0x40] sm:$0xff] %vm171, %v3731
      %3768 = vst.msk [vmem:[%s170 + $0x48] sm:$0xff] %vm171, %v3732
      %3769 = vst.msk [vmem:[%s170 + $0x50] sm:$0xff] %vm171, %v3733
      %3770 = vst.msk [vmem:[%s170 + $0x58] sm:$0xff] %vm171, %v3734
      %3771 = vst.msk [vmem:[%s170 + $0x60] sm:$0xff] %vm171, %v3735
      %3772 = vst.msk [vmem:[%s170 + $0x68] sm:$0xff] %vm171, %v3736
      %3773 = vst.msk [vmem:[%s170 + $0x70] sm:$0xff] %vm171, %v3737
      %3774 = vst.msk [vmem:[%s170 + $0x78] sm:$0xff] %vm171, %v3738
      %3775 = vst.msk [vmem:[%s170 + $0x80] sm:$0xff] %vm171, %v3739
      %3776 = vst.msk [vmem:[%s170 + $0x88] sm:$0xff] %vm171, %v3740
      %3777 = vst.msk [vmem:[%s170 + $0x90] sm:$0xff] %vm171, %v3741
      %3778 = vst.msk [vmem:[%s170 + $0x98] sm:$0xff] %vm171, %v3742
      %3779 = vst.msk [vmem:[%s170 + $0xa0] sm:$0xff] %vm171, %v3743
      %3780 = vst.msk [vmem:[%s170 + $0xa8] sm:$0xff] %vm171, %v3744
      %3781 = vst.msk [vmem:[%s170 + $0xb0] sm:$0xff] %vm171, %v3745
      %3782 = vst.msk [vmem:[%s170 + $0xb8] sm:$0xff] %vm171, %v3746
      %3783 = vst.msk [vmem:[%s170 + $0xc0] sm:$0xff] %vm171, %v3747
      %3784 = vst.msk [vmem:[%s170 + $0xc8] sm:$0xff] %vm171, %v3748
      %3785 = vst.msk [vmem:[%s170 + $0xd0] sm:$0xff] %vm171, %v3749
      %3786 = vst.msk [vmem:[%s170 + $0xd8] sm:$0xff] %vm171, %v3750
      %3787 = vst.msk [vmem:[%s170 + $0xe0] sm:$0xff] %vm171, %v3751
      %3788 = vst.msk [vmem:[%s170 + $0xe8] sm:$0xff] %vm171, %v3752
      %3789 = vst.msk [vmem:[%s170 + $0xf0] sm:$0xff] %vm171, %v3753
      %3790 = vst.msk [vmem:[%s170 + $0xf8] sm:$0xff] %vm171, %v3754
      %3791 = vst.msk [vmem:[%s170 + $0x100] sm:$0xff] %vm171, %v3755
      %3792 = vst.msk [vmem:[%s170 + $0x108] sm:$0xff] %vm171, %v3756
      %3793 = vst.msk [vmem:[%s170 + $0x110] sm:$0xff] %vm171, %v3757
      %3794 = vst.msk [vmem:[%s170 + $0x118] sm:$0xff] %vm171, %v3758
      %p3795 = scmp.lt.s32.totalorder %s14, 1
      %s3796 = scalar_select %p3795, %s14, 1
      %s3797 = smul.addr %s3796, 36
      %s3798 = smul.addr %s3797, 8
      %s3799 = scalar_lea.vmem %s3, %s3798
      // Predicated region
      $region33: #{tpu_custom_call.1} parent=31 // pred_check
        %p3800 = pneg %p100
      $region34: #{tpu_custom_call.1} parent=31 // pred_check_branch
        %3802 = sbr.rel (%p3800) target = $region36
      $region35: #{tpu_custom_call.1} parent=31 // pred_region
        _
      $region36: #{tpu_custom_call.1} parent=31 // pred_fallthru
        _
    $region32: #{tpu_custom_call.1} parent=5 // pred_fallthru
      _
    %p3803 = scmp.le.s32.totalorder 2, %s9
    // Predicated region
    $region37: #{tpu_custom_call.1} parent=5 // pred_check
      %p3804 = pneg %p3803
    $region38: #{tpu_custom_call.1} parent=5 // pred_check_branch
      %3806 = sbr.rel (%p3804) target = $region40
    $region39: #{tpu_custom_call.1} parent=5 // pred_region
      %s3807 = ssub.s32 %s9, 2
      // Predicated region
      $region41: #{tpu_custom_call.1} parent=39 // pred_check
        %p3808 = pneg %p106
      $region42: #{tpu_custom_call.1} parent=39 // pred_check_branch
        %3810 = sbr.rel (%p3808) target = $region44
      $region43: #{tpu_custom_call.1} parent=39 // pred_region
        %p3811 = scmp.lt.s32.totalorder %s15, 1
        %s3812 = scalar_select %p3811, %s15, 1
        %s3813 = smul.addr %s3812, 36
        %s3814 = smul.addr %s3813, 8
        %s3815 = scalar_lea.vmem %s3, %s3814
      $region44: #{tpu_custom_call.1} parent=39 // pred_fallthru
        _
    $region40: #{tpu_custom_call.1} parent=5 // pred_fallthru
      _
  $region6: #{tpu_custom_call.1} parent=0 // loop_footer
    %s13 = sadd.s32 1, %s9
  $region7: #{tpu_custom_call.1} parent=0 // loop_footer_branch
    %8 = sbr.rel target = $region3
  $region8: #{tpu_custom_call.1} parent=0 // loop_exit
    _

</llo_original>
